<compile_context>
chip_gen: v7x
topology: tpu7x:2x2x1
jax: 0.10.0
libtpu: 0.0.40
codegen_flags: <defaults>
</compile_context>

<pallas_src>
import numpy as np
import jax
import jax.numpy as jnp
from jax.experimental import pallas as pl
from jax.experimental.pallas import tpu as pltpu

# ---- hyper-params consistent with Mamba2(d_model, d_state, d_conv, expand) ----
D_MODEL   = 32
D_STATE   = 16
D_CONV    = 4
EXPAND    = 2
HEADDIM   = 16
NGROUPS   = 1
D_INNER   = EXPAND * D_MODEL                               # 64
NHEADS    = D_INNER // HEADDIM                             # 4
CONV_DIM  = D_INNER + 2 * NGROUPS * D_STATE                # 96
D_IN_PROJ = 2 * D_INNER + 2 * NGROUPS * D_STATE + NHEADS   # 164
BATCH     = 2
SEQ       = 8
RMS_EPS   = 1e-5
LEAKY_SLOPE = 0.01
N_REPEATS = 3

# Packed-slab lane layout (all segment starts are multiples of 128 -> lane-aligned ref slices).
WDM_COLS   = 512   # [0:164] in_proj W (rep 0)            | [256:420] lin_w @ in_proj W (reps 1,2)
WDI_COLS   = 256   # [0:32]  out_proj W                   | [128:160] out_proj W @ lin_w (last rep)
SMALL_COLS = 512   # rows 0-3 conv_w | 4 conv_b | 5 lin_b@in_proj | 6 dt_bias,aneg | 7 D,norm_w,lin_b
MASK_COLS  = 512   # [0:BL] causal | [128:128+BL] causal^T | [256:260] conv_mask | [384:448] head_mask

NT_DIMS = (((1,), (1,)), ((), ()))   # contract lanes with lanes   (A @ B^T)
TN_DIMS = (((0,), (0,)), ((), ()))   # contract sublanes with sublanes (A^T @ B)


def _softplus(v):
    return jnp.where(v > 20.0, v, jnp.log(1.0 + jnp.exp(jnp.minimum(v, 20.0))))


def _silu(v):
    # exp and the reciprocal both land on the EUP slot (VALU stays free).
    return v * pl.reciprocal(1.0 + jnp.exp(-v), approx=True)


def _leaky_relu(v):
    return jnp.where(v >= 0.0, v, LEAKY_SLOPE * v)


# ----------------------------- the fused kernel -----------------------------

def fused_forward_kernel(x_ref, w_dm_ref, w_di_ref, small_ref, masks_ref, o_ref):
    bl = x_ref.shape[0]                                   # B * L (static)

    # ---- hoisted constants (small; VMEM resident across all 3 repeats) ----
    causal    = masks_ref[:, 0:bl]                        # (BL, BL) block-diag causal incl. diag
    causal_t  = masks_ref[:, 128:128 + bl]                # (BL, BL) = causal^T
    conv_mask = masks_ref[:, 256:256 + D_CONV]            # (BL, D_CONV) valid rows per shift
    head_mask = masks_ref[0:NHEADS, 384:384 + D_INNER]    # (NHEADS, D_INNER) per-head lane mask

    conv_w  = small_ref[0:D_CONV, 0:CONV_DIM]             # (D_CONV, CONV_DIM), row = tap index
    conv_b  = small_ref[D_CONV:D_CONV + 1, 0:CONV_DIM]    # (1, CONV_DIM)
    b_fold  = small_ref[5:6, 0:D_IN_PROJ]                 # (1, D_IN_PROJ) = lin_b @ in_proj W
    dt_bias = small_ref[6:7, 0:NHEADS]                    # (1, NHEADS)
    aneg    = small_ref[6:7, 128:128 + NHEADS]            # (1, NHEADS)   A_h = -exp(A_log) < 0
    d_rep   = small_ref[7:8, 0:D_INNER]                   # (1, D_INNER)  D skip, repeated per lane
    norm_w  = small_ref[7:8, 128:128 + D_INNER]           # (1, D_INNER)
    lin_b   = small_ref[7:8, 256:256 + D_MODEL]           # (1, D_MODEL)

    h = x_ref[...]                                        # (BL, D_MODEL)

    for rep in range(N_REPEATS):                          # bodies differ (weight folding) -> unrolled
        # -------- in_proj: one fused matmul; previous repeat's Linear folded into the weight ------
        if rep == 0:
            zxd = jnp.dot(h, w_dm_ref[:, 0:D_IN_PROJ],
                          preferred_element_type=jnp.float32)                     # (BL, 164)
        else:
            zxd = jnp.dot(h, w_dm_ref[:, 256:256 + D_IN_PROJ],
                          preferred_element_type=jnp.float32) + b_fold            # (BL, 164)
        z      = zxd[:, 0:D_INNER]                        # (BL, D_INNER)
        xbc    = zxd[:, D_INNER:D_INNER + CONV_DIM]       # (BL, CONV_DIM)
        dt_raw = zxd[:, D_INNER + CONV_DIM:D_IN_PROJ]     # (BL, NHEADS)

        dt  = _softplus(dt_raw + dt_bias)                 # (BL, NHEADS)
        adt = dt * aneg                                   # A_h * dt  (<= 0)

        # -------- causal depthwise conv1d + SiLU (roll on XLU, MAC on VPU) -------------------------
        acc = xbc * conv_w[D_CONV - 1:D_CONV, :]          # tap at shift 0
        for s in range(1, D_CONV):
            shifted = pltpu.roll(xbc, s, 0) * conv_mask[:, s:s + 1]   # zero wrapped / cross-batch rows
            acc = acc + shifted * conv_w[D_CONV - 1 - s:D_CONV - s, :]
        xbc_c = _silu(acc + conv_b)                       # (BL, CONV_DIM)

        x_ssm = xbc_c[:, 0:D_INNER]                       # (BL, D_INNER)
        b_mat = xbc_c[:, D_INNER:D_INNER + D_STATE]       # (BL, D_STATE)
        c_mat = xbc_c[:, D_INNER + D_STATE:CONV_DIM]      # (BL, D_STATE)

        # -------- SSD: exact quadratic form, block-diag causal masking -----------------------------
        # S_t per head (columns) and S_s per head (rows) via two independent tiny matmuls;
        # no ones@diag broadcast, no eye/iota constants.
        cum   = jnp.dot(causal, adt, preferred_element_type=jnp.float32)          # (BL, NHEADS)
        cum_t = jax.lax.dot_general(adt, causal_t, TN_DIMS,
                                    preferred_element_type=jnp.float32)           # (NHEADS, BL)
        g  = jax.lax.dot_general(c_mat, b_mat, NT_DIMS,
                                 preferred_element_type=jnp.float32)              # (BL, BL) C_t.B_s
        gm = g * causal

        dt_rep = jnp.dot(dt, head_mask, preferred_element_type=jnp.float32)       # dt per lane
        xdt = x_ssm * dt_rep                                                      # (BL, D_INNER)

        # stack the 4 per-head masked SSD weight tiles along sublanes -> ONE matmul
        w_blocks = []
        for hd in range(NHEADS):
            decay = jnp.exp(jnp.minimum(cum[:, hd:hd + 1] - cum_t[hd:hd + 1, :], 0.0))  # safe exp
            w_blocks.append(gm * decay)                                           # (BL, BL)
        w_stack = jnp.concatenate(w_blocks, axis=0)                               # (NHEADS*BL, BL)
        y_stack = jnp.dot(w_stack, xdt, preferred_element_type=jnp.float32)       # (NHEADS*BL, D_INNER)

        y = x_ssm * d_rep                                 # D skip
        for hd in range(NHEADS):
            y = y + y_stack[hd * bl:(hd + 1) * bl, :] * head_mask[hd:hd + 1, :]

        # -------- gated RMSNorm: rmsnorm(y * silu(z)) * weight --------------------------------------
        yg = y * _silu(z)
        var = jnp.mean(yg * yg, axis=-1, keepdims=True)
        y_n = yg * jax.lax.rsqrt(var + RMS_EPS) * norm_w

        # -------- out_proj -> (LeakyReLU) -> shared Linear (folded) -> Dropout ----------------------
        if rep < N_REPEATS - 1:
            # shared Linear is folded into the NEXT repeat's in_proj weights (lin_w @ W_in, lin_b @ W_in)
            h = _leaky_relu(jnp.dot(y_n, w_di_ref[:, 0:D_MODEL],
                                    preferred_element_type=jnp.float32))          # (BL, D_MODEL)
            # TODO(synk): nn.Dropout(0.5) is stochastic; implemented as identity (eval mode).
        else:
            # last repeat: no LeakyReLU/Dropout -> out_proj and Linear fused host-side (out_w @ lin_w)
            h = jnp.dot(y_n, w_di_ref[:, 128:128 + D_MODEL],
                        preferred_element_type=jnp.float32) + lin_b

    o_ref[...] = h                                        # only write that leaves VMEM


# ----------------------------- host-side packing & wrapper -----------------------------

def _build_masks(bsz, seq):
    bl = bsz * seq
    assert bl <= 128, "aligned mask-slab layout assumes B*L <= 128"
    r = np.arange(bl)[:, None]
    c = np.arange(bl)[None, :]
    causal = ((c <= r) & (r // seq == c // seq)).astype(np.float32)               # (BL, BL)
    conv_mask = ((np.arange(bl)[:, None] % seq)
                 >= np.arange(D_CONV)[None, :]).astype(np.float32)                # (BL, D_CONV)
    head_mask = (np.arange(D_INNER)[None, :] // HEADDIM
                 == np.arange(NHEADS)[:, None]).astype(np.float32)                # (NHEADS, D_INNER)
    masks = np.zeros((bl, MASK_COLS), np.float32)
    masks[:, 0:bl] = causal
    masks[:, 128:128 + bl] = causal.T
    masks[:, 256:256 + D_CONV] = conv_mask
    masks[:NHEADS, 384:384 + D_INNER] = head_mask
    return jnp.asarray(masks)


def pack_params(p):
    """Fold the shared Linear algebraically and pack everything into 3 lane-aligned slabs."""
    in_w, out_w = p["in_w"], p["out_w"]
    lin_w, lin_b = p["lin_w"], p["lin_b"]
    w_in_fold = jnp.dot(lin_w, in_w)          # (D_MODEL, D_IN_PROJ)  for repeats 1, 2
    b_in_fold = jnp.dot(lin_b, in_w)          # (1, D_IN_PROJ)
    out_lin_w = jnp.dot(out_w, lin_w)         # (D_INNER, D_MODEL)    for the final repeat

    w_dm = jnp.zeros((D_MODEL, WDM_COLS), jnp.float32)
    w_dm = w_dm.at[:, 0:D_IN_PROJ].set(in_w)
    w_dm = w_dm.at[:, 256:256 + D_IN_PROJ].set(w_in_fold)

    w_di = jnp.zeros((D_INNER, WDI_COLS), jnp.float32)
    w_di = w_di.at[:, 0:D_MODEL].set(out_w)
    w_di = w_di.at[:, 128:128 + D_MODEL].set(out_lin_w)

    small = jnp.zeros((8, SMALL_COLS), jnp.float32)
    small = small.at[0:D_CONV, 0:CONV_DIM].set(p["conv_w"])
    small = small.at[D_CONV, 0:CONV_DIM].set(p["conv_b"][0])
    small = small.at[5, 0:D_IN_PROJ].set(b_in_fold[0])
    small = small.at[6, 0:NHEADS].set(p["dt_bias"][0])
    small = small.at[6, 128:128 + NHEADS].set(p["aneg"][0])
    small = small.at[7, 0:D_INNER].set(p["d_rep"][0])
    small = small.at[7, 128:128 + D_INNER].set(p["norm_w"][0])
    small = small.at[7, 256:256 + D_MODEL].set(lin_b[0])
    return {"w_dm": w_dm, "w_di": w_di, "small": small}


@jax.jit
def self_supervised_mamba2_forward(x, w_dm, w_di, small, masks):
    bsz, seq, _ = x.shape
    bl = bsz * seq
    out = pl.pallas_call(
        fused_forward_kernel,
        out_shape=jax.ShapeDtypeStruct((bl, D_MODEL), jnp.float32),
        in_specs=[pl.BlockSpec(memory_space=pltpu.MemorySpace.VMEM)] * 5,
        out_specs=pl.BlockSpec(memory_space=pltpu.MemorySpace.VMEM),
    )(x.reshape(bl, D_MODEL).astype(jnp.float32), w_dm, w_di, small, masks)
    return out.reshape(bsz, seq, D_MODEL)


# ----------------------------- parameter init -----------------------------

def init_params(key):
    ks = jax.random.split(key, 10)

    def nrm(k, shape, scale):
        return (scale * jax.random.normal(k, shape)).astype(jnp.float32)

    p = {}
    p["in_w"]  = nrm(ks[0], (D_MODEL, D_IN_PROJ), D_MODEL ** -0.5)   # in_proj (no bias), [z|xBC|dt]
    p["out_w"] = nrm(ks[1], (D_INNER, D_MODEL), D_INNER ** -0.5)     # out_proj (no bias)

    p["conv_w"] = nrm(ks[2], (D_CONV, CONV_DIM), 0.3)                # depthwise conv1d (tap, chan)
    p["conv_b"] = nrm(ks[3], (1, CONV_DIM), 0.1)

    p["dt_bias"] = nrm(ks[4], (1, NHEADS), 0.1)
    a_log = jnp.log(jax.random.uniform(ks[5], (NHEADS,), minval=1.0, maxval=4.0))
    p["aneg"] = (-jnp.exp(a_log)).astype(jnp.float32).reshape(1, NHEADS)

    d_param = (1.0 + 0.1 * jax.random.normal(ks[6], (NHEADS,))).astype(jnp.float32)
    p["d_rep"] = jnp.repeat(d_param, HEADDIM).reshape(1, D_INNER)
    p["norm_w"] = (1.0 + 0.02 * jax.random.normal(ks[7], (D_INNER,))
                   ).astype(jnp.float32).reshape(1, D_INNER)

    p["lin_w"] = nrm(ks[8], (D_MODEL, D_MODEL), D_MODEL ** -0.5)     # shared nn.Linear
    p["lin_b"] = nrm(ks[9], (1, D_MODEL), 0.1)
    return p


if __name__ == "__main__":
    key = jax.random.PRNGKey(0)
    pkey, xkey = jax.random.split(key)
    params = init_params(pkey)
    packed = pack_params(params)
    masks = _build_masks(BATCH, SEQ)
    x = jax.random.normal(xkey, (BATCH, SEQ, D_MODEL), dtype=jnp.float32)

    out = self_supervised_mamba2_forward(x, packed["w_dm"], packed["w_di"],
                                         packed["small"], masks)
    out = jax.block_until_ready(out)

    assert out.shape == (BATCH, SEQ, D_MODEL), out.shape
    assert bool(jnp.all(jnp.isfinite(out)))
    print("KERNEL_OK")
</pallas_src>

<mosaic_0001>
module attributes {stable_mosaic.version = 11 : i64} {
  func.func @fused_forward_kernel(%arg0: memref<16x32xf32, #tpu.memory_space<vmem>>, %arg1: memref<32x512xf32, #tpu.memory_space<vmem>>, %arg2: memref<64x256xf32, #tpu.memory_space<vmem>>, %arg3: memref<8x512xf32, #tpu.memory_space<vmem>>, %arg4: memref<16x512xf32, #tpu.memory_space<vmem>>, %arg5: memref<16x32xf32, #tpu.memory_space<vmem>>) attributes {dimension_semantics = [], scalar_prefetch = 0 : i64, scratch_operands = 0 : i64, tpu.core_type = #tpu.core_type<tc>} {
    %c0 = arith.constant 0 : index
    %c0_0 = arith.constant 0 : index
    %0 = vector.load %arg4[%c0, %c0_0] : memref<16x512xf32, #tpu.memory_space<vmem>>, vector<16x16xf32>
    %c0_1 = arith.constant 0 : index
    %c128 = arith.constant 128 : index
    %1 = vector.load %arg4[%c0_1, %c128] : memref<16x512xf32, #tpu.memory_space<vmem>>, vector<16x16xf32>
    %c0_2 = arith.constant 0 : index
    %c256 = arith.constant 256 : index
    %2 = vector.load %arg4[%c0_2, %c256] : memref<16x512xf32, #tpu.memory_space<vmem>>, vector<16x4xf32>
    %c0_3 = arith.constant 0 : index
    %c384 = arith.constant 384 : index
    %3 = vector.load %arg4[%c0_3, %c384] : memref<16x512xf32, #tpu.memory_space<vmem>>, vector<4x64xf32>
    %c0_4 = arith.constant 0 : index
    %c0_5 = arith.constant 0 : index
    %4 = vector.load %arg3[%c0_4, %c0_5] : memref<8x512xf32, #tpu.memory_space<vmem>>, vector<4x96xf32>
    %c4 = arith.constant 4 : index
    %c0_6 = arith.constant 0 : index
    %5 = vector.load %arg3[%c4, %c0_6] : memref<8x512xf32, #tpu.memory_space<vmem>>, vector<1x96xf32>
    %c5 = arith.constant 5 : index
    %c0_7 = arith.constant 0 : index
    %6 = vector.load %arg3[%c5, %c0_7] : memref<8x512xf32, #tpu.memory_space<vmem>>, vector<1x164xf32>
    %c6 = arith.constant 6 : index
    %c0_8 = arith.constant 0 : index
    %7 = vector.load %arg3[%c6, %c0_8] : memref<8x512xf32, #tpu.memory_space<vmem>>, vector<1x4xf32>
    %c6_9 = arith.constant 6 : index
    %c128_10 = arith.constant 128 : index
    %8 = vector.load %arg3[%c6_9, %c128_10] : memref<8x512xf32, #tpu.memory_space<vmem>>, vector<1x4xf32>
    %c7 = arith.constant 7 : index
    %c0_11 = arith.constant 0 : index
    %9 = vector.load %arg3[%c7, %c0_11] : memref<8x512xf32, #tpu.memory_space<vmem>>, vector<1x64xf32>
    %c7_12 = arith.constant 7 : index
    %c128_13 = arith.constant 128 : index
    %10 = vector.load %arg3[%c7_12, %c128_13] : memref<8x512xf32, #tpu.memory_space<vmem>>, vector<1x64xf32>
    %c7_14 = arith.constant 7 : index
    %c256_15 = arith.constant 256 : index
    %11 = vector.load %arg3[%c7_14, %c256_15] : memref<8x512xf32, #tpu.memory_space<vmem>>, vector<1x32xf32>
    %c0_16 = arith.constant 0 : index
    %c0_17 = arith.constant 0 : index
    %12 = vector.load %arg0[%c0_16, %c0_17] : memref<16x32xf32, #tpu.memory_space<vmem>>, vector<16x32xf32>
    %c0_18 = arith.constant 0 : index
    %c0_19 = arith.constant 0 : index
    %13 = vector.load %arg1[%c0_18, %c0_19] : memref<32x512xf32, #tpu.memory_space<vmem>>, vector<32x164xf32>
    %cst = arith.constant dense<0.000000e+00> : vector<16x164xf32>
    %14 = tpu.matmul %12, %13, %cst {dimension_numbers = #tpu.dot_dimension_numbers<[1], [0], [0], [1], [0, 0, 1, 1], [], []>} : vector<16x32xf32>, vector<32x164xf32>, vector<16x164xf32> -> vector<16x164xf32>
    %15 = vector.extract_strided_slice %14 {offsets = [0, 0], sizes = [16, 64], strides = [1, 1]} : vector<16x164xf32> to vector<16x64xf32>
    %16 = vector.extract_strided_slice %14 {offsets = [0, 64], sizes = [16, 96], strides = [1, 1]} : vector<16x164xf32> to vector<16x96xf32>
    %17 = vector.extract_strided_slice %14 {offsets = [0, 160], sizes = [16, 4], strides = [1, 1]} : vector<16x164xf32> to vector<16x4xf32>
    %18 = vector.broadcast %7 : vector<1x4xf32> to vector<16x4xf32>
    %19 = arith.addf %17, %18 : vector<16x4xf32>
    %cst_20 = arith.constant 2.000000e+01 : f32
    %20 = vector.broadcast %cst_20 : f32 to vector<16x4xf32>
    %21 = arith.cmpf ogt, %19, %20 : vector<16x4xf32>
    %cst_21 = arith.constant 2.000000e+01 : f32
    %22 = vector.broadcast %cst_21 : f32 to vector<16x4xf32>
    %23 = arith.minimumf %19, %22 : vector<16x4xf32>
    %24 = math.exp %23 : vector<16x4xf32>
    %cst_22 = arith.constant 1.000000e+00 : f32
    %25 = vector.broadcast %cst_22 : f32 to vector<16x4xf32>
    %26 = arith.addf %25, %24 : vector<16x4xf32>
    %27 = math.log %26 : vector<16x4xf32>
    %28 = arith.select %21, %19, %27 : vector<16x4xi1>, vector<16x4xf32>
    %29 = vector.broadcast %8 : vector<1x4xf32> to vector<16x4xf32>
    %30 = arith.mulf %28, %29 : vector<16x4xf32>
    %31 = vector.extract_strided_slice %4 {offsets = [3, 0], sizes = [1, 96], strides = [1, 1]} : vector<4x96xf32> to vector<1x96xf32>
    %32 = vector.broadcast %31 : vector<1x96xf32> to vector<16x96xf32>
    %33 = arith.mulf %16, %32 : vector<16x96xf32>
    %c1_i32 = arith.constant 1 : i32
    %34 = tpu.dynamic_rotate %16 by %c1_i32 dim 0 : vector<16x96xf32>, i32 -> vector<16x96xf32>
    %35 = vector.extract_strided_slice %2 {offsets = [0, 1], sizes = [16, 1], strides = [1, 1]} : vector<16x4xf32> to vector<16x1xf32>
    %36 = vector.broadcast %35 : vector<16x1xf32> to vector<16x96xf32>
    %37 = arith.mulf %34, %36 : vector<16x96xf32>
    %38 = vector.extract_strided_slice %4 {offsets = [2, 0], sizes = [1, 96], strides = [1, 1]} : vector<4x96xf32> to vector<1x96xf32>
    %39 = vector.broadcast %38 : vector<1x96xf32> to vector<16x96xf32>
    %40 = arith.mulf %37, %39 : vector<16x96xf32>
    %41 = arith.addf %33, %40 : vector<16x96xf32>
    %c2_i32 = arith.constant 2 : i32
    %42 = tpu.dynamic_rotate %16 by %c2_i32 dim 0 : vector<16x96xf32>, i32 -> vector<16x96xf32>
    %43 = vector.extract_strided_slice %2 {offsets = [0, 2], sizes = [16, 1], strides = [1, 1]} : vector<16x4xf32> to vector<16x1xf32>
    %44 = vector.broadcast %43 : vector<16x1xf32> to vector<16x96xf32>
    %45 = arith.mulf %42, %44 : vector<16x96xf32>
    %46 = vector.extract_strided_slice %4 {offsets = [1, 0], sizes = [1, 96], strides = [1, 1]} : vector<4x96xf32> to vector<1x96xf32>
    %47 = vector.broadcast %46 : vector<1x96xf32> to vector<16x96xf32>
    %48 = arith.mulf %45, %47 : vector<16x96xf32>
    %49 = arith.addf %41, %48 : vector<16x96xf32>
    %c3_i32 = arith.constant 3 : i32
    %50 = tpu.dynamic_rotate %16 by %c3_i32 dim 0 : vector<16x96xf32>, i32 -> vector<16x96xf32>
    %51 = vector.extract_strided_slice %2 {offsets = [0, 3], sizes = [16, 1], strides = [1, 1]} : vector<16x4xf32> to vector<16x1xf32>
    %52 = vector.broadcast %51 : vector<16x1xf32> to vector<16x96xf32>
    %53 = arith.mulf %50, %52 : vector<16x96xf32>
    %54 = vector.extract_strided_slice %4 {offsets = [0, 0], sizes = [1, 96], strides = [1, 1]} : vector<4x96xf32> to vector<1x96xf32>
    %55 = vector.broadcast %54 : vector<1x96xf32> to vector<16x96xf32>
    %56 = arith.mulf %53, %55 : vector<16x96xf32>
    %57 = arith.addf %49, %56 : vector<16x96xf32>
    %58 = vector.broadcast %5 : vector<1x96xf32> to vector<16x96xf32>
    %59 = arith.addf %57, %58 : vector<16x96xf32>
    %cst_23 = arith.constant 0.000000e+00 : f32
    %60 = vector.broadcast %cst_23 : f32 to vector<16x96xf32>
    %61 = arith.subf %60, %59 : vector<16x96xf32>
    %62 = math.exp %61 : vector<16x96xf32>
    %cst_24 = arith.constant 1.000000e+00 : f32
    %63 = vector.broadcast %cst_24 : f32 to vector<16x96xf32>
    %64 = arith.addf %63, %62 : vector<16x96xf32>
    %65 = tpu.reciprocal %64 {approx = true} : vector<16x96xf32> -> vector<16x96xf32>
    %66 = arith.mulf %59, %65 : vector<16x96xf32>
    %67 = vector.extract_strided_slice %66 {offsets = [0, 0], sizes = [16, 64], strides = [1, 1]} : vector<16x96xf32> to vector<16x64xf32>
    %68 = vector.extract_strided_slice %66 {offsets = [0, 64], sizes = [16, 16], strides = [1, 1]} : vector<16x96xf32> to vector<16x16xf32>
    %69 = vector.extract_strided_slice %66 {offsets = [0, 80], sizes = [16, 16], strides = [1, 1]} : vector<16x96xf32> to vector<16x16xf32>
    %cst_25 = arith.constant dense<0.000000e+00> : vector<16x4xf32>
    %70 = tpu.matmul %0, %30, %cst_25 {dimension_numbers = #tpu.dot_dimension_numbers<[1], [0], [0], [1], [0, 0, 1, 1], [], []>} : vector<16x16xf32>, vector<16x4xf32>, vector<16x4xf32> -> vector<16x4xf32>
    %cst_26 = arith.constant dense<0.000000e+00> : vector<4x16xf32>
    %71 = tpu.matmul %30, %1, %cst_26 {dimension_numbers = #tpu.dot_dimension_numbers<[0], [0], [1], [1], [0, 1, 1, 1], [], []>} : vector<16x4xf32>, vector<16x16xf32>, vector<4x16xf32> -> vector<4x16xf32>
    %cst_27 = arith.constant dense<0.000000e+00> : vector<16x16xf32>
    %72 = tpu.matmul %69, %68, %cst_27 {dimension_numbers = #tpu.dot_dimension_numbers<[1], [1], [0], [0], [0, 0, 1, 0], [], []>} : vector<16x16xf32>, vector<16x16xf32>, vector<16x16xf32> -> vector<16x16xf32>
    %73 = arith.mulf %72, %0 : vector<16x16xf32>
    %cst_28 = arith.constant dense<0.000000e+00> : vector<16x64xf32>
    %74 = tpu.matmul %28, %3, %cst_28 {dimension_numbers = #tpu.dot_dimension_numbers<[1], [0], [0], [1], [0, 0, 1, 1], [], []>} : vector<16x4xf32>, vector<4x64xf32>, vector<16x64xf32> -> vector<16x64xf32>
    %75 = arith.mulf %67, %74 : vector<16x64xf32>
    %76 = vector.extract_strided_slice %70 {offsets = [0, 0], sizes = [16, 1], strides = [1, 1]} : vector<16x4xf32> to vector<16x1xf32>
    %77 = vector.extract_strided_slice %71 {offsets = [0, 0], sizes = [1, 16], strides = [1, 1]} : vector<4x16xf32> to vector<1x16xf32>
    %78 = vector.broadcast %76 : vector<16x1xf32> to vector<16x16xf32>
    %79 = vector.broadcast %77 : vector<1x16xf32> to vector<16x16xf32>
    %80 = arith.subf %78, %79 : vector<16x16xf32>
    %cst_29 = arith.constant 0.000000e+00 : f32
    %81 = vector.broadcast %cst_29 : f32 to vector<16x16xf32>
    %82 = arith.minimumf %80, %81 : vector<16x16xf32>
    %83 = math.exp %82 : vector<16x16xf32>
    %84 = arith.mulf %73, %83 : vector<16x16xf32>
    %85 = vector.extract_strided_slice %70 {offsets = [0, 1], sizes = [16, 1], strides = [1, 1]} : vector<16x4xf32> to vector<16x1xf32>
    %86 = vector.extract_strided_slice %71 {offsets = [1, 0], sizes = [1, 16], strides = [1, 1]} : vector<4x16xf32> to vector<1x16xf32>
    %87 = vector.broadcast %85 : vector<16x1xf32> to vector<16x16xf32>
    %88 = vector.broadcast %86 : vector<1x16xf32> to vector<16x16xf32>
    %89 = arith.subf %87, %88 : vector<16x16xf32>
    %cst_30 = arith.constant 0.000000e+00 : f32
    %90 = vector.broadcast %cst_30 : f32 to vector<16x16xf32>
    %91 = arith.minimumf %89, %90 : vector<16x16xf32>
    %92 = math.exp %91 : vector<16x16xf32>
    %93 = arith.mulf %73, %92 : vector<16x16xf32>
    %94 = vector.extract_strided_slice %70 {offsets = [0, 2], sizes = [16, 1], strides = [1, 1]} : vector<16x4xf32> to vector<16x1xf32>
    %95 = vector.extract_strided_slice %71 {offsets = [2, 0], sizes = [1, 16], strides = [1, 1]} : vector<4x16xf32> to vector<1x16xf32>
    %96 = vector.broadcast %94 : vector<16x1xf32> to vector<16x16xf32>
    %97 = vector.broadcast %95 : vector<1x16xf32> to vector<16x16xf32>
    %98 = arith.subf %96, %97 : vector<16x16xf32>
    %cst_31 = arith.constant 0.000000e+00 : f32
    %99 = vector.broadcast %cst_31 : f32 to vector<16x16xf32>
    %100 = arith.minimumf %98, %99 : vector<16x16xf32>
    %101 = math.exp %100 : vector<16x16xf32>
    %102 = arith.mulf %73, %101 : vector<16x16xf32>
    %103 = vector.extract_strided_slice %70 {offsets = [0, 3], sizes = [16, 1], strides = [1, 1]} : vector<16x4xf32> to vector<16x1xf32>
    %104 = vector.extract_strided_slice %71 {offsets = [3, 0], sizes = [1, 16], strides = [1, 1]} : vector<4x16xf32> to vector<1x16xf32>
    %105 = vector.broadcast %103 : vector<16x1xf32> to vector<16x16xf32>
    %106 = vector.broadcast %104 : vector<1x16xf32> to vector<16x16xf32>
    %107 = arith.subf %105, %106 : vector<16x16xf32>
    %cst_32 = arith.constant 0.000000e+00 : f32
    %108 = vector.broadcast %cst_32 : f32 to vector<16x16xf32>
    %109 = arith.minimumf %107, %108 : vector<16x16xf32>
    %110 = math.exp %109 : vector<16x16xf32>
    %111 = arith.mulf %73, %110 : vector<16x16xf32>
    %112 = tpu.concatenate %84, %93, %102, %111 in 0 : vector<16x16xf32>, vector<16x16xf32>, vector<16x16xf32>, vector<16x16xf32> -> vector<64x16xf32>
    %cst_33 = arith.constant dense<0.000000e+00> : vector<64x64xf32>
    %113 = tpu.matmul %112, %75, %cst_33 {dimension_numbers = #tpu.dot_dimension_numbers<[1], [0], [0], [1], [0, 0, 1, 1], [], []>} : vector<64x16xf32>, vector<16x64xf32>, vector<64x64xf32> -> vector<64x64xf32>
    %114 = vector.broadcast %9 : vector<1x64xf32> to vector<16x64xf32>
    %115 = arith.mulf %67, %114 : vector<16x64xf32>
    %116 = vector.extract_strided_slice %113 {offsets = [0, 0], sizes = [16, 64], strides = [1, 1]} : vector<64x64xf32> to vector<16x64xf32>
    %117 = vector.extract_strided_slice %3 {offsets = [0, 0], sizes = [1, 64], strides = [1, 1]} : vector<4x64xf32> to vector<1x64xf32>
    %118 = vector.broadcast %117 : vector<1x64xf32> to vector<16x64xf32>
    %119 = arith.mulf %116, %118 : vector<16x64xf32>
    %120 = arith.addf %115, %119 : vector<16x64xf32>
    %121 = vector.extract_strided_slice %113 {offsets = [16, 0], sizes = [16, 64], strides = [1, 1]} : vector<64x64xf32> to vector<16x64xf32>
    %122 = vector.extract_strided_slice %3 {offsets = [1, 0], sizes = [1, 64], strides = [1, 1]} : vector<4x64xf32> to vector<1x64xf32>
    %123 = vector.broadcast %122 : vector<1x64xf32> to vector<16x64xf32>
    %124 = arith.mulf %121, %123 : vector<16x64xf32>
    %125 = arith.addf %120, %124 : vector<16x64xf32>
    %126 = vector.extract_strided_slice %113 {offsets = [32, 0], sizes = [16, 64], strides = [1, 1]} : vector<64x64xf32> to vector<16x64xf32>
    %127 = vector.extract_strided_slice %3 {offsets = [2, 0], sizes = [1, 64], strides = [1, 1]} : vector<4x64xf32> to vector<1x64xf32>
    %128 = vector.broadcast %127 : vector<1x64xf32> to vector<16x64xf32>
    %129 = arith.mulf %126, %128 : vector<16x64xf32>
    %130 = arith.addf %125, %129 : vector<16x64xf32>
    %131 = vector.extract_strided_slice %113 {offsets = [48, 0], sizes = [16, 64], strides = [1, 1]} : vector<64x64xf32> to vector<16x64xf32>
    %132 = vector.extract_strided_slice %3 {offsets = [3, 0], sizes = [1, 64], strides = [1, 1]} : vector<4x64xf32> to vector<1x64xf32>
    %133 = vector.broadcast %132 : vector<1x64xf32> to vector<16x64xf32>
    %134 = arith.mulf %131, %133 : vector<16x64xf32>
    %135 = arith.addf %130, %134 : vector<16x64xf32>
    %cst_34 = arith.constant 0.000000e+00 : f32
    %136 = vector.broadcast %cst_34 : f32 to vector<16x64xf32>
    %137 = arith.subf %136, %15 : vector<16x64xf32>
    %138 = math.exp %137 : vector<16x64xf32>
    %cst_35 = arith.constant 1.000000e+00 : f32
    %139 = vector.broadcast %cst_35 : f32 to vector<16x64xf32>
    %140 = arith.addf %139, %138 : vector<16x64xf32>
    %141 = tpu.reciprocal %140 {approx = true} : vector<16x64xf32> -> vector<16x64xf32>
    %142 = arith.mulf %15, %141 : vector<16x64xf32>
    %143 = arith.mulf %135, %142 : vector<16x64xf32>
    %144 = arith.mulf %143, %143 : vector<16x64xf32>
    %cst_36 = arith.constant dense<0.000000e+00> : vector<16xf32>
    %145 = vector.multi_reduction <add>, %144, %cst_36 [1] : vector<16x64xf32> to vector<16xf32>
    %146 = vector.shape_cast %145 : vector<16xf32> to vector<16x1xf32>
    %cst_37 = arith.constant 6.400000e+01 : f32
    %147 = vector.broadcast %cst_37 : f32 to vector<16x1xf32>
    %148 = arith.divf %146, %147 : vector<16x1xf32>
    %cst_38 = arith.constant 9.99999974E-6 : f32
    %149 = vector.broadcast %cst_38 : f32 to vector<16x1xf32>
    %150 = arith.addf %148, %149 : vector<16x1xf32>
    %151 = math.rsqrt %150 : vector<16x1xf32>
    %152 = vector.broadcast %151 : vector<16x1xf32> to vector<16x64xf32>
    %153 = arith.mulf %143, %152 : vector<16x64xf32>
    %154 = vector.broadcast %10 : vector<1x64xf32> to vector<16x64xf32>
    %155 = arith.mulf %153, %154 : vector<16x64xf32>
    %c0_39 = arith.constant 0 : index
    %c0_40 = arith.constant 0 : index
    %156 = vector.load %arg2[%c0_39, %c0_40] : memref<64x256xf32, #tpu.memory_space<vmem>>, vector<64x32xf32>
    %cst_41 = arith.constant dense<0.000000e+00> : vector<16x32xf32>
    %157 = tpu.matmul %155, %156, %cst_41 {dimension_numbers = #tpu.dot_dimension_numbers<[1], [0], [0], [1], [0, 0, 1, 1], [], []>} : vector<16x64xf32>, vector<64x32xf32>, vector<16x32xf32> -> vector<16x32xf32>
    %cst_42 = arith.constant 0.000000e+00 : f32
    %158 = vector.broadcast %cst_42 : f32 to vector<16x32xf32>
    %159 = arith.cmpf oge, %157, %158 : vector<16x32xf32>
    %cst_43 = arith.constant 0.00999999977 : f32
    %160 = vector.broadcast %cst_43 : f32 to vector<16x32xf32>
    %161 = arith.mulf %160, %157 : vector<16x32xf32>
    %162 = arith.select %159, %157, %161 : vector<16x32xi1>, vector<16x32xf32>
    %c0_44 = arith.constant 0 : index
    %c256_45 = arith.constant 256 : index
    %163 = vector.load %arg1[%c0_44, %c256_45] : memref<32x512xf32, #tpu.memory_space<vmem>>, vector<32x164xf32>
    %cst_46 = arith.constant dense<0.000000e+00> : vector<16x164xf32>
    %164 = tpu.matmul %162, %163, %cst_46 {dimension_numbers = #tpu.dot_dimension_numbers<[1], [0], [0], [1], [0, 0, 1, 1], [], []>} : vector<16x32xf32>, vector<32x164xf32>, vector<16x164xf32> -> vector<16x164xf32>
    %165 = vector.broadcast %6 : vector<1x164xf32> to vector<16x164xf32>
    %166 = arith.addf %164, %165 : vector<16x164xf32>
    %167 = vector.extract_strided_slice %166 {offsets = [0, 0], sizes = [16, 64], strides = [1, 1]} : vector<16x164xf32> to vector<16x64xf32>
    %168 = vector.extract_strided_slice %166 {offsets = [0, 64], sizes = [16, 96], strides = [1, 1]} : vector<16x164xf32> to vector<16x96xf32>
    %169 = vector.extract_strided_slice %166 {offsets = [0, 160], sizes = [16, 4], strides = [1, 1]} : vector<16x164xf32> to vector<16x4xf32>
    %170 = vector.broadcast %7 : vector<1x4xf32> to vector<16x4xf32>
    %171 = arith.addf %169, %170 : vector<16x4xf32>
    %cst_47 = arith.constant 2.000000e+01 : f32
    %172 = vector.broadcast %cst_47 : f32 to vector<16x4xf32>
    %173 = arith.cmpf ogt, %171, %172 : vector<16x4xf32>
    %cst_48 = arith.constant 2.000000e+01 : f32
    %174 = vector.broadcast %cst_48 : f32 to vector<16x4xf32>
    %175 = arith.minimumf %171, %174 : vector<16x4xf32>
    %176 = math.exp %175 : vector<16x4xf32>
    %cst_49 = arith.constant 1.000000e+00 : f32
    %177 = vector.broadcast %cst_49 : f32 to vector<16x4xf32>
    %178 = arith.addf %177, %176 : vector<16x4xf32>
    %179 = math.log %178 : vector<16x4xf32>
    %180 = arith.select %173, %171, %179 : vector<16x4xi1>, vector<16x4xf32>
    %181 = vector.broadcast %8 : vector<1x4xf32> to vector<16x4xf32>
    %182 = arith.mulf %180, %181 : vector<16x4xf32>
    %183 = vector.extract_strided_slice %4 {offsets = [3, 0], sizes = [1, 96], strides = [1, 1]} : vector<4x96xf32> to vector<1x96xf32>
    %184 = vector.broadcast %183 : vector<1x96xf32> to vector<16x96xf32>
    %185 = arith.mulf %168, %184 : vector<16x96xf32>
    %c1_i32_50 = arith.constant 1 : i32
    %186 = tpu.dynamic_rotate %168 by %c1_i32_50 dim 0 : vector<16x96xf32>, i32 -> vector<16x96xf32>
    %187 = vector.extract_strided_slice %2 {offsets = [0, 1], sizes = [16, 1], strides = [1, 1]} : vector<16x4xf32> to vector<16x1xf32>
    %188 = vector.broadcast %187 : vector<16x1xf32> to vector<16x96xf32>
    %189 = arith.mulf %186, %188 : vector<16x96xf32>
    %190 = vector.extract_strided_slice %4 {offsets = [2, 0], sizes = [1, 96], strides = [1, 1]} : vector<4x96xf32> to vector<1x96xf32>
    %191 = vector.broadcast %190 : vector<1x96xf32> to vector<16x96xf32>
    %192 = arith.mulf %189, %191 : vector<16x96xf32>
    %193 = arith.addf %185, %192 : vector<16x96xf32>
    %c2_i32_51 = arith.constant 2 : i32
    %194 = tpu.dynamic_rotate %168 by %c2_i32_51 dim 0 : vector<16x96xf32>, i32 -> vector<16x96xf32>
    %195 = vector.extract_strided_slice %2 {offsets = [0, 2], sizes = [16, 1], strides = [1, 1]} : vector<16x4xf32> to vector<16x1xf32>
    %196 = vector.broadcast %195 : vector<16x1xf32> to vector<16x96xf32>
    %197 = arith.mulf %194, %196 : vector<16x96xf32>
    %198 = vector.extract_strided_slice %4 {offsets = [1, 0], sizes = [1, 96], strides = [1, 1]} : vector<4x96xf32> to vector<1x96xf32>
    %199 = vector.broadcast %198 : vector<1x96xf32> to vector<16x96xf32>
    %200 = arith.mulf %197, %199 : vector<16x96xf32>
    %201 = arith.addf %193, %200 : vector<16x96xf32>
    %c3_i32_52 = arith.constant 3 : i32
    %202 = tpu.dynamic_rotate %168 by %c3_i32_52 dim 0 : vector<16x96xf32>, i32 -> vector<16x96xf32>
    %203 = vector.extract_strided_slice %2 {offsets = [0, 3], sizes = [16, 1], strides = [1, 1]} : vector<16x4xf32> to vector<16x1xf32>
    %204 = vector.broadcast %203 : vector<16x1xf32> to vector<16x96xf32>
    %205 = arith.mulf %202, %204 : vector<16x96xf32>
    %206 = vector.extract_strided_slice %4 {offsets = [0, 0], sizes = [1, 96], strides = [1, 1]} : vector<4x96xf32> to vector<1x96xf32>
    %207 = vector.broadcast %206 : vector<1x96xf32> to vector<16x96xf32>
    %208 = arith.mulf %205, %207 : vector<16x96xf32>
    %209 = arith.addf %201, %208 : vector<16x96xf32>
    %210 = vector.broadcast %5 : vector<1x96xf32> to vector<16x96xf32>
    %211 = arith.addf %209, %210 : vector<16x96xf32>
    %cst_53 = arith.constant 0.000000e+00 : f32
    %212 = vector.broadcast %cst_53 : f32 to vector<16x96xf32>
    %213 = arith.subf %212, %211 : vector<16x96xf32>
    %214 = math.exp %213 : vector<16x96xf32>
    %cst_54 = arith.constant 1.000000e+00 : f32
    %215 = vector.broadcast %cst_54 : f32 to vector<16x96xf32>
    %216 = arith.addf %215, %214 : vector<16x96xf32>
    %217 = tpu.reciprocal %216 {approx = true} : vector<16x96xf32> -> vector<16x96xf32>
    %218 = arith.mulf %211, %217 : vector<16x96xf32>
    %219 = vector.extract_strided_slice %218 {offsets = [0, 0], sizes = [16, 64], strides = [1, 1]} : vector<16x96xf32> to vector<16x64xf32>
    %220 = vector.extract_strided_slice %218 {offsets = [0, 64], sizes = [16, 16], strides = [1, 1]} : vector<16x96xf32> to vector<16x16xf32>
    %221 = vector.extract_strided_slice %218 {offsets = [0, 80], sizes = [16, 16], strides = [1, 1]} : vector<16x96xf32> to vector<16x16xf32>
    %cst_55 = arith.constant dense<0.000000e+00> : vector<16x4xf32>
    %222 = tpu.matmul %0, %182, %cst_55 {dimension_numbers = #tpu.dot_dimension_numbers<[1], [0], [0], [1], [0, 0, 1, 1], [], []>} : vector<16x16xf32>, vector<16x4xf32>, vector<16x4xf32> -> vector<16x4xf32>
    %cst_56 = arith.constant dense<0.000000e+00> : vector<4x16xf32>
    %223 = tpu.matmul %182, %1, %cst_56 {dimension_numbers = #tpu.dot_dimension_numbers<[0], [0], [1], [1], [0, 1, 1, 1], [], []>} : vector<16x4xf32>, vector<16x16xf32>, vector<4x16xf32> -> vector<4x16xf32>
    %cst_57 = arith.constant dense<0.000000e+00> : vector<16x16xf32>
    %224 = tpu.matmul %221, %220, %cst_57 {dimension_numbers = #tpu.dot_dimension_numbers<[1], [1], [0], [0], [0, 0, 1, 0], [], []>} : vector<16x16xf32>, vector<16x16xf32>, vector<16x16xf32> -> vector<16x16xf32>
    %225 = arith.mulf %224, %0 : vector<16x16xf32>
    %cst_58 = arith.constant dense<0.000000e+00> : vector<16x64xf32>
    %226 = tpu.matmul %180, %3, %cst_58 {dimension_numbers = #tpu.dot_dimension_numbers<[1], [0], [0], [1], [0, 0, 1, 1], [], []>} : vector<16x4xf32>, vector<4x64xf32>, vector<16x64xf32> -> vector<16x64xf32>
    %227 = arith.mulf %219, %226 : vector<16x64xf32>
    %228 = vector.extract_strided_slice %222 {offsets = [0, 0], sizes = [16, 1], strides = [1, 1]} : vector<16x4xf32> to vector<16x1xf32>
    %229 = vector.extract_strided_slice %223 {offsets = [0, 0], sizes = [1, 16], strides = [1, 1]} : vector<4x16xf32> to vector<1x16xf32>
    %230 = vector.broadcast %228 : vector<16x1xf32> to vector<16x16xf32>
    %231 = vector.broadcast %229 : vector<1x16xf32> to vector<16x16xf32>
    %232 = arith.subf %230, %231 : vector<16x16xf32>
    %cst_59 = arith.constant 0.000000e+00 : f32
    %233 = vector.broadcast %cst_59 : f32 to vector<16x16xf32>
    %234 = arith.minimumf %232, %233 : vector<16x16xf32>
    %235 = math.exp %234 : vector<16x16xf32>
    %236 = arith.mulf %225, %235 : vector<16x16xf32>
    %237 = vector.extract_strided_slice %222 {offsets = [0, 1], sizes = [16, 1], strides = [1, 1]} : vector<16x4xf32> to vector<16x1xf32>
    %238 = vector.extract_strided_slice %223 {offsets = [1, 0], sizes = [1, 16], strides = [1, 1]} : vector<4x16xf32> to vector<1x16xf32>
    %239 = vector.broadcast %237 : vector<16x1xf32> to vector<16x16xf32>
    %240 = vector.broadcast %238 : vector<1x16xf32> to vector<16x16xf32>
    %241 = arith.subf %239, %240 : vector<16x16xf32>
    %cst_60 = arith.constant 0.000000e+00 : f32
    %242 = vector.broadcast %cst_60 : f32 to vector<16x16xf32>
    %243 = arith.minimumf %241, %242 : vector<16x16xf32>
    %244 = math.exp %243 : vector<16x16xf32>
    %245 = arith.mulf %225, %244 : vector<16x16xf32>
    %246 = vector.extract_strided_slice %222 {offsets = [0, 2], sizes = [16, 1], strides = [1, 1]} : vector<16x4xf32> to vector<16x1xf32>
    %247 = vector.extract_strided_slice %223 {offsets = [2, 0], sizes = [1, 16], strides = [1, 1]} : vector<4x16xf32> to vector<1x16xf32>
    %248 = vector.broadcast %246 : vector<16x1xf32> to vector<16x16xf32>
    %249 = vector.broadcast %247 : vector<1x16xf32> to vector<16x16xf32>
    %250 = arith.subf %248, %249 : vector<16x16xf32>
    %cst_61 = arith.constant 0.000000e+00 : f32
    %251 = vector.broadcast %cst_61 : f32 to vector<16x16xf32>
    %252 = arith.minimumf %250, %251 : vector<16x16xf32>
    %253 = math.exp %252 : vector<16x16xf32>
    %254 = arith.mulf %225, %253 : vector<16x16xf32>
    %255 = vector.extract_strided_slice %222 {offsets = [0, 3], sizes = [16, 1], strides = [1, 1]} : vector<16x4xf32> to vector<16x1xf32>
    %256 = vector.extract_strided_slice %223 {offsets = [3, 0], sizes = [1, 16], strides = [1, 1]} : vector<4x16xf32> to vector<1x16xf32>
    %257 = vector.broadcast %255 : vector<16x1xf32> to vector<16x16xf32>
    %258 = vector.broadcast %256 : vector<1x16xf32> to vector<16x16xf32>
    %259 = arith.subf %257, %258 : vector<16x16xf32>
    %cst_62 = arith.constant 0.000000e+00 : f32
    %260 = vector.broadcast %cst_62 : f32 to vector<16x16xf32>
    %261 = arith.minimumf %259, %260 : vector<16x16xf32>
    %262 = math.exp %261 : vector<16x16xf32>
    %263 = arith.mulf %225, %262 : vector<16x16xf32>
    %264 = tpu.concatenate %236, %245, %254, %263 in 0 : vector<16x16xf32>, vector<16x16xf32>, vector<16x16xf32>, vector<16x16xf32> -> vector<64x16xf32>
    %cst_63 = arith.constant dense<0.000000e+00> : vector<64x64xf32>
    %265 = tpu.matmul %264, %227, %cst_63 {dimension_numbers = #tpu.dot_dimension_numbers<[1], [0], [0], [1], [0, 0, 1, 1], [], []>} : vector<64x16xf32>, vector<16x64xf32>, vector<64x64xf32> -> vector<64x64xf32>
    %266 = vector.broadcast %9 : vector<1x64xf32> to vector<16x64xf32>
    %267 = arith.mulf %219, %266 : vector<16x64xf32>
    %268 = vector.extract_strided_slice %265 {offsets = [0, 0], sizes = [16, 64], strides = [1, 1]} : vector<64x64xf32> to vector<16x64xf32>
    %269 = vector.extract_strided_slice %3 {offsets = [0, 0], sizes = [1, 64], strides = [1, 1]} : vector<4x64xf32> to vector<1x64xf32>
    %270 = vector.broadcast %269 : vector<1x64xf32> to vector<16x64xf32>
    %271 = arith.mulf %268, %270 : vector<16x64xf32>
    %272 = arith.addf %267, %271 : vector<16x64xf32>
    %273 = vector.extract_strided_slice %265 {offsets = [16, 0], sizes = [16, 64], strides = [1, 1]} : vector<64x64xf32> to vector<16x64xf32>
    %274 = vector.extract_strided_slice %3 {offsets = [1, 0], sizes = [1, 64], strides = [1, 1]} : vector<4x64xf32> to vector<1x64xf32>
    %275 = vector.broadcast %274 : vector<1x64xf32> to vector<16x64xf32>
    %276 = arith.mulf %273, %275 : vector<16x64xf32>
    %277 = arith.addf %272, %276 : vector<16x64xf32>
    %278 = vector.extract_strided_slice %265 {offsets = [32, 0], sizes = [16, 64], strides = [1, 1]} : vector<64x64xf32> to vector<16x64xf32>
    %279 = vector.extract_strided_slice %3 {offsets = [2, 0], sizes = [1, 64], strides = [1, 1]} : vector<4x64xf32> to vector<1x64xf32>
    %280 = vector.broadcast %279 : vector<1x64xf32> to vector<16x64xf32>
    %281 = arith.mulf %278, %280 : vector<16x64xf32>
    %282 = arith.addf %277, %281 : vector<16x64xf32>
    %283 = vector.extract_strided_slice %265 {offsets = [48, 0], sizes = [16, 64], strides = [1, 1]} : vector<64x64xf32> to vector<16x64xf32>
    %284 = vector.extract_strided_slice %3 {offsets = [3, 0], sizes = [1, 64], strides = [1, 1]} : vector<4x64xf32> to vector<1x64xf32>
    %285 = vector.broadcast %284 : vector<1x64xf32> to vector<16x64xf32>
    %286 = arith.mulf %283, %285 : vector<16x64xf32>
    %287 = arith.addf %282, %286 : vector<16x64xf32>
    %cst_64 = arith.constant 0.000000e+00 : f32
    %288 = vector.broadcast %cst_64 : f32 to vector<16x64xf32>
    %289 = arith.subf %288, %167 : vector<16x64xf32>
    %290 = math.exp %289 : vector<16x64xf32>
    %cst_65 = arith.constant 1.000000e+00 : f32
    %291 = vector.broadcast %cst_65 : f32 to vector<16x64xf32>
    %292 = arith.addf %291, %290 : vector<16x64xf32>
    %293 = tpu.reciprocal %292 {approx = true} : vector<16x64xf32> -> vector<16x64xf32>
    %294 = arith.mulf %167, %293 : vector<16x64xf32>
    %295 = arith.mulf %287, %294 : vector<16x64xf32>
    %296 = arith.mulf %295, %295 : vector<16x64xf32>
    %cst_66 = arith.constant dense<0.000000e+00> : vector<16xf32>
    %297 = vector.multi_reduction <add>, %296, %cst_66 [1] : vector<16x64xf32> to vector<16xf32>
    %298 = vector.shape_cast %297 : vector<16xf32> to vector<16x1xf32>
    %cst_67 = arith.constant 6.400000e+01 : f32
    %299 = vector.broadcast %cst_67 : f32 to vector<16x1xf32>
    %300 = arith.divf %298, %299 : vector<16x1xf32>
    %cst_68 = arith.constant 9.99999974E-6 : f32
    %301 = vector.broadcast %cst_68 : f32 to vector<16x1xf32>
    %302 = arith.addf %300, %301 : vector<16x1xf32>
    %303 = math.rsqrt %302 : vector<16x1xf32>
    %304 = vector.broadcast %303 : vector<16x1xf32> to vector<16x64xf32>
    %305 = arith.mulf %295, %304 : vector<16x64xf32>
    %306 = vector.broadcast %10 : vector<1x64xf32> to vector<16x64xf32>
    %307 = arith.mulf %305, %306 : vector<16x64xf32>
    %c0_69 = arith.constant 0 : index
    %c0_70 = arith.constant 0 : index
    %308 = vector.load %arg2[%c0_69, %c0_70] : memref<64x256xf32, #tpu.memory_space<vmem>>, vector<64x32xf32>
    %cst_71 = arith.constant dense<0.000000e+00> : vector<16x32xf32>
    %309 = tpu.matmul %307, %308, %cst_71 {dimension_numbers = #tpu.dot_dimension_numbers<[1], [0], [0], [1], [0, 0, 1, 1], [], []>} : vector<16x64xf32>, vector<64x32xf32>, vector<16x32xf32> -> vector<16x32xf32>
    %cst_72 = arith.constant 0.000000e+00 : f32
    %310 = vector.broadcast %cst_72 : f32 to vector<16x32xf32>
    %311 = arith.cmpf oge, %309, %310 : vector<16x32xf32>
    %cst_73 = arith.constant 0.00999999977 : f32
    %312 = vector.broadcast %cst_73 : f32 to vector<16x32xf32>
    %313 = arith.mulf %312, %309 : vector<16x32xf32>
    %314 = arith.select %311, %309, %313 : vector<16x32xi1>, vector<16x32xf32>
    %c0_74 = arith.constant 0 : index
    %c256_75 = arith.constant 256 : index
    %315 = vector.load %arg1[%c0_74, %c256_75] : memref<32x512xf32, #tpu.memory_space<vmem>>, vector<32x164xf32>
    %cst_76 = arith.constant dense<0.000000e+00> : vector<16x164xf32>
    %316 = tpu.matmul %314, %315, %cst_76 {dimension_numbers = #tpu.dot_dimension_numbers<[1], [0], [0], [1], [0, 0, 1, 1], [], []>} : vector<16x32xf32>, vector<32x164xf32>, vector<16x164xf32> -> vector<16x164xf32>
    %317 = vector.broadcast %6 : vector<1x164xf32> to vector<16x164xf32>
    %318 = arith.addf %316, %317 : vector<16x164xf32>
    %319 = vector.extract_strided_slice %318 {offsets = [0, 0], sizes = [16, 64], strides = [1, 1]} : vector<16x164xf32> to vector<16x64xf32>
    %320 = vector.extract_strided_slice %318 {offsets = [0, 64], sizes = [16, 96], strides = [1, 1]} : vector<16x164xf32> to vector<16x96xf32>
    %321 = vector.extract_strided_slice %318 {offsets = [0, 160], sizes = [16, 4], strides = [1, 1]} : vector<16x164xf32> to vector<16x4xf32>
    %322 = vector.broadcast %7 : vector<1x4xf32> to vector<16x4xf32>
    %323 = arith.addf %321, %322 : vector<16x4xf32>
    %cst_77 = arith.constant 2.000000e+01 : f32
    %324 = vector.broadcast %cst_77 : f32 to vector<16x4xf32>
    %325 = arith.cmpf ogt, %323, %324 : vector<16x4xf32>
    %cst_78 = arith.constant 2.000000e+01 : f32
    %326 = vector.broadcast %cst_78 : f32 to vector<16x4xf32>
    %327 = arith.minimumf %323, %326 : vector<16x4xf32>
    %328 = math.exp %327 : vector<16x4xf32>
    %cst_79 = arith.constant 1.000000e+00 : f32
    %329 = vector.broadcast %cst_79 : f32 to vector<16x4xf32>
    %330 = arith.addf %329, %328 : vector<16x4xf32>
    %331 = math.log %330 : vector<16x4xf32>
    %332 = arith.select %325, %323, %331 : vector<16x4xi1>, vector<16x4xf32>
    %333 = vector.broadcast %8 : vector<1x4xf32> to vector<16x4xf32>
    %334 = arith.mulf %332, %333 : vector<16x4xf32>
    %335 = vector.extract_strided_slice %4 {offsets = [3, 0], sizes = [1, 96], strides = [1, 1]} : vector<4x96xf32> to vector<1x96xf32>
    %336 = vector.broadcast %335 : vector<1x96xf32> to vector<16x96xf32>
    %337 = arith.mulf %320, %336 : vector<16x96xf32>
    %c1_i32_80 = arith.constant 1 : i32
    %338 = tpu.dynamic_rotate %320 by %c1_i32_80 dim 0 : vector<16x96xf32>, i32 -> vector<16x96xf32>
    %339 = vector.extract_strided_slice %2 {offsets = [0, 1], sizes = [16, 1], strides = [1, 1]} : vector<16x4xf32> to vector<16x1xf32>
    %340 = vector.broadcast %339 : vector<16x1xf32> to vector<16x96xf32>
    %341 = arith.mulf %338, %340 : vector<16x96xf32>
    %342 = vector.extract_strided_slice %4 {offsets = [2, 0], sizes = [1, 96], strides = [1, 1]} : vector<4x96xf32> to vector<1x96xf32>
    %343 = vector.broadcast %342 : vector<1x96xf32> to vector<16x96xf32>
    %344 = arith.mulf %341, %343 : vector<16x96xf32>
    %345 = arith.addf %337, %344 : vector<16x96xf32>
    %c2_i32_81 = arith.constant 2 : i32
    %346 = tpu.dynamic_rotate %320 by %c2_i32_81 dim 0 : vector<16x96xf32>, i32 -> vector<16x96xf32>
    %347 = vector.extract_strided_slice %2 {offsets = [0, 2], sizes = [16, 1], strides = [1, 1]} : vector<16x4xf32> to vector<16x1xf32>
    %348 = vector.broadcast %347 : vector<16x1xf32> to vector<16x96xf32>
    %349 = arith.mulf %346, %348 : vector<16x96xf32>
    %350 = vector.extract_strided_slice %4 {offsets = [1, 0], sizes = [1, 96], strides = [1, 1]} : vector<4x96xf32> to vector<1x96xf32>
    %351 = vector.broadcast %350 : vector<1x96xf32> to vector<16x96xf32>
    %352 = arith.mulf %349, %351 : vector<16x96xf32>
    %353 = arith.addf %345, %352 : vector<16x96xf32>
    %c3_i32_82 = arith.constant 3 : i32
    %354 = tpu.dynamic_rotate %320 by %c3_i32_82 dim 0 : vector<16x96xf32>, i32 -> vector<16x96xf32>
    %355 = vector.extract_strided_slice %2 {offsets = [0, 3], sizes = [16, 1], strides = [1, 1]} : vector<16x4xf32> to vector<16x1xf32>
    %356 = vector.broadcast %355 : vector<16x1xf32> to vector<16x96xf32>
    %357 = arith.mulf %354, %356 : vector<16x96xf32>
    %358 = vector.extract_strided_slice %4 {offsets = [0, 0], sizes = [1, 96], strides = [1, 1]} : vector<4x96xf32> to vector<1x96xf32>
    %359 = vector.broadcast %358 : vector<1x96xf32> to vector<16x96xf32>
    %360 = arith.mulf %357, %359 : vector<16x96xf32>
    %361 = arith.addf %353, %360 : vector<16x96xf32>
    %362 = vector.broadcast %5 : vector<1x96xf32> to vector<16x96xf32>
    %363 = arith.addf %361, %362 : vector<16x96xf32>
    %cst_83 = arith.constant 0.000000e+00 : f32
    %364 = vector.broadcast %cst_83 : f32 to vector<16x96xf32>
    %365 = arith.subf %364, %363 : vector<16x96xf32>
    %366 = math.exp %365 : vector<16x96xf32>
    %cst_84 = arith.constant 1.000000e+00 : f32
    %367 = vector.broadcast %cst_84 : f32 to vector<16x96xf32>
    %368 = arith.addf %367, %366 : vector<16x96xf32>
    %369 = tpu.reciprocal %368 {approx = true} : vector<16x96xf32> -> vector<16x96xf32>
    %370 = arith.mulf %363, %369 : vector<16x96xf32>
    %371 = vector.extract_strided_slice %370 {offsets = [0, 0], sizes = [16, 64], strides = [1, 1]} : vector<16x96xf32> to vector<16x64xf32>
    %372 = vector.extract_strided_slice %370 {offsets = [0, 64], sizes = [16, 16], strides = [1, 1]} : vector<16x96xf32> to vector<16x16xf32>
    %373 = vector.extract_strided_slice %370 {offsets = [0, 80], sizes = [16, 16], strides = [1, 1]} : vector<16x96xf32> to vector<16x16xf32>
    %cst_85 = arith.constant dense<0.000000e+00> : vector<16x4xf32>
    %374 = tpu.matmul %0, %334, %cst_85 {dimension_numbers = #tpu.dot_dimension_numbers<[1], [0], [0], [1], [0, 0, 1, 1], [], []>} : vector<16x16xf32>, vector<16x4xf32>, vector<16x4xf32> -> vector<16x4xf32>
    %cst_86 = arith.constant dense<0.000000e+00> : vector<4x16xf32>
    %375 = tpu.matmul %334, %1, %cst_86 {dimension_numbers = #tpu.dot_dimension_numbers<[0], [0], [1], [1], [0, 1, 1, 1], [], []>} : vector<16x4xf32>, vector<16x16xf32>, vector<4x16xf32> -> vector<4x16xf32>
    %cst_87 = arith.constant dense<0.000000e+00> : vector<16x16xf32>
    %376 = tpu.matmul %373, %372, %cst_87 {dimension_numbers = #tpu.dot_dimension_numbers<[1], [1], [0], [0], [0, 0, 1, 0], [], []>} : vector<16x16xf32>, vector<16x16xf32>, vector<16x16xf32> -> vector<16x16xf32>
    %377 = arith.mulf %376, %0 : vector<16x16xf32>
    %cst_88 = arith.constant dense<0.000000e+00> : vector<16x64xf32>
    %378 = tpu.matmul %332, %3, %cst_88 {dimension_numbers = #tpu.dot_dimension_numbers<[1], [0], [0], [1], [0, 0, 1, 1], [], []>} : vector<16x4xf32>, vector<4x64xf32>, vector<16x64xf32> -> vector<16x64xf32>
    %379 = arith.mulf %371, %378 : vector<16x64xf32>
    %380 = vector.extract_strided_slice %374 {offsets = [0, 0], sizes = [16, 1], strides = [1, 1]} : vector<16x4xf32> to vector<16x1xf32>
    %381 = vector.extract_strided_slice %375 {offsets = [0, 0], sizes = [1, 16], strides = [1, 1]} : vector<4x16xf32> to vector<1x16xf32>
    %382 = vector.broadcast %380 : vector<16x1xf32> to vector<16x16xf32>
    %383 = vector.broadcast %381 : vector<1x16xf32> to vector<16x16xf32>
    %384 = arith.subf %382, %383 : vector<16x16xf32>
    %cst_89 = arith.constant 0.000000e+00 : f32
    %385 = vector.broadcast %cst_89 : f32 to vector<16x16xf32>
    %386 = arith.minimumf %384, %385 : vector<16x16xf32>
    %387 = math.exp %386 : vector<16x16xf32>
    %388 = arith.mulf %377, %387 : vector<16x16xf32>
    %389 = vector.extract_strided_slice %374 {offsets = [0, 1], sizes = [16, 1], strides = [1, 1]} : vector<16x4xf32> to vector<16x1xf32>
    %390 = vector.extract_strided_slice %375 {offsets = [1, 0], sizes = [1, 16], strides = [1, 1]} : vector<4x16xf32> to vector<1x16xf32>
    %391 = vector.broadcast %389 : vector<16x1xf32> to vector<16x16xf32>
    %392 = vector.broadcast %390 : vector<1x16xf32> to vector<16x16xf32>
    %393 = arith.subf %391, %392 : vector<16x16xf32>
    %cst_90 = arith.constant 0.000000e+00 : f32
    %394 = vector.broadcast %cst_90 : f32 to vector<16x16xf32>
    %395 = arith.minimumf %393, %394 : vector<16x16xf32>
    %396 = math.exp %395 : vector<16x16xf32>
    %397 = arith.mulf %377, %396 : vector<16x16xf32>
    %398 = vector.extract_strided_slice %374 {offsets = [0, 2], sizes = [16, 1], strides = [1, 1]} : vector<16x4xf32> to vector<16x1xf32>
    %399 = vector.extract_strided_slice %375 {offsets = [2, 0], sizes = [1, 16], strides = [1, 1]} : vector<4x16xf32> to vector<1x16xf32>
    %400 = vector.broadcast %398 : vector<16x1xf32> to vector<16x16xf32>
    %401 = vector.broadcast %399 : vector<1x16xf32> to vector<16x16xf32>
    %402 = arith.subf %400, %401 : vector<16x16xf32>
    %cst_91 = arith.constant 0.000000e+00 : f32
    %403 = vector.broadcast %cst_91 : f32 to vector<16x16xf32>
    %404 = arith.minimumf %402, %403 : vector<16x16xf32>
    %405 = math.exp %404 : vector<16x16xf32>
    %406 = arith.mulf %377, %405 : vector<16x16xf32>
    %407 = vector.extract_strided_slice %374 {offsets = [0, 3], sizes = [16, 1], strides = [1, 1]} : vector<16x4xf32> to vector<16x1xf32>
    %408 = vector.extract_strided_slice %375 {offsets = [3, 0], sizes = [1, 16], strides = [1, 1]} : vector<4x16xf32> to vector<1x16xf32>
    %409 = vector.broadcast %407 : vector<16x1xf32> to vector<16x16xf32>
    %410 = vector.broadcast %408 : vector<1x16xf32> to vector<16x16xf32>
    %411 = arith.subf %409, %410 : vector<16x16xf32>
    %cst_92 = arith.constant 0.000000e+00 : f32
    %412 = vector.broadcast %cst_92 : f32 to vector<16x16xf32>
    %413 = arith.minimumf %411, %412 : vector<16x16xf32>
    %414 = math.exp %413 : vector<16x16xf32>
    %415 = arith.mulf %377, %414 : vector<16x16xf32>
    %416 = tpu.concatenate %388, %397, %406, %415 in 0 : vector<16x16xf32>, vector<16x16xf32>, vector<16x16xf32>, vector<16x16xf32> -> vector<64x16xf32>
    %cst_93 = arith.constant dense<0.000000e+00> : vector<64x64xf32>
    %417 = tpu.matmul %416, %379, %cst_93 {dimension_numbers = #tpu.dot_dimension_numbers<[1], [0], [0], [1], [0, 0, 1, 1], [], []>} : vector<64x16xf32>, vector<16x64xf32>, vector<64x64xf32> -> vector<64x64xf32>
    %418 = vector.broadcast %9 : vector<1x64xf32> to vector<16x64xf32>
    %419 = arith.mulf %371, %418 : vector<16x64xf32>
    %420 = vector.extract_strided_slice %417 {offsets = [0, 0], sizes = [16, 64], strides = [1, 1]} : vector<64x64xf32> to vector<16x64xf32>
    %421 = vector.extract_strided_slice %3 {offsets = [0, 0], sizes = [1, 64], strides = [1, 1]} : vector<4x64xf32> to vector<1x64xf32>
    %422 = vector.broadcast %421 : vector<1x64xf32> to vector<16x64xf32>
    %423 = arith.mulf %420, %422 : vector<16x64xf32>
    %424 = arith.addf %419, %423 : vector<16x64xf32>
    %425 = vector.extract_strided_slice %417 {offsets = [16, 0], sizes = [16, 64], strides = [1, 1]} : vector<64x64xf32> to vector<16x64xf32>
    %426 = vector.extract_strided_slice %3 {offsets = [1, 0], sizes = [1, 64], strides = [1, 1]} : vector<4x64xf32> to vector<1x64xf32>
    %427 = vector.broadcast %426 : vector<1x64xf32> to vector<16x64xf32>
    %428 = arith.mulf %425, %427 : vector<16x64xf32>
    %429 = arith.addf %424, %428 : vector<16x64xf32>
    %430 = vector.extract_strided_slice %417 {offsets = [32, 0], sizes = [16, 64], strides = [1, 1]} : vector<64x64xf32> to vector<16x64xf32>
    %431 = vector.extract_strided_slice %3 {offsets = [2, 0], sizes = [1, 64], strides = [1, 1]} : vector<4x64xf32> to vector<1x64xf32>
    %432 = vector.broadcast %431 : vector<1x64xf32> to vector<16x64xf32>
    %433 = arith.mulf %430, %432 : vector<16x64xf32>
    %434 = arith.addf %429, %433 : vector<16x64xf32>
    %435 = vector.extract_strided_slice %417 {offsets = [48, 0], sizes = [16, 64], strides = [1, 1]} : vector<64x64xf32> to vector<16x64xf32>
    %436 = vector.extract_strided_slice %3 {offsets = [3, 0], sizes = [1, 64], strides = [1, 1]} : vector<4x64xf32> to vector<1x64xf32>
    %437 = vector.broadcast %436 : vector<1x64xf32> to vector<16x64xf32>
    %438 = arith.mulf %435, %437 : vector<16x64xf32>
    %439 = arith.addf %434, %438 : vector<16x64xf32>
    %cst_94 = arith.constant 0.000000e+00 : f32
    %440 = vector.broadcast %cst_94 : f32 to vector<16x64xf32>
    %441 = arith.subf %440, %319 : vector<16x64xf32>
    %442 = math.exp %441 : vector<16x64xf32>
    %cst_95 = arith.constant 1.000000e+00 : f32
    %443 = vector.broadcast %cst_95 : f32 to vector<16x64xf32>
    %444 = arith.addf %443, %442 : vector<16x64xf32>
    %445 = tpu.reciprocal %444 {approx = true} : vector<16x64xf32> -> vector<16x64xf32>
    %446 = arith.mulf %319, %445 : vector<16x64xf32>
    %447 = arith.mulf %439, %446 : vector<16x64xf32>
    %448 = arith.mulf %447, %447 : vector<16x64xf32>
    %cst_96 = arith.constant dense<0.000000e+00> : vector<16xf32>
    %449 = vector.multi_reduction <add>, %448, %cst_96 [1] : vector<16x64xf32> to vector<16xf32>
    %450 = vector.shape_cast %449 : vector<16xf32> to vector<16x1xf32>
    %cst_97 = arith.constant 6.400000e+01 : f32
    %451 = vector.broadcast %cst_97 : f32 to vector<16x1xf32>
    %452 = arith.divf %450, %451 : vector<16x1xf32>
    %cst_98 = arith.constant 9.99999974E-6 : f32
    %453 = vector.broadcast %cst_98 : f32 to vector<16x1xf32>
    %454 = arith.addf %452, %453 : vector<16x1xf32>
    %455 = math.rsqrt %454 : vector<16x1xf32>
    %456 = vector.broadcast %455 : vector<16x1xf32> to vector<16x64xf32>
    %457 = arith.mulf %447, %456 : vector<16x64xf32>
    %458 = vector.broadcast %10 : vector<1x64xf32> to vector<16x64xf32>
    %459 = arith.mulf %457, %458 : vector<16x64xf32>
    %c0_99 = arith.constant 0 : index
    %c128_100 = arith.constant 128 : index
    %460 = vector.load %arg2[%c0_99, %c128_100] : memref<64x256xf32, #tpu.memory_space<vmem>>, vector<64x32xf32>
    %cst_101 = arith.constant dense<0.000000e+00> : vector<16x32xf32>
    %461 = tpu.matmul %459, %460, %cst_101 {dimension_numbers = #tpu.dot_dimension_numbers<[1], [0], [0], [1], [0, 0, 1, 1], [], []>} : vector<16x64xf32>, vector<64x32xf32>, vector<16x32xf32> -> vector<16x32xf32>
    %462 = vector.broadcast %11 : vector<1x32xf32> to vector<16x32xf32>
    %463 = arith.addf %461, %462 : vector<16x32xf32>
    %c0_102 = arith.constant 0 : index
    %c0_103 = arith.constant 0 : index
    %464 = vector.load %arg5[%c0_102, %c0_103] : memref<16x32xf32, #tpu.memory_space<vmem>>, vector<16x32xf32>
    tpu.vector_store %arg5[%c0_102, %c0_103], %463 {strides = array<i32>} : memref<16x32xf32, #tpu.memory_space<vmem>>, vector<16x32xf32>,
    return
  }
}

</mosaic_0001>

<llo_original>
// kernel: self_supervised_mamba2_forward.1
$region0: #{self_supervised_mamba2_forward.1}
  #allocation0 [shape = 'u32[]', space=smem, size = 0x4, offset = 0x4, fixed_abs, tag = 'smem constant byte address 0x4 - core index']
  #allocation1 [shape = 'u32[144,128]{1,0:T(1,128)}', space=vmem, size = 0x12000, scoped, tag = 'internal scratch']
  %s0 = inlined_call_operand.hbm [shape: f32[16,32], index: 0, kind: input, shape index: {}]
  %s1 = inlined_call_operand.hbm [shape: f32[32,512], index: 1, kind: input, shape index: {}]
  %s2 = inlined_call_operand.hbm [shape: f32[64,256], index: 2, kind: input, shape index: {}]
  %s3 = inlined_call_operand.hbm [shape: f32[8,512], index: 3, kind: input, shape index: {}]
  %s4 = inlined_call_operand.hbm [shape: f32[16,512], index: 4, kind: input, shape index: {}]
  %s5 = inlined_call_operand.hbm [shape: f32[16,32], index: 5, kind: output, shape index: {}]
  %s6 = sld [smem:[#allocation0]]
  $region50: #{self_supervised_mamba2_forward.1} parent=0
    _
  %s8 = ssub.s32 1, %s6
  %s9 = scalar_select 0, %s8, %s6
  $region1: #{self_supervised_mamba2_forward.1} parent=0
    #allocation2 [shape = 'u8[8192]{0}', space=vmem, size = 0x2000, scoped, tag = 'input window, operand 0, single buffered']
    #allocation3 [shape = 's32[1]{0}', space=sflag, size = 0x4, scoped, tag = 'scoped memory for self_supervised_mamba2_forward.1']
    #allocation4 [shape = 's32[1]{0}', space=sflag, size = 0x4, scoped, tag = 'scoped memory for self_supervised_mamba2_forward.1']
    #allocation5 [shape = 'u8[65536]{0}', space=vmem, size = 0x10000, scoped, tag = 'input window, operand 1, single buffered']
    #allocation6 [shape = 's32[1]{0}', space=sflag, size = 0x4, scoped, tag = 'scoped memory for self_supervised_mamba2_forward.1']
    #allocation7 [shape = 'u8[65536]{0}', space=vmem, size = 0x10000, scoped, tag = 'input window, operand 2, single buffered']
    #allocation8 [shape = 'u8[16384]{0}', space=vmem, size = 0x4000, scoped, tag = 'input window, operand 3, single buffered']
    #allocation9 [shape = 's32[1]{0}', space=sflag, size = 0x4, scoped, tag = 'scoped memory for self_supervised_mamba2_forward.1']
    #allocation10 [shape = 'u8[32768]{0}', space=vmem, size = 0x8000, scoped, tag = 'input window, operand 4, single buffered']
    #allocation11 [shape = 'u8[8192]{0}', space=vmem, size = 0x2000, scoped, tag = 'output window, operand 0, single buffered']
    %10 = vsyncpa [#allocation3], 0
    %11 = vsyncpa [#allocation6], 0
    %12 = vsyncpa [#allocation9], 0
    %13 = vsyncpa [#allocation4], 0
    // Predicated region
    $region2: #{self_supervised_mamba2_forward.1} parent=1 // pred_check
      _
    $region3: #{self_supervised_mamba2_forward.1} parent=1 // pred_check_branch
      %15 = sbr.rel (0) target = $region5
    $region4: #{self_supervised_mamba2_forward.1} parent=1 // pred_region
      %s17 = ssub.s32 256, 256
      %18 = vsyncadd [#allocation3], %s17
      %s19 = sshll.u32 [#allocation2], 4
      %s20 = int_to_ptr.vmem [resolvable:$true] %s19
      %25 = dma.hbm_to_vmem [thread:$0]  %s0, 256, %s20, [#allocation3], 128, 128, 8
    $region5: #{self_supervised_mamba2_forward.1} parent=1 // pred_fallthru
      _
    // Predicated region
    $region6: #{self_supervised_mamba2_forward.1} parent=1 // pred_check
      _
    $region7: #{self_supervised_mamba2_forward.1} parent=1 // pred_check_branch
      %27 = sbr.rel (0) target = $region9
    $region8: #{self_supervised_mamba2_forward.1} parent=1 // pred_region
      %s29 = ssub.s32 2048, 2048
      %30 = vsyncadd [#allocation6], %s29
      %s31 = sshll.u32 [#allocation5], 4
      %s32 = int_to_ptr.vmem [resolvable:$true] %s31
      %37 = dma.hbm_to_vmem [thread:$0]  %s1, 2048, %s32, [#allocation6], 512, 512, 32
    $region9: #{self_supervised_mamba2_forward.1} parent=1 // pred_fallthru
      _
    // Predicated region
    $region10: #{self_supervised_mamba2_forward.1} parent=1 // pred_check
      _
    $region11: #{self_supervised_mamba2_forward.1} parent=1 // pred_check_branch
      %39 = sbr.rel (0) target = $region13
    $region12: #{self_supervised_mamba2_forward.1} parent=1 // pred_region
      %s41 = ssub.s32 2048, 2048
      %42 = vsyncadd [#allocation6], %s41
      %s43 = sshll.u32 [#allocation7], 4
      %s44 = int_to_ptr.vmem [resolvable:$true] %s43
      %49 = dma.hbm_to_vmem [thread:$0]  %s2, 2048, %s44, [#allocation6], 256, 256, 16
    $region13: #{self_supervised_mamba2_forward.1} parent=1 // pred_fallthru
      _
    // Predicated region
    $region14: #{self_supervised_mamba2_forward.1} parent=1 // pred_check
      _
    $region15: #{self_supervised_mamba2_forward.1} parent=1 // pred_check_branch
      %51 = sbr.rel (0) target = $region17
    $region16: #{self_supervised_mamba2_forward.1} parent=1 // pred_region
      %s53 = ssub.s32 512, 512
      %54 = vsyncadd [#allocation9], %s53
      %s56 = sshll.u32 [#allocation8], 4
      %s57 = int_to_ptr.vmem [resolvable:$true] %s56
      %59 = dma.hbm_to_vmem [thread:$0]  %s3, 512, %s57, [#allocation9]
    $region17: #{self_supervised_mamba2_forward.1} parent=1 // pred_fallthru
      _
    // Predicated region
    $region18: #{self_supervised_mamba2_forward.1} parent=1 // pred_check
      _
    $region19: #{self_supervised_mamba2_forward.1} parent=1 // pred_check_branch
      %61 = sbr.rel (0) target = $region21
    $region20: #{self_supervised_mamba2_forward.1} parent=1 // pred_region
      %s63 = ssub.s32 1024, 1024
      %64 = vsyncadd [#allocation9], %s63
      %s65 = sshll.u32 [#allocation10], 4
      %s66 = int_to_ptr.vmem [resolvable:$true] %s65
      %71 = dma.hbm_to_vmem [thread:$0]  %s4, 1024, %s66, [#allocation9], 512, 512, 32
    $region21: #{self_supervised_mamba2_forward.1} parent=1 // pred_fallthru
      _
    // Predicated region
    $region22: #{self_supervised_mamba2_forward.1} parent=1 // pred_check
      _
    $region23: #{self_supervised_mamba2_forward.1} parent=1 // pred_check_branch
      %73 = sbr.rel (0) target = $region25
    $region24: #{self_supervised_mamba2_forward.1} parent=1 // pred_region
      %74 = dma.done [#allocation3], 256
    $region25: #{self_supervised_mamba2_forward.1} parent=1 // pred_fallthru
      _
    // Predicated region
    $region26: #{self_supervised_mamba2_forward.1} parent=1 // pred_check
      _
    $region27: #{self_supervised_mamba2_forward.1} parent=1 // pred_check_branch
      %76 = sbr.rel (0) target = $region29
    $region28: #{self_supervised_mamba2_forward.1} parent=1 // pred_region
      %77 = dma.done [#allocation6], 2048
    $region29: #{self_supervised_mamba2_forward.1} parent=1 // pred_fallthru
      _
    // Predicated region
    $region30: #{self_supervised_mamba2_forward.1} parent=1 // pred_check
      _
    $region31: #{self_supervised_mamba2_forward.1} parent=1 // pred_check_branch
      %79 = sbr.rel (0) target = $region33
    $region32: #{self_supervised_mamba2_forward.1} parent=1 // pred_region
      %80 = dma.done [#allocation6], 2048
    $region33: #{self_supervised_mamba2_forward.1} parent=1 // pred_fallthru
      _
    // Predicated region
    $region34: #{self_supervised_mamba2_forward.1} parent=1 // pred_check
      _
    $region35: #{self_supervised_mamba2_forward.1} parent=1 // pred_check_branch
      %82 = sbr.rel (0) target = $region37
    $region36: #{self_supervised_mamba2_forward.1} parent=1 // pred_region
      %83 = dma.done [#allocation9], 512
    $region37: #{self_supervised_mamba2_forward.1} parent=1 // pred_fallthru
      _
    // Predicated region
    $region38: #{self_supervised_mamba2_forward.1} parent=1 // pred_check
      _
    $region39: #{self_supervised_mamba2_forward.1} parent=1 // pred_check_branch
      %85 = sbr.rel (0) target = $region41
    $region40: #{self_supervised_mamba2_forward.1} parent=1 // pred_region
      %86 = dma.done [#allocation9], 1024
    $region41: #{self_supervised_mamba2_forward.1} parent=1 // pred_fallthru
      _
    %v87 = vld [vmem:[#allocation10] sm:$0xff]
    %v88 = vld [vmem:[#allocation10 + $0x20] sm:$0xff]
    %v89 = vld [vmem:[#allocation10 + $0x8] sm:$0xff]
    %v90 = vld [vmem:[#allocation10 + $0x28] sm:$0xff]
    %v91 = vld [vmem:[#allocation10 + $0x10] sm:$0xff]
    %v92 = vld [vmem:[#allocation10 + $0x30] sm:$0xff]
    %v93 = vld [vmem:[#allocation10 + $0x18] sm:$0xf]
    %v94 = vld [vmem:[#allocation8] sm:$0xf]
    %v95 = vld [vmem:[#allocation8 + $0x4] ss:$0 sm:$0xff]
    %s96 = scalar_lea.vmem [#allocation8], 5
    %v97 = vld [vmem:[%s96] ss:$8 sm:$0x3]
    %v98 = vld [vmem:[#allocation8 + $0x6] ss:$0 sm:$0xff]
    %v99 = vld [vmem:[#allocation8 + $0xe] ss:$0 sm:$0xff]
    %v100 = vld [vmem:[#allocation8 + $0x7] ss:$0 sm:$0xff]
    %v101 = vld [vmem:[#allocation8 + $0xf] ss:$0 sm:$0xff]
    %v102 = vld [vmem:[#allocation8 + $0x17] ss:$0 sm:$0xff]
    %v103 = vld [vmem:[#allocation2] sm:$0xff]
    %v104 = vld [vmem:[#allocation2 + $0x8] sm:$0xff]
    %v105 = vld [vmem:[#allocation5] sm:$0xff]
    %v106 = vld [vmem:[#allocation5 + $0x8] sm:$0xff]
    %v107 = vld [vmem:[#allocation5 + $0x20] sm:$0xff]
    %v108 = vld [vmem:[#allocation5 + $0x28] sm:$0xff]
    %v109 = vld [vmem:[#allocation5 + $0x40] sm:$0xff]
    %v110 = vld [vmem:[#allocation5 + $0x48] sm:$0xff]
    %v111 = vld [vmem:[#allocation5 + $0x60] sm:$0xff]
    %v112 = vld [vmem:[#allocation5 + $0x68] sm:$0xff]
    %vm113 = vcmask 261120
    %v115 = vsel %vm113, %v103, 0
    %v118 = vsel %vm113, %v104, 0
    %120 = vmatprep.subr.mxu0 %v106
    %121 = vmatpush1.msra.mxu0 %v105
    %122 = vmatprep.subr.mxu0 %v108
    %123 = vmatpush1.msra.mxu0 %v107
    %124 = vmatprep.subr.mxu0 %v110
    %125 = vmatpush1.msra.mxu0 %v109
    %126 = vmatprep.subr.mxu0 %v112
    %127 = vmatpush1.msra.mxu0 %v111
    %128 = vmatprep.subr.mxu0 0.0
    %129 = vmatpush1.msra.mxu0 0.0
    %130 = vmatprep.subr.mxu0 0.0
    %131 = vmatpush1.msra.mxu0 0.0
    %132 = vmatprep.subr.mxu0 0.0
    %133 = vmatpush1.msra.mxu0 0.0
    %134 = vmatprep.subr.mxu0 0.0
    %135 = vmatpush1.msra.mxu0 0.0
    %136 = vmatprep.subr.mxu0 0.0
    %137 = vmatpush1.msra.mxu0 0.0
    %138 = vmatprep.subr.mxu0 0.0
    %139 = vmatpush1.msra.mxu0 0.0
    %140 = vmatprep.subr.mxu0 0.0
    %141 = vmatpush1.msra.mxu0 0.0
    %142 = vmatprep.subr.mxu0 0.0
    %143 = vmatpush1.msra.mxu0 0.0
    %144 = vmatprep.subr.mxu0 0.0
    %145 = vmatpush1.msra.mxu0 0.0
    %146 = vmatprep.subr.mxu0 0.0
    %147 = vmatpush1.msra.mxu0 0.0
    %148 = vmatprep.subr.mxu0 0.0
    %149 = vmatpush1.msra.mxu0 0.0
    %150 = vmatprep.subr.mxu0 0.0
    %151 = vmatpush1.msra.mxu0 0.0
    %152 = vmatprep.subr.mxu0 0.0
    %153 = vmatpush1.msra.mxu0 0.0
    %154 = vmatprep.subr.mxu0 0.0
    %155 = vmatpush1.msra.mxu0 0.0
    %156 = vmatprep.subr.mxu0 0.0
    %157 = vmatpush1.msra.mxu0 0.0
    %158 = vmatprep.subr.mxu0 0.0
    %159 = vmatpush1.msra.mxu0 0.0
    %160 = vmatprep.subr.mxu0 0.0
    %161 = vmatpush1.msra.mxu0 0.0
    %162 = vmatprep.subr.mxu0 0.0
    %163 = vmatpush1.msra.mxu0 0.0
    %164 = vmatprep.subr.mxu0 0.0
    %165 = vmatpush1.msra.mxu0 0.0
    %166 = vmatprep.subr.mxu0 0.0
    %167 = vmatpush1.msra.mxu0 0.0
    %168 = vmatprep.subr.mxu0 0.0
    %169 = vmatpush1.msra.mxu0 0.0
    %170 = vmatprep.subr.mxu0 0.0
    %171 = vmatpush1.msra.mxu0 0.0
    %172 = vmatprep.subr.mxu0 0.0
    %173 = vmatpush1.msra.mxu0 0.0
    %174 = vmatprep.subr.mxu0 0.0
    %175 = vmatpush1.msra.mxu0 0.0
    %176 = vmatprep.subr.mxu0 0.0
    %177 = vmatpush1.msra.mxu0 0.0
    %178 = vmatprep.subr.mxu0 0.0
    %179 = vmatpush1.msra.mxu0 0.0
    %180 = vmatprep.subr.mxu0 0.0
    %181 = vmatpush1.msra.mxu0 0.0
    %182 = vmatprep.subr.mxu0 0.0
    %183 = vmatpush1.msra.mxu0 0.0
    %184 = vmatprep.mubr.f32.mxu0 0.0
    %185 = vmatmul.mubr.f32.gmra.mrb[0].mxu0 %v115
    %v186 = vpop.f32.mrb[0].mxu0
    %v187 = vadd.f32 0.0, %v186
    %v188 = vpop.f32.mrb[0].mxu0
    %v189 = vadd.f32 0.0, %v188
    %190 = vmatprep.mubr.f32.mxu0 0.0
    %191 = vmatmul.mubr.f32.gmra.mrb[0].mxu0 %v118
    %v192 = vpop.f32.mrb[0].mxu0
    %v193 = vadd.f32 0.0, %v192
    %v194 = vpop.f32.mrb[0].mxu0
    %v195 = vadd.f32 0.0, %v194
    %196 = vdwg.mxu0
    %198 = vrot.lane.b32.xlu0 %v98, 32
    %v199 = vpop.permute.xlu0 %198
    %v201 = vadd.f32 %v189, %v199
    %v202 = vadd.f32 %v195, %v199
    %vm203 = vcmp.gt.f32.partialorder %v201, 20.0
    %vm204 = vcmp.gt.f32.partialorder %v202, 20.0
    %v205 = vmin.f32 %v201, 20.0
    %v206 = vmin.f32 %v202, 20.0
    %v207 = vmul.f32 %v205, 1.442695
    %v208 = vpow.pop %v207
    %v209 = vmul.f32 %v206, 1.442695
    %v210 = vpow.pop %v209
    %v211 = vadd.f32 %v208, 1.0
    %v212 = vadd.f32 %v210, 1.0
    %v213 = vlog2.pop %v211
    %v214 = vmul.f32 %v213, 0.6931472
    %v215 = vlog2.pop %v212
    %v216 = vmul.f32 %v215, 0.6931472
    %v217 = vsel %vm203, %v201, %v214
    %v218 = vsel %vm204, %v202, %v216
    %220 = vrot.lane.b32.xlu0 %v99, 32
    %v221 = vpop.permute.xlu0 %220
    %v223 = vmul.f32 %v217, %v221
    %v224 = vmul.f32 %v218, %v221
    %v225 = vlaneseq
    %v226 = vshrl.u32 %v225, 7
    %v227 = vsub.s32 3, %v226
    %v228 = vrot.slane %v94, %v227
    %230 = vrot.lane.b32.xlu0 %v228, 64
    %v231 = vpop.permute.xlu0 %230
    %v233 = vmul.f32 %v187, %v231
    %v234 = vmul.f32 %v189, %v231
    %v235 = vmul.f32 %v193, %v231
    %v236 = vmul.f32 %v195, %v231
    %241 = vrot.lane.b32.xlu0 %v187, 64
    %v242 = vpop.permute.xlu0 %241
    %243 = vrot.lane.b32.xlu0 %v189, 64
    %v244 = vpop.permute.xlu0 %243
    %245 = vrot.lane.b32.xlu0 %v193, 64
    %v246 = vpop.permute.xlu0 %245
    %247 = vrot.lane.b32.xlu0 %v195, 64
    %v248 = vpop.permute.xlu0 %247
    %vm249 = vcmask 523264
    %v250 = vsel %vm249, %v242, %v244
    %v251 = vsel %vm249, %v246, %v248
    %v254 = vrot.slane %v250, 7
    %v255 = vrot.slane %v251, 7
    %v256 = vlaneseq
    %v257 = vshrl.u32 %v256, 7
    %vm258 = vcmp.lt.s32.totalorder %v257, 1
    %v259 = vsel %vm258, %v254, %v255
    %v260 = vsel %vm258, %v255, %v254
    %262 = vset.pattern.permute.xlu0 1
    %263 = vperm.xlu0 %262, %v91
    %v264 = vpop.permute.xlu0 %263
    %267 = vset.pattern.permute.xlu0 1
    %268 = vperm.xlu0 %267, %v92
    %v269 = vpop.permute.xlu0 %268
    %v271 = vmul.f32 %v260, %v264
    %v272 = vmul.f32 %v259, %v269
    %v273 = vlaneseq
    %v274 = vshrl.u32 %v273, 7
    %v275 = vsub.s32 2, %v274
    %v276 = vrot.slane %v94, %v275
    %v277 = vmul.f32 %v271, %v276
    %v278 = vmul.f32 %v272, %v276
    %281 = vrot.lane.b32.xlu0 %v277, 64
    %v282 = vpop.permute.xlu0 %281
    %283 = vrot.lane.b32.xlu0 %v278, 64
    %v284 = vpop.permute.xlu0 %283
    %v287 = vadd.f32 %v233, %v282
    %v288 = vadd.f32 %v234, %v282
    %v289 = vadd.f32 %v235, %v284
    %v290 = vadd.f32 %v236, %v284
    %v291 = vrot.slane %v250, 6
    %v292 = vrot.slane %v251, 6
    %vm293 = vcmp.lt.s32.totalorder %v257, 2
    %v294 = vsel %vm293, %v291, %v292
    %v295 = vsel %vm293, %v292, %v291
    %296 = vset.pattern.permute.xlu0 2
    %297 = vperm.xlu0 %296, %v91
    %v298 = vpop.permute.xlu0 %297
    %300 = vset.pattern.permute.xlu0 2
    %301 = vperm.xlu0 %300, %v92
    %v302 = vpop.permute.xlu0 %301
    %v304 = vmul.f32 %v295, %v298
    %v305 = vmul.f32 %v294, %v302
    %v306 = vlaneseq
    %v307 = vshrl.u32 %v306, 7
    %v308 = vsub.s32 1, %v307
    %v309 = vrot.slane %v94, %v308
    %v310 = vmul.f32 %v304, %v309
    %v311 = vmul.f32 %v305, %v309
    %314 = vrot.lane.b32.xlu0 %v310, 64
    %v315 = vpop.permute.xlu0 %314
    %316 = vrot.lane.b32.xlu0 %v311, 64
    %v317 = vpop.permute.xlu0 %316
    %v320 = vadd.f32 %v287, %v315
    %v321 = vadd.f32 %v288, %v315
    %v322 = vadd.f32 %v289, %v317
    %v323 = vadd.f32 %v290, %v317
    %v324 = vrot.slane %v250, 5
    %v325 = vrot.slane %v251, 5
    %vm326 = vcmp.lt.s32.totalorder %v257, 3
    %v327 = vsel %vm326, %v324, %v325
    %v328 = vsel %vm326, %v325, %v324
    %329 = vset.pattern.permute.xlu0 3
    %330 = vperm.xlu0 %329, %v91
    %v331 = vpop.permute.xlu0 %330
    %333 = vset.pattern.permute.xlu0 3
    %334 = vperm.xlu0 %333, %v92
    %v335 = vpop.permute.xlu0 %334
    %v337 = vmul.f32 %v328, %v331
    %v338 = vmul.f32 %v327, %v335
    %v339 = vlaneseq
    %v340 = vshrl.u32 %v339, 7
    %v341 = vsub.s32 0, %v340
    %v342 = vrot.slane %v94, %v341
    %v343 = vmul.f32 %v337, %v342
    %v344 = vmul.f32 %v338, %v342
    %347 = vrot.lane.b32.xlu0 %v343, 64
    %v348 = vpop.permute.xlu0 %347
    %349 = vrot.lane.b32.xlu0 %v344, 64
    %v350 = vpop.permute.xlu0 %349
    %v353 = vadd.f32 %v320, %v348
    %v354 = vadd.f32 %v321, %v348
    %v355 = vadd.f32 %v322, %v350
    %v356 = vadd.f32 %v323, %v350
    %358 = vrot.lane.b32.xlu0 %v95, 64
    %v359 = vpop.permute.xlu0 %358
    %v361 = vadd.f32 %v353, %v359
    %v362 = vadd.f32 %v354, %v359
    %v363 = vadd.f32 %v355, %v359
    %v364 = vadd.f32 %v356, %v359
    %v365 = vsub.f32 0.0, %v361
    %v366 = vsub.f32 0.0, %v362
    %v367 = vsub.f32 0.0, %v363
    %v368 = vsub.f32 0.0, %v364
    %v369 = vmul.f32 %v365, 1.442695
    %v370 = vpow.pop %v369
    %v371 = vmul.f32 %v366, 1.442695
    %v372 = vpow.pop %v371
    %v373 = vmul.f32 %v367, 1.442695
    %v374 = vpow.pop %v373
    %v375 = vmul.f32 %v368, 1.442695
    %v376 = vpow.pop %v375
    %v377 = vadd.f32 %v370, 1.0
    %v378 = vadd.f32 %v372, 1.0
    %v379 = vadd.f32 %v374, 1.0
    %v380 = vadd.f32 %v376, 1.0
    %v381 = vrcp.pop %v377
    %v382 = vrcp.pop %v378
    %v383 = vrcp.pop %v379
    %v384 = vrcp.pop %v380
    %v385 = vmul.f32 %v361, %v381
    %v386 = vmul.f32 %v362, %v382
    %v387 = vmul.f32 %v363, %v383
    %v388 = vmul.f32 %v364, %v384
    %391 = vrot.lane.b32.xlu0 %v223, 96
    %v392 = vpop.permute.xlu0 %391
    %393 = vrot.lane.b32.xlu0 %v224, 96
    %v394 = vpop.permute.xlu0 %393
    %vm397 = vcmask 130048
    %v399 = vsel %vm397, %v87, 0
    %v402 = vsel %vm397, %v88, 0
    %404 = vmatprep.subr.mxu0 0.0
    %405 = vmatpush1.msra.mxu0 %v392
    %406 = vmatprep.subr.mxu0 0.0
    %407 = vmatpush1.msra.mxu0 %v394
    %408 = vmatprep.subr.mxu0 0.0
    %409 = vmatpush1.msra.mxu0 0.0
    %410 = vmatprep.subr.mxu0 0.0
    %411 = vmatpush1.msra.mxu0 0.0
    %412 = vmatprep.subr.mxu0 0.0
    %413 = vmatpush1.msra.mxu0 0.0
    %414 = vmatprep.subr.mxu0 0.0
    %415 = vmatpush1.msra.mxu0 0.0
    %416 = vmatprep.subr.mxu0 0.0
    %417 = vmatpush1.msra.mxu0 0.0
    %418 = vmatprep.subr.mxu0 0.0
    %419 = vmatpush1.msra.mxu0 0.0
    %420 = vmatprep.subr.mxu0 0.0
    %421 = vmatpush1.msra.mxu0 0.0
    %422 = vmatprep.subr.mxu0 0.0
    %423 = vmatpush1.msra.mxu0 0.0
    %424 = vmatprep.subr.mxu0 0.0
    %425 = vmatpush1.msra.mxu0 0.0
    %426 = vmatprep.subr.mxu0 0.0
    %427 = vmatpush1.msra.mxu0 0.0
    %428 = vmatprep.subr.mxu0 0.0
    %429 = vmatpush1.msra.mxu0 0.0
    %430 = vmatprep.subr.mxu0 0.0
    %431 = vmatpush1.msra.mxu0 0.0
    %432 = vmatprep.subr.mxu0 0.0
    %433 = vmatpush1.msra.mxu0 0.0
    %434 = vmatprep.subr.mxu0 0.0
    %435 = vmatpush1.msra.mxu0 0.0
    %436 = vmatprep.subr.mxu0 0.0
    %437 = vmatpush1.msra.mxu0 0.0
    %438 = vmatprep.subr.mxu0 0.0
    %439 = vmatpush1.msra.mxu0 0.0
    %440 = vmatprep.subr.mxu0 0.0
    %441 = vmatpush1.msra.mxu0 0.0
    %442 = vmatprep.subr.mxu0 0.0
    %443 = vmatpush1.msra.mxu0 0.0
    %444 = vmatprep.subr.mxu0 0.0
    %445 = vmatpush1.msra.mxu0 0.0
    %446 = vmatprep.subr.mxu0 0.0
    %447 = vmatpush1.msra.mxu0 0.0
    %448 = vmatprep.subr.mxu0 0.0
    %449 = vmatpush1.msra.mxu0 0.0
    %450 = vmatprep.subr.mxu0 0.0
    %451 = vmatpush1.msra.mxu0 0.0
    %452 = vmatprep.subr.mxu0 0.0
    %453 = vmatpush1.msra.mxu0 0.0
    %454 = vmatprep.subr.mxu0 0.0
    %455 = vmatpush1.msra.mxu0 0.0
    %456 = vmatprep.subr.mxu0 0.0
    %457 = vmatpush1.msra.mxu0 0.0
    %458 = vmatprep.subr.mxu0 0.0
    %459 = vmatpush1.msra.mxu0 0.0
    %460 = vmatprep.subr.mxu0 0.0
    %461 = vmatpush1.msra.mxu0 0.0
    %462 = vmatprep.subr.mxu0 0.0
    %463 = vmatpush1.msra.mxu0 0.0
    %464 = vmatprep.subr.mxu0 0.0
    %465 = vmatpush1.msra.mxu0 0.0
    %466 = vmatprep.subr.mxu0 0.0
    %467 = vmatpush1.msra.mxu0 0.0
    %468 = vmatprep.mubr.f32.mxu0 0.0
    %469 = vmatmul.mubr.f32.gmra.mrb[0].mxu0 %v399
    %v470 = vpop.f32.mrb[0].mxu0
    %v471 = vadd.f32 0.0, %v470
    %v472 = vpop.f32.mrb[0].mxu0
    %473 = vmatprep.mubr.f32.mxu0 0.0
    %474 = vmatmul.mubr.f32.gmra.mrb[0].mxu0 %v402
    %v475 = vpop.f32.mrb[0].mxu0
    %v476 = vadd.f32 0.0, %v475
    %v477 = vpop.f32.mrb[0].mxu0
    %478 = vdwg.mxu0
    %479 = vxpose.xlu0.b32.start [1/16] %v392, 128
    %480 = vxpose.xlu0.b32.cont [2/16] %v394, 128
    %481 = vxpose.xlu0.b32.cont [3/16] 0.0, 128
    %482 = vxpose.xlu0.b32.cont [4/16] 0.0, 128
    %483 = vxpose.xlu0.b32.cont [5/16] 0.0, 128
    %484 = vxpose.xlu0.b32.cont [6/16] 0.0, 128
    %485 = vxpose.xlu0.b32.cont [7/16] 0.0, 128
    %486 = vxpose.xlu0.b32.cont [8/16] 0.0, 128
    %487 = vxpose.xlu0.b32.cont [9/16] 0.0, 128
    %488 = vxpose.xlu0.b32.cont [10/16] 0.0, 128
    %489 = vxpose.xlu0.b32.cont [11/16] 0.0, 128
    %490 = vxpose.xlu0.b32.cont [12/16] 0.0, 128
    %491 = vxpose.xlu0.b32.cont [13/16] 0.0, 128
    %492 = vxpose.xlu0.b32.cont [14/16] 0.0, 128
    %493 = vxpose.xlu0.b32.cont [15/16] 0.0, 128
    %494 = vxpose.xlu0.b32.end [16/16] 0.0, 128
    %v495 = vpop.trf.xlu0
    %v496 = vpop.trf.xlu0
    %v497 = vpop.trf.xlu0
    %v498 = vpop.trf.xlu0
    %v499 = vpop.trf.xlu0
    %v500 = vpop.trf.xlu0
    %v501 = vpop.trf.xlu0
    %v502 = vpop.trf.xlu0
    %v503 = vpop.trf.xlu0
    %v504 = vpop.trf.xlu0
    %v505 = vpop.trf.xlu0
    %v506 = vpop.trf.xlu0
    %v507 = vpop.trf.xlu0
    %v508 = vpop.trf.xlu0
    %v509 = vpop.trf.xlu0
    %v510 = vpop.trf.xlu0
    %v512 = vsel %vm397, %v495, 0
    %514 = vmatprep.subr.mxu0 0.0
    %515 = vmatpush1.msra.mxu0 %v89
    %516 = vmatprep.subr.mxu0 0.0
    %517 = vmatpush1.msra.mxu0 %v90
    %518 = vmatprep.subr.mxu0 0.0
    %519 = vmatpush1.msra.mxu0 0.0
    %520 = vmatprep.subr.mxu0 0.0
    %521 = vmatpush1.msra.mxu0 0.0
    %522 = vmatprep.subr.mxu0 0.0
    %523 = vmatpush1.msra.mxu0 0.0
    %524 = vmatprep.subr.mxu0 0.0
    %525 = vmatpush1.msra.mxu0 0.0
    %526 = vmatprep.subr.mxu0 0.0
    %527 = vmatpush1.msra.mxu0 0.0
    %528 = vmatprep.subr.mxu0 0.0
    %529 = vmatpush1.msra.mxu0 0.0
    %530 = vmatprep.subr.mxu0 0.0
    %531 = vmatpush1.msra.mxu0 0.0
    %532 = vmatprep.subr.mxu0 0.0
    %533 = vmatpush1.msra.mxu0 0.0
    %534 = vmatprep.subr.mxu0 0.0
    %535 = vmatpush1.msra.mxu0 0.0
    %536 = vmatprep.subr.mxu0 0.0
    %537 = vmatpush1.msra.mxu0 0.0
    %538 = vmatprep.subr.mxu0 0.0
    %539 = vmatpush1.msra.mxu0 0.0
    %540 = vmatprep.subr.mxu0 0.0
    %541 = vmatpush1.msra.mxu0 0.0
    %542 = vmatprep.subr.mxu0 0.0
    %543 = vmatpush1.msra.mxu0 0.0
    %544 = vmatprep.subr.mxu0 0.0
    %545 = vmatpush1.msra.mxu0 0.0
    %546 = vmatprep.subr.mxu0 0.0
    %547 = vmatpush1.msra.mxu0 0.0
    %548 = vmatprep.subr.mxu0 0.0
    %549 = vmatpush1.msra.mxu0 0.0
    %550 = vmatprep.subr.mxu0 0.0
    %551 = vmatpush1.msra.mxu0 0.0
    %552 = vmatprep.subr.mxu0 0.0
    %553 = vmatpush1.msra.mxu0 0.0
    %554 = vmatprep.subr.mxu0 0.0
    %555 = vmatpush1.msra.mxu0 0.0
    %556 = vmatprep.subr.mxu0 0.0
    %557 = vmatpush1.msra.mxu0 0.0
    %558 = vmatprep.subr.mxu0 0.0
    %559 = vmatpush1.msra.mxu0 0.0
    %560 = vmatprep.subr.mxu0 0.0
    %561 = vmatpush1.msra.mxu0 0.0
    %562 = vmatprep.subr.mxu0 0.0
    %563 = vmatpush1.msra.mxu0 0.0
    %564 = vmatprep.subr.mxu0 0.0
    %565 = vmatpush1.msra.mxu0 0.0
    %566 = vmatprep.subr.mxu0 0.0
    %567 = vmatpush1.msra.mxu0 0.0
    %568 = vmatprep.subr.mxu0 0.0
    %569 = vmatpush1.msra.mxu0 0.0
    %570 = vmatprep.subr.mxu0 0.0
    %571 = vmatpush1.msra.mxu0 0.0
    %572 = vmatprep.subr.mxu0 0.0
    %573 = vmatpush1.msra.mxu0 0.0
    %574 = vmatprep.subr.mxu0 0.0
    %575 = vmatpush1.msra.mxu0 0.0
    %576 = vmatprep.subr.mxu0 0.0
    %577 = vmatpush1.msra.mxu0 0.0
    %578 = vmatprep.mubr.f32.mxu0 0.0
    %579 = vmatmul.mubr.f32.gmra.mrb[0].mxu0 %v512
    %v580 = vpop.f32.mrb[0].mxu0
    %v581 = vadd.f32 0.0, %v580
    %v582 = vpop.f32.mrb[0].mxu0
    %583 = vdwg.mxu0
    %586 = vrot.lane.b32.xlu0 %v386, 112
    %v587 = vpop.permute.xlu0 %586
    %588 = vrot.lane.b32.xlu0 %v388, 112
    %v589 = vpop.permute.xlu0 %588
    %v590 = vsel %vm397, %v587, 0
    %v592 = vsel %vm397, %v589, 0
    %v594 = vsel %vm397, %v386, 0
    %v596 = vsel %vm397, %v388, 0
    %598 = vmatprep.subr.mxu0 0.0
    %599 = vmatpush1.xpose.msra.mxu0 %v594
    %600 = vmatprep.subr.mxu0 0.0
    %601 = vmatpush1.xpose.msra.mxu0 %v596
    %602 = vmatprep.subr.mxu0 0.0
    %603 = vmatpush1.xpose.msra.mxu0 0.0
    %604 = vmatprep.subr.mxu0 0.0
    %605 = vmatpush1.xpose.msra.mxu0 0.0
    %606 = vmatprep.subr.mxu0 0.0
    %607 = vmatpush1.xpose.msra.mxu0 0.0
    %608 = vmatprep.subr.mxu0 0.0
    %609 = vmatpush1.xpose.msra.mxu0 0.0
    %610 = vmatprep.subr.mxu0 0.0
    %611 = vmatpush1.xpose.msra.mxu0 0.0
    %612 = vmatprep.subr.mxu0 0.0
    %613 = vmatpush1.xpose.msra.mxu0 0.0
    %614 = vmatprep.subr.mxu0 0.0
    %615 = vmatpush1.xpose.msra.mxu0 0.0
    %616 = vmatprep.subr.mxu0 0.0
    %617 = vmatpush1.xpose.msra.mxu0 0.0
    %618 = vmatprep.subr.mxu0 0.0
    %619 = vmatpush1.xpose.msra.mxu0 0.0
    %620 = vmatprep.subr.mxu0 0.0
    %621 = vmatpush1.xpose.msra.mxu0 0.0
    %622 = vmatprep.subr.mxu0 0.0
    %623 = vmatpush1.xpose.msra.mxu0 0.0
    %624 = vmatprep.subr.mxu0 0.0
    %625 = vmatpush1.xpose.msra.mxu0 0.0
    %626 = vmatprep.subr.mxu0 0.0
    %627 = vmatpush1.xpose.msra.mxu0 0.0
    %628 = vmatprep.subr.mxu0 0.0
    %629 = vmatpush1.xpose.msra.mxu0 0.0
    %630 = vmatprep.subr.mxu0 0.0
    %631 = vmatpush1.xpose.msra.mxu0 0.0
    %632 = vmatprep.subr.mxu0 0.0
    %633 = vmatpush1.xpose.msra.mxu0 0.0
    %634 = vmatprep.subr.mxu0 0.0
    %635 = vmatpush1.xpose.msra.mxu0 0.0
    %636 = vmatprep.subr.mxu0 0.0
    %637 = vmatpush1.xpose.msra.mxu0 0.0
    %638 = vmatprep.subr.mxu0 0.0
    %639 = vmatpush1.xpose.msra.mxu0 0.0
    %640 = vmatprep.subr.mxu0 0.0
    %641 = vmatpush1.xpose.msra.mxu0 0.0
    %642 = vmatprep.subr.mxu0 0.0
    %643 = vmatpush1.xpose.msra.mxu0 0.0
    %644 = vmatprep.subr.mxu0 0.0
    %645 = vmatpush1.xpose.msra.mxu0 0.0
    %646 = vmatprep.subr.mxu0 0.0
    %647 = vmatpush1.xpose.msra.mxu0 0.0
    %648 = vmatprep.subr.mxu0 0.0
    %649 = vmatpush1.xpose.msra.mxu0 0.0
    %650 = vmatprep.subr.mxu0 0.0
    %651 = vmatpush1.xpose.msra.mxu0 0.0
    %652 = vmatprep.subr.mxu0 0.0
    %653 = vmatpush1.xpose.msra.mxu0 0.0
    %654 = vmatprep.subr.mxu0 0.0
    %655 = vmatpush1.xpose.msra.mxu0 0.0
    %656 = vmatprep.subr.mxu0 0.0
    %657 = vmatpush1.xpose.msra.mxu0 0.0
    %658 = vmatprep.subr.mxu0 0.0
    %659 = vmatpush1.xpose.msra.mxu0 0.0
    %660 = vmatprep.subr.mxu0 0.0
    %661 = vmatpush1.xpose.msra.mxu0 0.0
    %662 = vmatprep.mubr.f32.mxu0 0.0
    %663 = vmatmul.mubr.f32.gmra.mrb[0].mxu0 %v590
    %v664 = vpop.f32.mrb[0].mxu0
    %v665 = vadd.f32 0.0, %v664
    %v666 = vpop.f32.mrb[0].mxu0
    %667 = vmatprep.mubr.f32.mxu0 0.0
    %668 = vmatmul.mubr.f32.gmra.mrb[0].mxu0 %v592
    %v669 = vpop.f32.mrb[0].mxu0
    %v670 = vadd.f32 0.0, %v669
    %v671 = vpop.f32.mrb[0].mxu0
    %672 = vdwg.mxu0
    %v673 = vmul.f32 %v665, %v87
    %v674 = vmul.f32 %v670, %v88
    %677 = vrot.lane.b32.xlu0 %v217, 96
    %v678 = vpop.permute.xlu0 %677
    %679 = vrot.lane.b32.xlu0 %v218, 96
    %v680 = vpop.permute.xlu0 %679
    %vm681 = vcmask 31744
    %v682 = vsel %vm681, %v678, 0
    %v684 = vsel %vm681, %v680, 0
    %vm686 = vcmask 1043456
    %v688 = vsel %vm686, %v93, 0
    %690 = vmatprep.subr.mxu0 0.0
    %691 = vmatpush1.msra.mxu0 %v688
    %692 = vmatprep.subr.mxu0 0.0
    %693 = vmatpush1.msra.mxu0 0.0
    %694 = vmatprep.subr.mxu0 0.0
    %695 = vmatpush1.msra.mxu0 0.0
    %696 = vmatprep.subr.mxu0 0.0
    %697 = vmatpush1.msra.mxu0 0.0
    %698 = vmatprep.subr.mxu0 0.0
    %699 = vmatpush1.msra.mxu0 0.0
    %700 = vmatprep.subr.mxu0 0.0
    %701 = vmatpush1.msra.mxu0 0.0
    %702 = vmatprep.subr.mxu0 0.0
    %703 = vmatpush1.msra.mxu0 0.0
    %704 = vmatprep.subr.mxu0 0.0
    %705 = vmatpush1.msra.mxu0 0.0
    %706 = vmatprep.subr.mxu0 0.0
    %707 = vmatpush1.msra.mxu0 0.0
    %708 = vmatprep.subr.mxu0 0.0
    %709 = vmatpush1.msra.mxu0 0.0
    %710 = vmatprep.subr.mxu0 0.0
    %711 = vmatpush1.msra.mxu0 0.0
    %712 = vmatprep.subr.mxu0 0.0
    %713 = vmatpush1.msra.mxu0 0.0
    %714 = vmatprep.subr.mxu0 0.0
    %715 = vmatpush1.msra.mxu0 0.0
    %716 = vmatprep.subr.mxu0 0.0
    %717 = vmatpush1.msra.mxu0 0.0
    %718 = vmatprep.subr.mxu0 0.0
    %719 = vmatpush1.msra.mxu0 0.0
    %720 = vmatprep.subr.mxu0 0.0
    %721 = vmatpush1.msra.mxu0 0.0
    %722 = vmatprep.subr.mxu0 0.0
    %723 = vmatpush1.msra.mxu0 0.0
    %724 = vmatprep.subr.mxu0 0.0
    %725 = vmatpush1.msra.mxu0 0.0
    %726 = vmatprep.subr.mxu0 0.0
    %727 = vmatpush1.msra.mxu0 0.0
    %728 = vmatprep.subr.mxu0 0.0
    %729 = vmatpush1.msra.mxu0 0.0
    %730 = vmatprep.subr.mxu0 0.0
    %731 = vmatpush1.msra.mxu0 0.0
    %732 = vmatprep.subr.mxu0 0.0
    %733 = vmatpush1.msra.mxu0 0.0
    %734 = vmatprep.subr.mxu0 0.0
    %735 = vmatpush1.msra.mxu0 0.0
    %736 = vmatprep.subr.mxu0 0.0
    %737 = vmatpush1.msra.mxu0 0.0
    %738 = vmatprep.subr.mxu0 0.0
    %739 = vmatpush1.msra.mxu0 0.0
    %740 = vmatprep.subr.mxu0 0.0
    %741 = vmatpush1.msra.mxu0 0.0
    %742 = vmatprep.subr.mxu0 0.0
    %743 = vmatpush1.msra.mxu0 0.0
    %744 = vmatprep.subr.mxu0 0.0
    %745 = vmatpush1.msra.mxu0 0.0
    %746 = vmatprep.subr.mxu0 0.0
    %747 = vmatpush1.msra.mxu0 0.0
    %748 = vmatprep.subr.mxu0 0.0
    %749 = vmatpush1.msra.mxu0 0.0
    %750 = vmatprep.subr.mxu0 0.0
    %751 = vmatpush1.msra.mxu0 0.0
    %752 = vmatprep.subr.mxu0 0.0
    %753 = vmatpush1.msra.mxu0 0.0
    %754 = vmatprep.mubr.f32.mxu0 0.0
    %755 = vmatmul.mubr.f32.gmra.mrb[0].mxu0 %v682
    %v756 = vpop.f32.mrb[0].mxu0
    %v757 = vadd.f32 0.0, %v756
    %v758 = vpop.f32.mrb[0].mxu0
    %759 = vmatprep.mubr.f32.mxu0 0.0
    %760 = vmatmul.mubr.f32.gmra.mrb[0].mxu0 %v684
    %v761 = vpop.f32.mrb[0].mxu0
    %v762 = vadd.f32 0.0, %v761
    %v763 = vpop.f32.mrb[0].mxu0
    %764 = vdwg.mxu0
    %767 = vrot.lane.b32.xlu0 %v757, 64
    %v768 = vpop.permute.xlu0 %767
    %769 = vrot.lane.b32.xlu0 %v762, 64
    %v770 = vpop.permute.xlu0 %769
    %v773 = vmul.f32 %v385, %v768
    %v774 = vmul.f32 %v387, %v770
    %776 = vset.pattern.permute.xlu0 0
    %777 = vperm.xlu0 %776, %v471
    %v778 = vpop.permute.xlu0 %777
    %781 = vset.pattern.permute.xlu0 0
    %782 = vperm.xlu0 %781, %v476
    %v783 = vpop.permute.xlu0 %782
    %v785 = vlaneseq
    %v786 = vshrl.u32 %v785, 7
    %v787 = vsub.s32 0, %v786
    %v788 = vrot.slane %v581, %v787
    %v789 = vsub.f32 %v778, %v788
    %v790 = vsub.f32 %v783, %v788
    %v791 = vmin.f32 %v789, 0.0
    %v792 = vmin.f32 %v790, 0.0
    %v793 = vmul.f32 %v791, 1.442695
    %v794 = vpow.pop %v793
    %v795 = vmul.f32 %v792, 1.442695
    %v796 = vpow.pop %v795
    %v797 = vmul.f32 %v673, %v794
    %v798 = vmul.f32 %v674, %v796
    %799 = vset.pattern.permute.xlu0 1
    %800 = vperm.xlu0 %799, %v471
    %v801 = vpop.permute.xlu0 %800
    %803 = vset.pattern.permute.xlu0 1
    %804 = vperm.xlu0 %803, %v476
    %v805 = vpop.permute.xlu0 %804
    %v807 = vlaneseq
    %v808 = vshrl.u32 %v807, 7
    %v809 = vsub.s32 1, %v808
    %v810 = vrot.slane %v581, %v809
    %v811 = vsub.f32 %v801, %v810
    %v812 = vsub.f32 %v805, %v810
    %v813 = vmin.f32 %v811, 0.0
    %v814 = vmin.f32 %v812, 0.0
    %v815 = vmul.f32 %v813, 1.442695
    %v816 = vpow.pop %v815
    %v817 = vmul.f32 %v814, 1.442695
    %v818 = vpow.pop %v817
    %v819 = vmul.f32 %v673, %v816
    %v820 = vmul.f32 %v674, %v818
    %821 = vset.pattern.permute.xlu0 2
    %822 = vperm.xlu0 %821, %v471
    %v823 = vpop.permute.xlu0 %822
    %825 = vset.pattern.permute.xlu0 2
    %826 = vperm.xlu0 %825, %v476
    %v827 = vpop.permute.xlu0 %826
    %v829 = vlaneseq
    %v830 = vshrl.u32 %v829, 7
    %v831 = vsub.s32 2, %v830
    %v832 = vrot.slane %v581, %v831
    %v833 = vsub.f32 %v823, %v832
    %v834 = vsub.f32 %v827, %v832
    %v835 = vmin.f32 %v833, 0.0
    %v836 = vmin.f32 %v834, 0.0
    %v837 = vmul.f32 %v835, 1.442695
    %v838 = vpow.pop %v837
    %v839 = vmul.f32 %v836, 1.442695
    %v840 = vpow.pop %v839
    %v841 = vmul.f32 %v673, %v838
    %v842 = vmul.f32 %v674, %v840
    %843 = vset.pattern.permute.xlu0 3
    %844 = vperm.xlu0 %843, %v471
    %v845 = vpop.permute.xlu0 %844
    %847 = vset.pattern.permute.xlu0 3
    %848 = vperm.xlu0 %847, %v476
    %v849 = vpop.permute.xlu0 %848
    %v851 = vlaneseq
    %v852 = vshrl.u32 %v851, 7
    %v853 = vsub.s32 3, %v852
    %v854 = vrot.slane %v581, %v853
    %v855 = vsub.f32 %v845, %v854
    %v856 = vsub.f32 %v849, %v854
    %v857 = vmin.f32 %v855, 0.0
    %v858 = vmin.f32 %v856, 0.0
    %v859 = vmul.f32 %v857, 1.442695
    %v860 = vpow.pop %v859
    %v861 = vmul.f32 %v858, 1.442695
    %v862 = vpow.pop %v861
    %v863 = vmul.f32 %v673, %v860
    %v864 = vmul.f32 %v674, %v862
    %867 = vrot.lane.b32.xlu0 %v773, 64
    %v868 = vpop.permute.xlu0 %867
    %869 = vrot.lane.b32.xlu0 %v774, 64
    %v870 = vpop.permute.xlu0 %869
    %v874 = vsel %vm397, %v797, 0
    %v877 = vsel %vm397, %v798, 0
    %v880 = vsel %vm397, %v819, 0
    %v883 = vsel %vm397, %v820, 0
    %v886 = vsel %vm397, %v841, 0
    %v889 = vsel %vm397, %v842, 0
    %v892 = vsel %vm397, %v863, 0
    %v895 = vsel %vm397, %v864, 0
    %897 = vmatprep.subr.mxu0 0.0
    %898 = vmatpush1.msra.mxu0 %v868
    %899 = vmatprep.subr.mxu0 0.0
    %900 = vmatpush1.msra.mxu0 %v870
    %901 = vmatprep.subr.mxu0 0.0
    %902 = vmatpush1.msra.mxu0 0.0
    %903 = vmatprep.subr.mxu0 0.0
    %904 = vmatpush1.msra.mxu0 0.0
    %905 = vmatprep.subr.mxu0 0.0
    %906 = vmatpush1.msra.mxu0 0.0
    %907 = vmatprep.subr.mxu0 0.0
    %908 = vmatpush1.msra.mxu0 0.0
    %909 = vmatprep.subr.mxu0 0.0
    %910 = vmatpush1.msra.mxu0 0.0
    %911 = vmatprep.subr.mxu0 0.0
    %912 = vmatpush1.msra.mxu0 0.0
    %913 = vmatprep.subr.mxu0 0.0
    %914 = vmatpush1.msra.mxu0 0.0
    %915 = vmatprep.subr.mxu0 0.0
    %916 = vmatpush1.msra.mxu0 0.0
    %917 = vmatprep.subr.mxu0 0.0
    %918 = vmatpush1.msra.mxu0 0.0
    %919 = vmatprep.subr.mxu0 0.0
    %920 = vmatpush1.msra.mxu0 0.0
    %921 = vmatprep.subr.mxu0 0.0
    %922 = vmatpush1.msra.mxu0 0.0
    %923 = vmatprep.subr.mxu0 0.0
    %924 = vmatpush1.msra.mxu0 0.0
    %925 = vmatprep.subr.mxu0 0.0
    %926 = vmatpush1.msra.mxu0 0.0
    %927 = vmatprep.subr.mxu0 0.0
    %928 = vmatpush1.msra.mxu0 0.0
    %929 = vmatprep.subr.mxu0 0.0
    %930 = vmatpush1.msra.mxu0 0.0
    %931 = vmatprep.subr.mxu0 0.0
    %932 = vmatpush1.msra.mxu0 0.0
    %933 = vmatprep.subr.mxu0 0.0
    %934 = vmatpush1.msra.mxu0 0.0
    %935 = vmatprep.subr.mxu0 0.0
    %936 = vmatpush1.msra.mxu0 0.0
    %937 = vmatprep.subr.mxu0 0.0
    %938 = vmatpush1.msra.mxu0 0.0
    %939 = vmatprep.subr.mxu0 0.0
    %940 = vmatpush1.msra.mxu0 0.0
    %941 = vmatprep.subr.mxu0 0.0
    %942 = vmatpush1.msra.mxu0 0.0
    %943 = vmatprep.subr.mxu0 0.0
    %944 = vmatpush1.msra.mxu0 0.0
    %945 = vmatprep.subr.mxu0 0.0
    %946 = vmatpush1.msra.mxu0 0.0
    %947 = vmatprep.subr.mxu0 0.0
    %948 = vmatpush1.msra.mxu0 0.0
    %949 = vmatprep.subr.mxu0 0.0
    %950 = vmatpush1.msra.mxu0 0.0
    %951 = vmatprep.subr.mxu0 0.0
    %952 = vmatpush1.msra.mxu0 0.0
    %953 = vmatprep.subr.mxu0 0.0
    %954 = vmatpush1.msra.mxu0 0.0
    %955 = vmatprep.subr.mxu0 0.0
    %956 = vmatpush1.msra.mxu0 0.0
    %957 = vmatprep.subr.mxu0 0.0
    %958 = vmatpush1.msra.mxu0 0.0
    %959 = vmatprep.subr.mxu0 0.0
    %960 = vmatpush1.msra.mxu0 0.0
    %961 = vmatprep.mubr.f32.mxu0 0.0
    %962 = vmatmul.mubr.f32.gmra.mrb[0].mxu0 %v874
    %v963 = vpop.f32.mrb[0].mxu0
    %v964 = vadd.f32 0.0, %v963
    %v965 = vpop.f32.mrb[0].mxu0
    %966 = vmatprep.mubr.f32.mxu0 0.0
    %967 = vmatmul.mubr.f32.gmra.mrb[0].mxu0 %v877
    %v968 = vpop.f32.mrb[0].mxu0
    %v969 = vadd.f32 0.0, %v968
    %v970 = vpop.f32.mrb[0].mxu0
    %971 = vmatprep.mubr.f32.mxu0 0.0
    %972 = vmatmul.mubr.f32.gmra.mrb[0].mxu0 %v880
    %v973 = vpop.f32.mrb[0].mxu0
    %v974 = vadd.f32 0.0, %v973
    %v975 = vpop.f32.mrb[0].mxu0
    %976 = vmatprep.mubr.f32.mxu0 0.0
    %977 = vmatmul.mubr.f32.gmra.mrb[0].mxu0 %v883
    %v978 = vpop.f32.mrb[0].mxu0
    %v979 = vadd.f32 0.0, %v978
    %v980 = vpop.f32.mrb[0].mxu0
    %981 = vmatprep.mubr.f32.mxu0 0.0
    %982 = vmatmul.mubr.f32.gmra.mrb[0].mxu0 %v886
    %v983 = vpop.f32.mrb[0].mxu0
    %v984 = vadd.f32 0.0, %v983
    %v985 = vpop.f32.mrb[0].mxu0
    %986 = vmatprep.mubr.f32.mxu0 0.0
    %987 = vmatmul.mubr.f32.gmra.mrb[0].mxu0 %v889
    %v988 = vpop.f32.mrb[0].mxu0
    %v989 = vadd.f32 0.0, %v988
    %v990 = vpop.f32.mrb[0].mxu0
    %991 = vmatprep.mubr.f32.mxu0 0.0
    %992 = vmatmul.mubr.f32.gmra.mrb[0].mxu0 %v892
    %v993 = vpop.f32.mrb[0].mxu0
    %v994 = vadd.f32 0.0, %v993
    %v995 = vpop.f32.mrb[0].mxu0
    %996 = vmatprep.mubr.f32.mxu0 0.0
    %997 = vmatmul.mubr.f32.gmra.mrb[0].mxu0 %v895
    %v998 = vpop.f32.mrb[0].mxu0
    %v999 = vadd.f32 0.0, %v998
    %v1000 = vpop.f32.mrb[0].mxu0
    %1001 = vdwg.mxu0
    %1003 = vrot.lane.b32.xlu0 %v100, 64
    %v1004 = vpop.permute.xlu0 %1003
    %v1006 = vmul.f32 %v385, %v1004
    %v1007 = vmul.f32 %v387, %v1004
    %v1008 = vlaneseq
    %v1009 = vshrl.u32 %v1008, 7
    %v1010 = vsub.s32 0, %v1009
    %v1011 = vrot.slane %v93, %v1010
    %v1012 = vmul.f32 %v964, %v1011
    %v1013 = vmul.f32 %v969, %v1011
    %1016 = vrot.lane.b32.xlu0 %v1012, 64
    %v1017 = vpop.permute.xlu0 %1016
    %1018 = vrot.lane.b32.xlu0 %v1013, 64
    %v1019 = vpop.permute.xlu0 %1018
    %v1022 = vadd.f32 %v1006, %v1017
    %v1023 = vadd.f32 %v1007, %v1019
    %v1024 = vlaneseq
    %v1025 = vshrl.u32 %v1024, 7
    %v1026 = vsub.s32 1, %v1025
    %v1027 = vrot.slane %v93, %v1026
    %v1028 = vmul.f32 %v974, %v1027
    %v1029 = vmul.f32 %v979, %v1027
    %1032 = vrot.lane.b32.xlu0 %v1028, 64
    %v1033 = vpop.permute.xlu0 %1032
    %1034 = vrot.lane.b32.xlu0 %v1029, 64
    %v1035 = vpop.permute.xlu0 %1034
    %v1038 = vadd.f32 %v1022, %v1033
    %v1039 = vadd.f32 %v1023, %v1035
    %v1040 = vlaneseq
    %v1041 = vshrl.u32 %v1040, 7
    %v1042 = vsub.s32 2, %v1041
    %v1043 = vrot.slane %v93, %v1042
    %v1044 = vmul.f32 %v984, %v1043
    %v1045 = vmul.f32 %v989, %v1043
    %1048 = vrot.lane.b32.xlu0 %v1044, 64
    %v1049 = vpop.permute.xlu0 %1048
    %1050 = vrot.lane.b32.xlu0 %v1045, 64
    %v1051 = vpop.permute.xlu0 %1050
    %v1054 = vadd.f32 %v1038, %v1049
    %v1055 = vadd.f32 %v1039, %v1051
    %v1056 = vlaneseq
    %v1057 = vshrl.u32 %v1056, 7
    %v1058 = vsub.s32 3, %v1057
    %v1059 = vrot.slane %v93, %v1058
    %v1060 = vmul.f32 %v994, %v1059
    %v1061 = vmul.f32 %v999, %v1059
    %1064 = vrot.lane.b32.xlu0 %v1060, 64
    %v1065 = vpop.permute.xlu0 %1064
    %1066 = vrot.lane.b32.xlu0 %v1061, 64
    %v1067 = vpop.permute.xlu0 %1066
    %v1070 = vadd.f32 %v1054, %v1065
    %v1071 = vadd.f32 %v1055, %v1067
    %v1072 = vsub.f32 0.0, %v187
    %v1073 = vsub.f32 0.0, %v193
    %v1074 = vmul.f32 %v1072, 1.442695
    %v1075 = vpow.pop %v1074
    %v1076 = vmul.f32 %v1073, 1.442695
    %v1077 = vpow.pop %v1076
    %v1078 = vadd.f32 %v1075, 1.0
    %v1079 = vadd.f32 %v1077, 1.0
    %v1080 = vrcp.pop %v1078
    %v1081 = vrcp.pop %v1079
    %v1082 = vmul.f32 %v187, %v1080
    %v1083 = vmul.f32 %v193, %v1081
    %1086 = vrot.lane.b32.xlu0 %v1082, 64
    %v1087 = vpop.permute.xlu0 %1086
    %1088 = vrot.lane.b32.xlu0 %v1083, 64
    %v1089 = vpop.permute.xlu0 %1088
    %v1092 = vmul.f32 %v1070, %v1087
    %v1093 = vmul.f32 %v1071, %v1089
    %v1094 = vmul.f32 %v1092, %v1092
    %v1095 = vmul.f32 %v1093, %v1093
    %1098 = vrot.lane.b32.xlu0 %v1094, 64
    %v1099 = vpop.permute.xlu0 %1098
    %1100 = vrot.lane.b32.xlu0 %v1095, 64
    %v1101 = vpop.permute.xlu0 %1100
    %v1104 = vsel %vm249, %v1099, 0.0
    %1105 = vadd.xlane.f32.xlu0 %v1104
    %v1106 = vpop.xlane.xlu0 %1105
    %v1107 = vsel %vm249, %v1101, 0.0
    %1108 = vadd.xlane.f32.xlu0 %v1107
    %v1109 = vpop.xlane.xlu0 %1108
    %v1110 = vrcp.pop 64.0
    %v1111 = vmul.f32 %v1106, %v1110
    %v1112 = vmul.f32 %v1109, %v1110
    %v1113 = vadd.f32 %v1111, 1e-05
    %v1114 = vadd.f32 %v1112, 1e-05
    %v1115 = vrsqrt.pop %v1113
    %v1116 = vrsqrt.pop %v1114
    %v1117 = vmul.f32 %v1092, %v1115
    %v1118 = vmul.f32 %v1093, %v1116
    %1120 = vrot.lane.b32.xlu0 %v101, 64
    %v1121 = vpop.permute.xlu0 %1120
    %v1123 = vmul.f32 %v1117, %v1121
    %v1124 = vmul.f32 %v1118, %v1121
    %v1125 = vld [vmem:[#allocation7] sm:$0xff]
    %v1126 = vld [vmem:[#allocation7 + $0x10] sm:$0xff]
    %v1127 = vld [vmem:[#allocation7 + $0x20] sm:$0xff]
    %v1128 = vld [vmem:[#allocation7 + $0x30] sm:$0xff]
    %v1129 = vld [vmem:[#allocation7 + $0x40] sm:$0xff]
    %v1130 = vld [vmem:[#allocation7 + $0x50] sm:$0xff]
    %v1131 = vld [vmem:[#allocation7 + $0x60] sm:$0xff]
    %v1132 = vld [vmem:[#allocation7 + $0x70] sm:$0xff]
    %1135 = vrot.lane.b32.xlu0 %v1123, 64
    %v1136 = vpop.permute.xlu0 %1135
    %1137 = vrot.lane.b32.xlu0 %v1124, 64
    %v1138 = vpop.permute.xlu0 %1137
    %v1139 = vsel %vm249, %v1136, 0
    %v1141 = vsel %vm249, %v1138, 0
    %1143 = vmatprep.subr.mxu0 0.0
    %1144 = vmatpush1.msra.mxu0 %v1125
    %1145 = vmatprep.subr.mxu0 0.0
    %1146 = vmatpush1.msra.mxu0 %v1126
    %1147 = vmatprep.subr.mxu0 0.0
    %1148 = vmatpush1.msra.mxu0 %v1127
    %1149 = vmatprep.subr.mxu0 0.0
    %1150 = vmatpush1.msra.mxu0 %v1128
    %1151 = vmatprep.subr.mxu0 0.0
    %1152 = vmatpush1.msra.mxu0 %v1129
    %1153 = vmatprep.subr.mxu0 0.0
    %1154 = vmatpush1.msra.mxu0 %v1130
    %1155 = vmatprep.subr.mxu0 0.0
    %1156 = vmatpush1.msra.mxu0 %v1131
    %1157 = vmatprep.subr.mxu0 0.0
    %1158 = vmatpush1.msra.mxu0 %v1132
    %1159 = vmatprep.subr.mxu0 0.0
    %1160 = vmatpush1.msra.mxu0 0.0
    %1161 = vmatprep.subr.mxu0 0.0
    %1162 = vmatpush1.msra.mxu0 0.0
    %1163 = vmatprep.subr.mxu0 0.0
    %1164 = vmatpush1.msra.mxu0 0.0
    %1165 = vmatprep.subr.mxu0 0.0
    %1166 = vmatpush1.msra.mxu0 0.0
    %1167 = vmatprep.subr.mxu0 0.0
    %1168 = vmatpush1.msra.mxu0 0.0
    %1169 = vmatprep.subr.mxu0 0.0
    %1170 = vmatpush1.msra.mxu0 0.0
    %1171 = vmatprep.subr.mxu0 0.0
    %1172 = vmatpush1.msra.mxu0 0.0
    %1173 = vmatprep.subr.mxu0 0.0
    %1174 = vmatpush1.msra.mxu0 0.0
    %1175 = vmatprep.subr.mxu0 0.0
    %1176 = vmatpush1.msra.mxu0 0.0
    %1177 = vmatprep.subr.mxu0 0.0
    %1178 = vmatpush1.msra.mxu0 0.0
    %1179 = vmatprep.subr.mxu0 0.0
    %1180 = vmatpush1.msra.mxu0 0.0
    %1181 = vmatprep.subr.mxu0 0.0
    %1182 = vmatpush1.msra.mxu0 0.0
    %1183 = vmatprep.subr.mxu0 0.0
    %1184 = vmatpush1.msra.mxu0 0.0
    %1185 = vmatprep.subr.mxu0 0.0
    %1186 = vmatpush1.msra.mxu0 0.0
    %1187 = vmatprep.subr.mxu0 0.0
    %1188 = vmatpush1.msra.mxu0 0.0
    %1189 = vmatprep.subr.mxu0 0.0
    %1190 = vmatpush1.msra.mxu0 0.0
    %1191 = vmatprep.subr.mxu0 0.0
    %1192 = vmatpush1.msra.mxu0 0.0
    %1193 = vmatprep.subr.mxu0 0.0
    %1194 = vmatpush1.msra.mxu0 0.0
    %1195 = vmatprep.subr.mxu0 0.0
    %1196 = vmatpush1.msra.mxu0 0.0
    %1197 = vmatprep.subr.mxu0 0.0
    %1198 = vmatpush1.msra.mxu0 0.0
    %1199 = vmatprep.subr.mxu0 0.0
    %1200 = vmatpush1.msra.mxu0 0.0
    %1201 = vmatprep.subr.mxu0 0.0
    %1202 = vmatpush1.msra.mxu0 0.0
    %1203 = vmatprep.subr.mxu0 0.0
    %1204 = vmatpush1.msra.mxu0 0.0
    %1205 = vmatprep.subr.mxu0 0.0
    %1206 = vmatpush1.msra.mxu0 0.0
    %1207 = vmatprep.mubr.f32.mxu0 0.0
    %1208 = vmatmul.mubr.f32.gmra.mrb[0].mxu0 %v1139
    %v1209 = vpop.f32.mrb[0].mxu0
    %v1210 = vadd.f32 0.0, %v1209
    %v1211 = vpop.f32.mrb[0].mxu0
    %1212 = vmatprep.mubr.f32.mxu0 0.0
    %1213 = vmatmul.mubr.f32.gmra.mrb[0].mxu0 %v1141
    %v1214 = vpop.f32.mrb[0].mxu0
    %v1215 = vadd.f32 0.0, %v1214
    %v1216 = vpop.f32.mrb[0].mxu0
    %1217 = vdwg.mxu0
    %vm1218 = vcmp.ge.f32.partialorder %v1210, 0.0
    %vm1219 = vcmp.ge.f32.partialorder %v1215, 0.0
    %v1220 = vmul.f32 %v1210, 0.01
    %v1221 = vmul.f32 %v1215, 0.01
    %v1222 = vsel %vm1218, %v1210, %v1220
    %v1223 = vsel %vm1219, %v1215, %v1221
    %v1224 = vld [vmem:[#allocation5 + $0x10] sm:$0xff]
    %v1225 = vld [vmem:[#allocation5 + $0x18] sm:$0xff]
    %v1226 = vld [vmem:[#allocation5 + $0x30] sm:$0xff]
    %v1227 = vld [vmem:[#allocation5 + $0x38] sm:$0xff]
    %v1228 = vld [vmem:[#allocation5 + $0x50] sm:$0xff]
    %v1229 = vld [vmem:[#allocation5 + $0x58] sm:$0xff]
    %v1230 = vld [vmem:[#allocation5 + $0x70] sm:$0xff]
    %v1231 = vld [vmem:[#allocation5 + $0x78] sm:$0xff]
    %v1233 = vlaneseq
    %v1234 = vshrl.u32 %v1233, 7
    %v1235 = vsub.s32 0, %v1234
    %v1236 = vrot.slane %v97, %v1235
    %v1237 = vlaneseq
    %v1238 = vshrl.u32 %v1237, 7
    %v1239 = vsub.s32 1, %v1238
    %v1240 = vrot.slane %v97, %v1239
    %v1244 = vsel %vm113, %v1222, 0
    %v1247 = vsel %vm113, %v1223, 0
    %1249 = vmatprep.subr.mxu0 %v1225
    %1250 = vmatpush1.msra.mxu0 %v1224
    %1251 = vmatprep.subr.mxu0 %v1227
    %1252 = vmatpush1.msra.mxu0 %v1226
    %1253 = vmatprep.subr.mxu0 %v1229
    %1254 = vmatpush1.msra.mxu0 %v1228
    %1255 = vmatprep.subr.mxu0 %v1231
    %1256 = vmatpush1.msra.mxu0 %v1230
    %1257 = vmatprep.subr.mxu0 0.0
    %1258 = vmatpush1.msra.mxu0 0.0
    %1259 = vmatprep.subr.mxu0 0.0
    %1260 = vmatpush1.msra.mxu0 0.0
    %1261 = vmatprep.subr.mxu0 0.0
    %1262 = vmatpush1.msra.mxu0 0.0
    %1263 = vmatprep.subr.mxu0 0.0
    %1264 = vmatpush1.msra.mxu0 0.0
    %1265 = vmatprep.subr.mxu0 0.0
    %1266 = vmatpush1.msra.mxu0 0.0
    %1267 = vmatprep.subr.mxu0 0.0
    %1268 = vmatpush1.msra.mxu0 0.0
    %1269 = vmatprep.subr.mxu0 0.0
    %1270 = vmatpush1.msra.mxu0 0.0
    %1271 = vmatprep.subr.mxu0 0.0
    %1272 = vmatpush1.msra.mxu0 0.0
    %1273 = vmatprep.subr.mxu0 0.0
    %1274 = vmatpush1.msra.mxu0 0.0
    %1275 = vmatprep.subr.mxu0 0.0
    %1276 = vmatpush1.msra.mxu0 0.0
    %1277 = vmatprep.subr.mxu0 0.0
    %1278 = vmatpush1.msra.mxu0 0.0
    %1279 = vmatprep.subr.mxu0 0.0
    %1280 = vmatpush1.msra.mxu0 0.0
    %1281 = vmatprep.subr.mxu0 0.0
    %1282 = vmatpush1.msra.mxu0 0.0
    %1283 = vmatprep.subr.mxu0 0.0
    %1284 = vmatpush1.msra.mxu0 0.0
    %1285 = vmatprep.subr.mxu0 0.0
    %1286 = vmatpush1.msra.mxu0 0.0
    %1287 = vmatprep.subr.mxu0 0.0
    %1288 = vmatpush1.msra.mxu0 0.0
    %1289 = vmatprep.subr.mxu0 0.0
    %1290 = vmatpush1.msra.mxu0 0.0
    %1291 = vmatprep.subr.mxu0 0.0
    %1292 = vmatpush1.msra.mxu0 0.0
    %1293 = vmatprep.subr.mxu0 0.0
    %1294 = vmatpush1.msra.mxu0 0.0
    %1295 = vmatprep.subr.mxu0 0.0
    %1296 = vmatpush1.msra.mxu0 0.0
    %1297 = vmatprep.subr.mxu0 0.0
    %1298 = vmatpush1.msra.mxu0 0.0
    %1299 = vmatprep.subr.mxu0 0.0
    %1300 = vmatpush1.msra.mxu0 0.0
    %1301 = vmatprep.subr.mxu0 0.0
    %1302 = vmatpush1.msra.mxu0 0.0
    %1303 = vmatprep.subr.mxu0 0.0
    %1304 = vmatpush1.msra.mxu0 0.0
    %1305 = vmatprep.subr.mxu0 0.0
    %1306 = vmatpush1.msra.mxu0 0.0
    %1307 = vmatprep.subr.mxu0 0.0
    %1308 = vmatpush1.msra.mxu0 0.0
    %1309 = vmatprep.subr.mxu0 0.0
    %1310 = vmatpush1.msra.mxu0 0.0
    %1311 = vmatprep.subr.mxu0 0.0
    %1312 = vmatpush1.msra.mxu0 0.0
    %1313 = vmatprep.mubr.f32.mxu0 0.0
    %1314 = vmatmul.mubr.f32.gmra.mrb[0].mxu0 %v1244
    %v1315 = vpop.f32.mrb[0].mxu0
    %v1316 = vadd.f32 %v1236, %v1315
    %v1317 = vpop.f32.mrb[0].mxu0
    %v1318 = vadd.f32 %v1240, %v1317
    %1319 = vmatprep.mubr.f32.mxu0 0.0
    %1320 = vmatmul.mubr.f32.gmra.mrb[0].mxu0 %v1247
    %v1321 = vpop.f32.mrb[0].mxu0
    %v1322 = vadd.f32 %v1236, %v1321
    %v1323 = vpop.f32.mrb[0].mxu0
    %v1324 = vadd.f32 %v1240, %v1323
    %1325 = vdwg.mxu0
    %v1326 = vadd.f32 %v1318, %v199
    %v1327 = vadd.f32 %v1324, %v199
    %vm1328 = vcmp.gt.f32.partialorder %v1326, 20.0
    %vm1329 = vcmp.gt.f32.partialorder %v1327, 20.0
    %v1330 = vmin.f32 %v1326, 20.0
    %v1331 = vmin.f32 %v1327, 20.0
    %v1332 = vmul.f32 %v1330, 1.442695
    %v1333 = vpow.pop %v1332
    %v1334 = vmul.f32 %v1331, 1.442695
    %v1335 = vpow.pop %v1334
    %v1336 = vadd.f32 %v1333, 1.0
    %v1337 = vadd.f32 %v1335, 1.0
    %v1338 = vlog2.pop %v1336
    %v1339 = vmul.f32 %v1338, 0.6931472
    %v1340 = vlog2.pop %v1337
    %v1341 = vmul.f32 %v1340, 0.6931472
    %v1342 = vsel %vm1328, %v1326, %v1339
    %v1343 = vsel %vm1329, %v1327, %v1341
    %v1344 = vmul.f32 %v1342, %v221
    %v1345 = vmul.f32 %v1343, %v221
    %v1346 = vmul.f32 %v1316, %v231
    %v1347 = vmul.f32 %v1318, %v231
    %v1348 = vmul.f32 %v1322, %v231
    %v1349 = vmul.f32 %v1324, %v231
    %1354 = vrot.lane.b32.xlu0 %v1316, 64
    %v1355 = vpop.permute.xlu0 %1354
    %1356 = vrot.lane.b32.xlu0 %v1318, 64
    %v1357 = vpop.permute.xlu0 %1356
    %1358 = vrot.lane.b32.xlu0 %v1322, 64
    %v1359 = vpop.permute.xlu0 %1358
    %1360 = vrot.lane.b32.xlu0 %v1324, 64
    %v1361 = vpop.permute.xlu0 %1360
    %v1362 = vsel %vm249, %v1355, %v1357
    %v1363 = vsel %vm249, %v1359, %v1361
    %v1366 = vrot.slane %v1362, 7
    %v1367 = vrot.slane %v1363, 7
    %v1368 = vsel %vm258, %v1366, %v1367
    %v1369 = vsel %vm258, %v1367, %v1366
    %v1370 = vmul.f32 %v1369, %v264
    %v1371 = vmul.f32 %v1368, %v269
    %v1372 = vmul.f32 %v1370, %v276
    %v1373 = vmul.f32 %v1371, %v276
    %1376 = vrot.lane.b32.xlu0 %v1372, 64
    %v1377 = vpop.permute.xlu0 %1376
    %1378 = vrot.lane.b32.xlu0 %v1373, 64
    %v1379 = vpop.permute.xlu0 %1378
    %v1382 = vadd.f32 %v1346, %v1377
    %v1383 = vadd.f32 %v1347, %v1377
    %v1384 = vadd.f32 %v1348, %v1379
    %v1385 = vadd.f32 %v1349, %v1379
    %v1386 = vrot.slane %v1362, 6
    %v1387 = vrot.slane %v1363, 6
    %v1388 = vsel %vm293, %v1386, %v1387
    %v1389 = vsel %vm293, %v1387, %v1386
    %v1390 = vmul.f32 %v1389, %v298
    %v1391 = vmul.f32 %v1388, %v302
    %v1392 = vmul.f32 %v1390, %v309
    %v1393 = vmul.f32 %v1391, %v309
    %1396 = vrot.lane.b32.xlu0 %v1392, 64
    %v1397 = vpop.permute.xlu0 %1396
    %1398 = vrot.lane.b32.xlu0 %v1393, 64
    %v1399 = vpop.permute.xlu0 %1398
    %v1402 = vadd.f32 %v1382, %v1397
    %v1403 = vadd.f32 %v1383, %v1397
    %v1404 = vadd.f32 %v1384, %v1399
    %v1405 = vadd.f32 %v1385, %v1399
    %v1406 = vrot.slane %v1362, 5
    %v1407 = vrot.slane %v1363, 5
    %v1408 = vsel %vm326, %v1406, %v1407
    %v1409 = vsel %vm326, %v1407, %v1406
    %v1410 = vmul.f32 %v1409, %v331
    %v1411 = vmul.f32 %v1408, %v335
    %v1412 = vmul.f32 %v1410, %v342
    %v1413 = vmul.f32 %v1411, %v342
    %1416 = vrot.lane.b32.xlu0 %v1412, 64
    %v1417 = vpop.permute.xlu0 %1416
    %1418 = vrot.lane.b32.xlu0 %v1413, 64
    %v1419 = vpop.permute.xlu0 %1418
    %v1422 = vadd.f32 %v1402, %v1417
    %v1423 = vadd.f32 %v1403, %v1417
    %v1424 = vadd.f32 %v1404, %v1419
    %v1425 = vadd.f32 %v1405, %v1419
    %v1426 = vadd.f32 %v1422, %v359
    %v1427 = vadd.f32 %v1423, %v359
    %v1428 = vadd.f32 %v1424, %v359
    %v1429 = vadd.f32 %v1425, %v359
    %v1430 = vsub.f32 0.0, %v1426
    %v1431 = vsub.f32 0.0, %v1427
    %v1432 = vsub.f32 0.0, %v1428
    %v1433 = vsub.f32 0.0, %v1429
    %v1434 = vmul.f32 %v1430, 1.442695
    %v1435 = vpow.pop %v1434
    %v1436 = vmul.f32 %v1431, 1.442695
    %v1437 = vpow.pop %v1436
    %v1438 = vmul.f32 %v1432, 1.442695
    %v1439 = vpow.pop %v1438
    %v1440 = vmul.f32 %v1433, 1.442695
    %v1441 = vpow.pop %v1440
    %v1442 = vadd.f32 %v1435, 1.0
    %v1443 = vadd.f32 %v1437, 1.0
    %v1444 = vadd.f32 %v1439, 1.0
    %v1445 = vadd.f32 %v1441, 1.0
    %v1446 = vrcp.pop %v1442
    %v1447 = vrcp.pop %v1443
    %v1448 = vrcp.pop %v1444
    %v1449 = vrcp.pop %v1445
    %v1450 = vmul.f32 %v1426, %v1446
    %v1451 = vmul.f32 %v1427, %v1447
    %v1452 = vmul.f32 %v1428, %v1448
    %v1453 = vmul.f32 %v1429, %v1449
    %1456 = vrot.lane.b32.xlu0 %v1344, 96
    %v1457 = vpop.permute.xlu0 %1456
    %1458 = vrot.lane.b32.xlu0 %v1345, 96
    %v1459 = vpop.permute.xlu0 %1458
    %1462 = vmatprep.subr.mxu0 0.0
    %1463 = vmatpush1.msra.mxu0 %v1457
    %1464 = vmatprep.subr.mxu0 0.0
    %1465 = vmatpush1.msra.mxu0 %v1459
    %1466 = vmatprep.subr.mxu0 0.0
    %1467 = vmatpush1.msra.mxu0 0.0
    %1468 = vmatprep.subr.mxu0 0.0
    %1469 = vmatpush1.msra.mxu0 0.0
    %1470 = vmatprep.subr.mxu0 0.0
    %1471 = vmatpush1.msra.mxu0 0.0
    %1472 = vmatprep.subr.mxu0 0.0
    %1473 = vmatpush1.msra.mxu0 0.0
    %1474 = vmatprep.subr.mxu0 0.0
    %1475 = vmatpush1.msra.mxu0 0.0
    %1476 = vmatprep.subr.mxu0 0.0
    %1477 = vmatpush1.msra.mxu0 0.0
    %1478 = vmatprep.subr.mxu0 0.0
    %1479 = vmatpush1.msra.mxu0 0.0
    %1480 = vmatprep.subr.mxu0 0.0
    %1481 = vmatpush1.msra.mxu0 0.0
    %1482 = vmatprep.subr.mxu0 0.0
    %1483 = vmatpush1.msra.mxu0 0.0
    %1484 = vmatprep.subr.mxu0 0.0
    %1485 = vmatpush1.msra.mxu0 0.0
    %1486 = vmatprep.subr.mxu0 0.0
    %1487 = vmatpush1.msra.mxu0 0.0
    %1488 = vmatprep.subr.mxu0 0.0
    %1489 = vmatpush1.msra.mxu0 0.0
    %1490 = vmatprep.subr.mxu0 0.0
    %1491 = vmatpush1.msra.mxu0 0.0
    %1492 = vmatprep.subr.mxu0 0.0
    %1493 = vmatpush1.msra.mxu0 0.0
    %1494 = vmatprep.subr.mxu0 0.0
    %1495 = vmatpush1.msra.mxu0 0.0
    %1496 = vmatprep.subr.mxu0 0.0
    %1497 = vmatpush1.msra.mxu0 0.0
    %1498 = vmatprep.subr.mxu0 0.0
    %1499 = vmatpush1.msra.mxu0 0.0
    %1500 = vmatprep.subr.mxu0 0.0
    %1501 = vmatpush1.msra.mxu0 0.0
    %1502 = vmatprep.subr.mxu0 0.0
    %1503 = vmatpush1.msra.mxu0 0.0
    %1504 = vmatprep.subr.mxu0 0.0
    %1505 = vmatpush1.msra.mxu0 0.0
    %1506 = vmatprep.subr.mxu0 0.0
    %1507 = vmatpush1.msra.mxu0 0.0
    %1508 = vmatprep.subr.mxu0 0.0
    %1509 = vmatpush1.msra.mxu0 0.0
    %1510 = vmatprep.subr.mxu0 0.0
    %1511 = vmatpush1.msra.mxu0 0.0
    %1512 = vmatprep.subr.mxu0 0.0
    %1513 = vmatpush1.msra.mxu0 0.0
    %1514 = vmatprep.subr.mxu0 0.0
    %1515 = vmatpush1.msra.mxu0 0.0
    %1516 = vmatprep.subr.mxu0 0.0
    %1517 = vmatpush1.msra.mxu0 0.0
    %1518 = vmatprep.subr.mxu0 0.0
    %1519 = vmatpush1.msra.mxu0 0.0
    %1520 = vmatprep.subr.mxu0 0.0
    %1521 = vmatpush1.msra.mxu0 0.0
    %1522 = vmatprep.subr.mxu0 0.0
    %1523 = vmatpush1.msra.mxu0 0.0
    %1524 = vmatprep.subr.mxu0 0.0
    %1525 = vmatpush1.msra.mxu0 0.0
    %1526 = vmatprep.mubr.f32.mxu0 0.0
    %1527 = vmatmul.mubr.f32.gmra.mrb[0].mxu0 %v399
    %v1528 = vpop.f32.mrb[0].mxu0
    %v1529 = vadd.f32 0.0, %v1528
    %v1530 = vpop.f32.mrb[0].mxu0
    %1531 = vmatprep.mubr.f32.mxu0 0.0
    %1532 = vmatmul.mubr.f32.gmra.mrb[0].mxu0 %v402
    %v1533 = vpop.f32.mrb[0].mxu0
    %v1534 = vadd.f32 0.0, %v1533
    %v1535 = vpop.f32.mrb[0].mxu0
    %1536 = vdwg.mxu0
    %1537 = vxpose.xlu0.b32.start [1/16] %v1457, 128
    %1538 = vxpose.xlu0.b32.cont [2/16] %v1459, 128
    %1539 = vxpose.xlu0.b32.cont [3/16] 0.0, 128
    %1540 = vxpose.xlu0.b32.cont [4/16] 0.0, 128
    %1541 = vxpose.xlu0.b32.cont [5/16] 0.0, 128
    %1542 = vxpose.xlu0.b32.cont [6/16] 0.0, 128
    %1543 = vxpose.xlu0.b32.cont [7/16] 0.0, 128
    %1544 = vxpose.xlu0.b32.cont [8/16] 0.0, 128
    %1545 = vxpose.xlu0.b32.cont [9/16] 0.0, 128
    %1546 = vxpose.xlu0.b32.cont [10/16] 0.0, 128
    %1547 = vxpose.xlu0.b32.cont [11/16] 0.0, 128
    %1548 = vxpose.xlu0.b32.cont [12/16] 0.0, 128
    %1549 = vxpose.xlu0.b32.cont [13/16] 0.0, 128
    %1550 = vxpose.xlu0.b32.cont [14/16] 0.0, 128
    %1551 = vxpose.xlu0.b32.cont [15/16] 0.0, 128
    %1552 = vxpose.xlu0.b32.end [16/16] 0.0, 128
    %v1553 = vpop.trf.xlu0
    %v1554 = vpop.trf.xlu0
    %v1555 = vpop.trf.xlu0
    %v1556 = vpop.trf.xlu0
    %v1557 = vpop.trf.xlu0
    %v1558 = vpop.trf.xlu0
    %v1559 = vpop.trf.xlu0
    %v1560 = vpop.trf.xlu0
    %v1561 = vpop.trf.xlu0
    %v1562 = vpop.trf.xlu0
    %v1563 = vpop.trf.xlu0
    %v1564 = vpop.trf.xlu0
    %v1565 = vpop.trf.xlu0
    %v1566 = vpop.trf.xlu0
    %v1567 = vpop.trf.xlu0
    %v1568 = vpop.trf.xlu0
    %v1570 = vsel %vm397, %v1553, 0
    %1572 = vmatprep.subr.mxu0 0.0
    %1573 = vmatpush1.msra.mxu0 %v89
    %1574 = vmatprep.subr.mxu0 0.0
    %1575 = vmatpush1.msra.mxu0 %v90
    %1576 = vmatprep.subr.mxu0 0.0
    %1577 = vmatpush1.msra.mxu0 0.0
    %1578 = vmatprep.subr.mxu0 0.0
    %1579 = vmatpush1.msra.mxu0 0.0
    %1580 = vmatprep.subr.mxu0 0.0
    %1581 = vmatpush1.msra.mxu0 0.0
    %1582 = vmatprep.subr.mxu0 0.0
    %1583 = vmatpush1.msra.mxu0 0.0
    %1584 = vmatprep.subr.mxu0 0.0
    %1585 = vmatpush1.msra.mxu0 0.0
    %1586 = vmatprep.subr.mxu0 0.0
    %1587 = vmatpush1.msra.mxu0 0.0
    %1588 = vmatprep.subr.mxu0 0.0
    %1589 = vmatpush1.msra.mxu0 0.0
    %1590 = vmatprep.subr.mxu0 0.0
    %1591 = vmatpush1.msra.mxu0 0.0
    %1592 = vmatprep.subr.mxu0 0.0
    %1593 = vmatpush1.msra.mxu0 0.0
    %1594 = vmatprep.subr.mxu0 0.0
    %1595 = vmatpush1.msra.mxu0 0.0
    %1596 = vmatprep.subr.mxu0 0.0
    %1597 = vmatpush1.msra.mxu0 0.0
    %1598 = vmatprep.subr.mxu0 0.0
    %1599 = vmatpush1.msra.mxu0 0.0
    %1600 = vmatprep.subr.mxu0 0.0
    %1601 = vmatpush1.msra.mxu0 0.0
    %1602 = vmatprep.subr.mxu0 0.0
    %1603 = vmatpush1.msra.mxu0 0.0
    %1604 = vmatprep.subr.mxu0 0.0
    %1605 = vmatpush1.msra.mxu0 0.0
    %1606 = vmatprep.subr.mxu0 0.0
    %1607 = vmatpush1.msra.mxu0 0.0
    %1608 = vmatprep.subr.mxu0 0.0
    %1609 = vmatpush1.msra.mxu0 0.0
    %1610 = vmatprep.subr.mxu0 0.0
    %1611 = vmatpush1.msra.mxu0 0.0
    %1612 = vmatprep.subr.mxu0 0.0
    %1613 = vmatpush1.msra.mxu0 0.0
    %1614 = vmatprep.subr.mxu0 0.0
    %1615 = vmatpush1.msra.mxu0 0.0
    %1616 = vmatprep.subr.mxu0 0.0
    %1617 = vmatpush1.msra.mxu0 0.0
    %1618 = vmatprep.subr.mxu0 0.0
    %1619 = vmatpush1.msra.mxu0 0.0
    %1620 = vmatprep.subr.mxu0 0.0
    %1621 = vmatpush1.msra.mxu0 0.0
    %1622 = vmatprep.subr.mxu0 0.0
    %1623 = vmatpush1.msra.mxu0 0.0
    %1624 = vmatprep.subr.mxu0 0.0
    %1625 = vmatpush1.msra.mxu0 0.0
    %1626 = vmatprep.subr.mxu0 0.0
    %1627 = vmatpush1.msra.mxu0 0.0
    %1628 = vmatprep.subr.mxu0 0.0
    %1629 = vmatpush1.msra.mxu0 0.0
    %1630 = vmatprep.subr.mxu0 0.0
    %1631 = vmatpush1.msra.mxu0 0.0
    %1632 = vmatprep.subr.mxu0 0.0
    %1633 = vmatpush1.msra.mxu0 0.0
    %1634 = vmatprep.subr.mxu0 0.0
    %1635 = vmatpush1.msra.mxu0 0.0
    %1636 = vmatprep.mubr.f32.mxu0 0.0
    %1637 = vmatmul.mubr.f32.gmra.mrb[0].mxu0 %v1570
    %v1638 = vpop.f32.mrb[0].mxu0
    %v1639 = vadd.f32 0.0, %v1638
    %v1640 = vpop.f32.mrb[0].mxu0
    %1641 = vdwg.mxu0
    %1644 = vrot.lane.b32.xlu0 %v1451, 112
    %v1645 = vpop.permute.xlu0 %1644
    %1646 = vrot.lane.b32.xlu0 %v1453, 112
    %v1647 = vpop.permute.xlu0 %1646
    %v1648 = vsel %vm397, %v1645, 0
    %v1650 = vsel %vm397, %v1647, 0
    %v1652 = vsel %vm397, %v1451, 0
    %v1654 = vsel %vm397, %v1453, 0
    %1656 = vmatprep.subr.mxu0 0.0
    %1657 = vmatpush1.xpose.msra.mxu0 %v1652
    %1658 = vmatprep.subr.mxu0 0.0
    %1659 = vmatpush1.xpose.msra.mxu0 %v1654
    %1660 = vmatprep.subr.mxu0 0.0
    %1661 = vmatpush1.xpose.msra.mxu0 0.0
    %1662 = vmatprep.subr.mxu0 0.0
    %1663 = vmatpush1.xpose.msra.mxu0 0.0
    %1664 = vmatprep.subr.mxu0 0.0
    %1665 = vmatpush1.xpose.msra.mxu0 0.0
    %1666 = vmatprep.subr.mxu0 0.0
    %1667 = vmatpush1.xpose.msra.mxu0 0.0
    %1668 = vmatprep.subr.mxu0 0.0
    %1669 = vmatpush1.xpose.msra.mxu0 0.0
    %1670 = vmatprep.subr.mxu0 0.0
    %1671 = vmatpush1.xpose.msra.mxu0 0.0
    %1672 = vmatprep.subr.mxu0 0.0
    %1673 = vmatpush1.xpose.msra.mxu0 0.0
    %1674 = vmatprep.subr.mxu0 0.0
    %1675 = vmatpush1.xpose.msra.mxu0 0.0
    %1676 = vmatprep.subr.mxu0 0.0
    %1677 = vmatpush1.xpose.msra.mxu0 0.0
    %1678 = vmatprep.subr.mxu0 0.0
    %1679 = vmatpush1.xpose.msra.mxu0 0.0
    %1680 = vmatprep.subr.mxu0 0.0
    %1681 = vmatpush1.xpose.msra.mxu0 0.0
    %1682 = vmatprep.subr.mxu0 0.0
    %1683 = vmatpush1.xpose.msra.mxu0 0.0
    %1684 = vmatprep.subr.mxu0 0.0
    %1685 = vmatpush1.xpose.msra.mxu0 0.0
    %1686 = vmatprep.subr.mxu0 0.0
    %1687 = vmatpush1.xpose.msra.mxu0 0.0
    %1688 = vmatprep.subr.mxu0 0.0
    %1689 = vmatpush1.xpose.msra.mxu0 0.0
    %1690 = vmatprep.subr.mxu0 0.0
    %1691 = vmatpush1.xpose.msra.mxu0 0.0
    %1692 = vmatprep.subr.mxu0 0.0
    %1693 = vmatpush1.xpose.msra.mxu0 0.0
    %1694 = vmatprep.subr.mxu0 0.0
    %1695 = vmatpush1.xpose.msra.mxu0 0.0
    %1696 = vmatprep.subr.mxu0 0.0
    %1697 = vmatpush1.xpose.msra.mxu0 0.0
    %1698 = vmatprep.subr.mxu0 0.0
    %1699 = vmatpush1.xpose.msra.mxu0 0.0
    %1700 = vmatprep.subr.mxu0 0.0
    %1701 = vmatpush1.xpose.msra.mxu0 0.0
    %1702 = vmatprep.subr.mxu0 0.0
    %1703 = vmatpush1.xpose.msra.mxu0 0.0
    %1704 = vmatprep.subr.mxu0 0.0
    %1705 = vmatpush1.xpose.msra.mxu0 0.0
    %1706 = vmatprep.subr.mxu0 0.0
    %1707 = vmatpush1.xpose.msra.mxu0 0.0
    %1708 = vmatprep.subr.mxu0 0.0
    %1709 = vmatpush1.xpose.msra.mxu0 0.0
    %1710 = vmatprep.subr.mxu0 0.0
    %1711 = vmatpush1.xpose.msra.mxu0 0.0
    %1712 = vmatprep.subr.mxu0 0.0
    %1713 = vmatpush1.xpose.msra.mxu0 0.0
    %1714 = vmatprep.subr.mxu0 0.0
    %1715 = vmatpush1.xpose.msra.mxu0 0.0
    %1716 = vmatprep.subr.mxu0 0.0
    %1717 = vmatpush1.xpose.msra.mxu0 0.0
    %1718 = vmatprep.subr.mxu0 0.0
    %1719 = vmatpush1.xpose.msra.mxu0 0.0
    %1720 = vmatprep.mubr.f32.mxu0 0.0
    %1721 = vmatmul.mubr.f32.gmra.mrb[0].mxu0 %v1648
    %v1722 = vpop.f32.mrb[0].mxu0
    %v1723 = vadd.f32 0.0, %v1722
    %v1724 = vpop.f32.mrb[0].mxu0
    %1725 = vmatprep.mubr.f32.mxu0 0.0
    %1726 = vmatmul.mubr.f32.gmra.mrb[0].mxu0 %v1650
    %v1727 = vpop.f32.mrb[0].mxu0
    %v1728 = vadd.f32 0.0, %v1727
    %v1729 = vpop.f32.mrb[0].mxu0
    %1730 = vdwg.mxu0
    %v1731 = vmul.f32 %v1723, %v87
    %v1732 = vmul.f32 %v1728, %v88
    %1735 = vrot.lane.b32.xlu0 %v1342, 96
    %v1736 = vpop.permute.xlu0 %1735
    %1737 = vrot.lane.b32.xlu0 %v1343, 96
    %v1738 = vpop.permute.xlu0 %1737
    %v1739 = vsel %vm681, %v1736, 0
    %v1741 = vsel %vm681, %v1738, 0
    %1743 = vmatprep.subr.mxu0 0.0
    %1744 = vmatpush1.msra.mxu0 %v688
    %1745 = vmatprep.subr.mxu0 0.0
    %1746 = vmatpush1.msra.mxu0 0.0
    %1747 = vmatprep.subr.mxu0 0.0
    %1748 = vmatpush1.msra.mxu0 0.0
    %1749 = vmatprep.subr.mxu0 0.0
    %1750 = vmatpush1.msra.mxu0 0.0
    %1751 = vmatprep.subr.mxu0 0.0
    %1752 = vmatpush1.msra.mxu0 0.0
    %1753 = vmatprep.subr.mxu0 0.0
    %1754 = vmatpush1.msra.mxu0 0.0
    %1755 = vmatprep.subr.mxu0 0.0
    %1756 = vmatpush1.msra.mxu0 0.0
    %1757 = vmatprep.subr.mxu0 0.0
    %1758 = vmatpush1.msra.mxu0 0.0
    %1759 = vmatprep.subr.mxu0 0.0
    %1760 = vmatpush1.msra.mxu0 0.0
    %1761 = vmatprep.subr.mxu0 0.0
    %1762 = vmatpush1.msra.mxu0 0.0
    %1763 = vmatprep.subr.mxu0 0.0
    %1764 = vmatpush1.msra.mxu0 0.0
    %1765 = vmatprep.subr.mxu0 0.0
    %1766 = vmatpush1.msra.mxu0 0.0
    %1767 = vmatprep.subr.mxu0 0.0
    %1768 = vmatpush1.msra.mxu0 0.0
    %1769 = vmatprep.subr.mxu0 0.0
    %1770 = vmatpush1.msra.mxu0 0.0
    %1771 = vmatprep.subr.mxu0 0.0
    %1772 = vmatpush1.msra.mxu0 0.0
    %1773 = vmatprep.subr.mxu0 0.0
    %1774 = vmatpush1.msra.mxu0 0.0
    %1775 = vmatprep.subr.mxu0 0.0
    %1776 = vmatpush1.msra.mxu0 0.0
    %1777 = vmatprep.subr.mxu0 0.0
    %1778 = vmatpush1.msra.mxu0 0.0
    %1779 = vmatprep.subr.mxu0 0.0
    %1780 = vmatpush1.msra.mxu0 0.0
    %1781 = vmatprep.subr.mxu0 0.0
    %1782 = vmatpush1.msra.mxu0 0.0
    %1783 = vmatprep.subr.mxu0 0.0
    %1784 = vmatpush1.msra.mxu0 0.0
    %1785 = vmatprep.subr.mxu0 0.0
    %1786 = vmatpush1.msra.mxu0 0.0
    %1787 = vmatprep.subr.mxu0 0.0
    %1788 = vmatpush1.msra.mxu0 0.0
    %1789 = vmatprep.subr.mxu0 0.0
    %1790 = vmatpush1.msra.mxu0 0.0
    %1791 = vmatprep.subr.mxu0 0.0
    %1792 = vmatpush1.msra.mxu0 0.0
    %1793 = vmatprep.subr.mxu0 0.0
    %1794 = vmatpush1.msra.mxu0 0.0
    %1795 = vmatprep.subr.mxu0 0.0
    %1796 = vmatpush1.msra.mxu0 0.0
    %1797 = vmatprep.subr.mxu0 0.0
    %1798 = vmatpush1.msra.mxu0 0.0
    %1799 = vmatprep.subr.mxu0 0.0
    %1800 = vmatpush1.msra.mxu0 0.0
    %1801 = vmatprep.subr.mxu0 0.0
    %1802 = vmatpush1.msra.mxu0 0.0
    %1803 = vmatprep.subr.mxu0 0.0
    %1804 = vmatpush1.msra.mxu0 0.0
    %1805 = vmatprep.subr.mxu0 0.0
    %1806 = vmatpush1.msra.mxu0 0.0
    %1807 = vmatprep.mubr.f32.mxu0 0.0
    %1808 = vmatmul.mubr.f32.gmra.mrb[0].mxu0 %v1739
    %v1809 = vpop.f32.mrb[0].mxu0
    %v1810 = vadd.f32 0.0, %v1809
    %v1811 = vpop.f32.mrb[0].mxu0
    %1812 = vmatprep.mubr.f32.mxu0 0.0
    %1813 = vmatmul.mubr.f32.gmra.mrb[0].mxu0 %v1741
    %v1814 = vpop.f32.mrb[0].mxu0
    %v1815 = vadd.f32 0.0, %v1814
    %v1816 = vpop.f32.mrb[0].mxu0
    %1817 = vdwg.mxu0
    %1820 = vrot.lane.b32.xlu0 %v1810, 64
    %v1821 = vpop.permute.xlu0 %1820
    %1822 = vrot.lane.b32.xlu0 %v1815, 64
    %v1823 = vpop.permute.xlu0 %1822
    %v1826 = vmul.f32 %v1450, %v1821
    %v1827 = vmul.f32 %v1452, %v1823
    %1829 = vset.pattern.permute.xlu0 0
    %1830 = vperm.xlu0 %1829, %v1529
    %v1831 = vpop.permute.xlu0 %1830
    %1834 = vset.pattern.permute.xlu0 0
    %1835 = vperm.xlu0 %1834, %v1534
    %v1836 = vpop.permute.xlu0 %1835
    %v1838 = vlaneseq
    %v1839 = vshrl.u32 %v1838, 7
    %v1840 = vsub.s32 0, %v1839
    %v1841 = vrot.slane %v1639, %v1840
    %v1842 = vsub.f32 %v1831, %v1841
    %v1843 = vsub.f32 %v1836, %v1841
    %v1844 = vmin.f32 %v1842, 0.0
    %v1845 = vmin.f32 %v1843, 0.0
    %v1846 = vmul.f32 %v1844, 1.442695
    %v1847 = vpow.pop %v1846
    %v1848 = vmul.f32 %v1845, 1.442695
    %v1849 = vpow.pop %v1848
    %v1850 = vmul.f32 %v1731, %v1847
    %v1851 = vmul.f32 %v1732, %v1849
    %1852 = vset.pattern.permute.xlu0 1
    %1853 = vperm.xlu0 %1852, %v1529
    %v1854 = vpop.permute.xlu0 %1853
    %1856 = vset.pattern.permute.xlu0 1
    %1857 = vperm.xlu0 %1856, %v1534
    %v1858 = vpop.permute.xlu0 %1857
    %v1860 = vlaneseq
    %v1861 = vshrl.u32 %v1860, 7
    %v1862 = vsub.s32 1, %v1861
    %v1863 = vrot.slane %v1639, %v1862
    %v1864 = vsub.f32 %v1854, %v1863
    %v1865 = vsub.f32 %v1858, %v1863
    %v1866 = vmin.f32 %v1864, 0.0
    %v1867 = vmin.f32 %v1865, 0.0
    %v1868 = vmul.f32 %v1866, 1.442695
    %v1869 = vpow.pop %v1868
    %v1870 = vmul.f32 %v1867, 1.442695
    %v1871 = vpow.pop %v1870
    %v1872 = vmul.f32 %v1731, %v1869
    %v1873 = vmul.f32 %v1732, %v1871
    %1874 = vset.pattern.permute.xlu0 2
    %1875 = vperm.xlu0 %1874, %v1529
    %v1876 = vpop.permute.xlu0 %1875
    %1878 = vset.pattern.permute.xlu0 2
    %1879 = vperm.xlu0 %1878, %v1534
    %v1880 = vpop.permute.xlu0 %1879
    %v1882 = vlaneseq
    %v1883 = vshrl.u32 %v1882, 7
    %v1884 = vsub.s32 2, %v1883
    %v1885 = vrot.slane %v1639, %v1884
    %v1886 = vsub.f32 %v1876, %v1885
    %v1887 = vsub.f32 %v1880, %v1885
    %v1888 = vmin.f32 %v1886, 0.0
    %v1889 = vmin.f32 %v1887, 0.0
    %v1890 = vmul.f32 %v1888, 1.442695
    %v1891 = vpow.pop %v1890
    %v1892 = vmul.f32 %v1889, 1.442695
    %v1893 = vpow.pop %v1892
    %v1894 = vmul.f32 %v1731, %v1891
    %v1895 = vmul.f32 %v1732, %v1893
    %1896 = vset.pattern.permute.xlu0 3
    %1897 = vperm.xlu0 %1896, %v1529
    %v1898 = vpop.permute.xlu0 %1897
    %1900 = vset.pattern.permute.xlu0 3
    %1901 = vperm.xlu0 %1900, %v1534
    %v1902 = vpop.permute.xlu0 %1901
    %v1904 = vlaneseq
    %v1905 = vshrl.u32 %v1904, 7
    %v1906 = vsub.s32 3, %v1905
    %v1907 = vrot.slane %v1639, %v1906
    %v1908 = vsub.f32 %v1898, %v1907
    %v1909 = vsub.f32 %v1902, %v1907
    %v1910 = vmin.f32 %v1908, 0.0
    %v1911 = vmin.f32 %v1909, 0.0
    %v1912 = vmul.f32 %v1910, 1.442695
    %v1913 = vpow.pop %v1912
    %v1914 = vmul.f32 %v1911, 1.442695
    %v1915 = vpow.pop %v1914
    %v1916 = vmul.f32 %v1731, %v1913
    %v1917 = vmul.f32 %v1732, %v1915
    %1920 = vrot.lane.b32.xlu0 %v1826, 64
    %v1921 = vpop.permute.xlu0 %1920
    %1922 = vrot.lane.b32.xlu0 %v1827, 64
    %v1923 = vpop.permute.xlu0 %1922
    %v1927 = vsel %vm397, %v1850, 0
    %v1930 = vsel %vm397, %v1851, 0
    %v1933 = vsel %vm397, %v1872, 0
    %v1936 = vsel %vm397, %v1873, 0
    %v1939 = vsel %vm397, %v1894, 0
    %v1942 = vsel %vm397, %v1895, 0
    %v1945 = vsel %vm397, %v1916, 0
    %v1948 = vsel %vm397, %v1917, 0
    %1950 = vmatprep.subr.mxu0 0.0
    %1951 = vmatpush1.msra.mxu0 %v1921
    %1952 = vmatprep.subr.mxu0 0.0
    %1953 = vmatpush1.msra.mxu0 %v1923
    %1954 = vmatprep.subr.mxu0 0.0
    %1955 = vmatpush1.msra.mxu0 0.0
    %1956 = vmatprep.subr.mxu0 0.0
    %1957 = vmatpush1.msra.mxu0 0.0
    %1958 = vmatprep.subr.mxu0 0.0
    %1959 = vmatpush1.msra.mxu0 0.0
    %1960 = vmatprep.subr.mxu0 0.0
    %1961 = vmatpush1.msra.mxu0 0.0
    %1962 = vmatprep.subr.mxu0 0.0
    %1963 = vmatpush1.msra.mxu0 0.0
    %1964 = vmatprep.subr.mxu0 0.0
    %1965 = vmatpush1.msra.mxu0 0.0
    %1966 = vmatprep.subr.mxu0 0.0
    %1967 = vmatpush1.msra.mxu0 0.0
    %1968 = vmatprep.subr.mxu0 0.0
    %1969 = vmatpush1.msra.mxu0 0.0
    %1970 = vmatprep.subr.mxu0 0.0
    %1971 = vmatpush1.msra.mxu0 0.0
    %1972 = vmatprep.subr.mxu0 0.0
    %1973 = vmatpush1.msra.mxu0 0.0
    %1974 = vmatprep.subr.mxu0 0.0
    %1975 = vmatpush1.msra.mxu0 0.0
    %1976 = vmatprep.subr.mxu0 0.0
    %1977 = vmatpush1.msra.mxu0 0.0
    %1978 = vmatprep.subr.mxu0 0.0
    %1979 = vmatpush1.msra.mxu0 0.0
    %1980 = vmatprep.subr.mxu0 0.0
    %1981 = vmatpush1.msra.mxu0 0.0
    %1982 = vmatprep.subr.mxu0 0.0
    %1983 = vmatpush1.msra.mxu0 0.0
    %1984 = vmatprep.subr.mxu0 0.0
    %1985 = vmatpush1.msra.mxu0 0.0
    %1986 = vmatprep.subr.mxu0 0.0
    %1987 = vmatpush1.msra.mxu0 0.0
    %1988 = vmatprep.subr.mxu0 0.0
    %1989 = vmatpush1.msra.mxu0 0.0
    %1990 = vmatprep.subr.mxu0 0.0
    %1991 = vmatpush1.msra.mxu0 0.0
    %1992 = vmatprep.subr.mxu0 0.0
    %1993 = vmatpush1.msra.mxu0 0.0
    %1994 = vmatprep.subr.mxu0 0.0
    %1995 = vmatpush1.msra.mxu0 0.0
    %1996 = vmatprep.subr.mxu0 0.0
    %1997 = vmatpush1.msra.mxu0 0.0
    %1998 = vmatprep.subr.mxu0 0.0
    %1999 = vmatpush1.msra.mxu0 0.0
    %2000 = vmatprep.subr.mxu0 0.0
    %2001 = vmatpush1.msra.mxu0 0.0
    %2002 = vmatprep.subr.mxu0 0.0
    %2003 = vmatpush1.msra.mxu0 0.0
    %2004 = vmatprep.subr.mxu0 0.0
    %2005 = vmatpush1.msra.mxu0 0.0
    %2006 = vmatprep.subr.mxu0 0.0
    %2007 = vmatpush1.msra.mxu0 0.0
    %2008 = vmatprep.subr.mxu0 0.0
    %2009 = vmatpush1.msra.mxu0 0.0
    %2010 = vmatprep.subr.mxu0 0.0
    %2011 = vmatpush1.msra.mxu0 0.0
    %2012 = vmatprep.subr.mxu0 0.0
    %2013 = vmatpush1.msra.mxu0 0.0
    %2014 = vmatprep.mubr.f32.mxu0 0.0
    %2015 = vmatmul.mubr.f32.gmra.mrb[0].mxu0 %v1927
    %v2016 = vpop.f32.mrb[0].mxu0
    %v2017 = vadd.f32 0.0, %v2016
    %v2018 = vpop.f32.mrb[0].mxu0
    %2019 = vmatprep.mubr.f32.mxu0 0.0
    %2020 = vmatmul.mubr.f32.gmra.mrb[0].mxu0 %v1930
    %v2021 = vpop.f32.mrb[0].mxu0
    %v2022 = vadd.f32 0.0, %v2021
    %v2023 = vpop.f32.mrb[0].mxu0
    %2024 = vmatprep.mubr.f32.mxu0 0.0
    %2025 = vmatmul.mubr.f32.gmra.mrb[0].mxu0 %v1933
    %v2026 = vpop.f32.mrb[0].mxu0
    %v2027 = vadd.f32 0.0, %v2026
    %v2028 = vpop.f32.mrb[0].mxu0
    %2029 = vmatprep.mubr.f32.mxu0 0.0
    %2030 = vmatmul.mubr.f32.gmra.mrb[0].mxu0 %v1936
    %v2031 = vpop.f32.mrb[0].mxu0
    %v2032 = vadd.f32 0.0, %v2031
    %v2033 = vpop.f32.mrb[0].mxu0
    %2034 = vmatprep.mubr.f32.mxu0 0.0
    %2035 = vmatmul.mubr.f32.gmra.mrb[0].mxu0 %v1939
    %v2036 = vpop.f32.mrb[0].mxu0
    %v2037 = vadd.f32 0.0, %v2036
    %v2038 = vpop.f32.mrb[0].mxu0
    %2039 = vmatprep.mubr.f32.mxu0 0.0
    %2040 = vmatmul.mubr.f32.gmra.mrb[0].mxu0 %v1942
    %v2041 = vpop.f32.mrb[0].mxu0
    %v2042 = vadd.f32 0.0, %v2041
    %v2043 = vpop.f32.mrb[0].mxu0
    %2044 = vmatprep.mubr.f32.mxu0 0.0
    %2045 = vmatmul.mubr.f32.gmra.mrb[0].mxu0 %v1945
    %v2046 = vpop.f32.mrb[0].mxu0
    %v2047 = vadd.f32 0.0, %v2046
    %v2048 = vpop.f32.mrb[0].mxu0
    %2049 = vmatprep.mubr.f32.mxu0 0.0
    %2050 = vmatmul.mubr.f32.gmra.mrb[0].mxu0 %v1948
    %v2051 = vpop.f32.mrb[0].mxu0
    %v2052 = vadd.f32 0.0, %v2051
    %v2053 = vpop.f32.mrb[0].mxu0
    %2054 = vdwg.mxu0
    %v2055 = vmul.f32 %v1450, %v1004
    %v2056 = vmul.f32 %v1452, %v1004
    %v2057 = vmul.f32 %v2017, %v1011
    %v2058 = vmul.f32 %v2022, %v1011
    %2061 = vrot.lane.b32.xlu0 %v2057, 64
    %v2062 = vpop.permute.xlu0 %2061
    %2063 = vrot.lane.b32.xlu0 %v2058, 64
    %v2064 = vpop.permute.xlu0 %2063
    %v2067 = vadd.f32 %v2055, %v2062
    %v2068 = vadd.f32 %v2056, %v2064
    %v2069 = vmul.f32 %v2027, %v1027
    %v2070 = vmul.f32 %v2032, %v1027
    %2073 = vrot.lane.b32.xlu0 %v2069, 64
    %v2074 = vpop.permute.xlu0 %2073
    %2075 = vrot.lane.b32.xlu0 %v2070, 64
    %v2076 = vpop.permute.xlu0 %2075
    %v2079 = vadd.f32 %v2067, %v2074
    %v2080 = vadd.f32 %v2068, %v2076
    %v2081 = vmul.f32 %v2037, %v1043
    %v2082 = vmul.f32 %v2042, %v1043
    %2085 = vrot.lane.b32.xlu0 %v2081, 64
    %v2086 = vpop.permute.xlu0 %2085
    %2087 = vrot.lane.b32.xlu0 %v2082, 64
    %v2088 = vpop.permute.xlu0 %2087
    %v2091 = vadd.f32 %v2079, %v2086
    %v2092 = vadd.f32 %v2080, %v2088
    %v2093 = vmul.f32 %v2047, %v1059
    %v2094 = vmul.f32 %v2052, %v1059
    %2097 = vrot.lane.b32.xlu0 %v2093, 64
    %v2098 = vpop.permute.xlu0 %2097
    %2099 = vrot.lane.b32.xlu0 %v2094, 64
    %v2100 = vpop.permute.xlu0 %2099
    %v2103 = vadd.f32 %v2091, %v2098
    %v2104 = vadd.f32 %v2092, %v2100
    %v2105 = vsub.f32 0.0, %v1316
    %v2106 = vsub.f32 0.0, %v1322
    %v2107 = vmul.f32 %v2105, 1.442695
    %v2108 = vpow.pop %v2107
    %v2109 = vmul.f32 %v2106, 1.442695
    %v2110 = vpow.pop %v2109
    %v2111 = vadd.f32 %v2108, 1.0
    %v2112 = vadd.f32 %v2110, 1.0
    %v2113 = vrcp.pop %v2111
    %v2114 = vrcp.pop %v2112
    %v2115 = vmul.f32 %v1316, %v2113
    %v2116 = vmul.f32 %v1322, %v2114
    %2119 = vrot.lane.b32.xlu0 %v2115, 64
    %v2120 = vpop.permute.xlu0 %2119
    %2121 = vrot.lane.b32.xlu0 %v2116, 64
    %v2122 = vpop.permute.xlu0 %2121
    %v2125 = vmul.f32 %v2103, %v2120
    %v2126 = vmul.f32 %v2104, %v2122
    %v2127 = vmul.f32 %v2125, %v2125
    %v2128 = vmul.f32 %v2126, %v2126
    %2131 = vrot.lane.b32.xlu0 %v2127, 64
    %v2132 = vpop.permute.xlu0 %2131
    %2133 = vrot.lane.b32.xlu0 %v2128, 64
    %v2134 = vpop.permute.xlu0 %2133
    %v2137 = vsel %vm249, %v2132, 0.0
    %2138 = vadd.xlane.f32.xlu0 %v2137
    %v2139 = vpop.xlane.xlu0 %2138
    %v2140 = vsel %vm249, %v2134, 0.0
    %2141 = vadd.xlane.f32.xlu0 %v2140
    %v2142 = vpop.xlane.xlu0 %2141
    %v2143 = vmul.f32 %v2139, %v1110
    %v2144 = vmul.f32 %v2142, %v1110
    %v2145 = vadd.f32 %v2143, 1e-05
    %v2146 = vadd.f32 %v2144, 1e-05
    %v2147 = vrsqrt.pop %v2145
    %v2148 = vrsqrt.pop %v2146
    %v2149 = vmul.f32 %v2125, %v2147
    %v2150 = vmul.f32 %v2126, %v2148
    %v2151 = vmul.f32 %v2149, %v1121
    %v2152 = vmul.f32 %v2150, %v1121
    %2155 = vrot.lane.b32.xlu0 %v2151, 64
    %v2156 = vpop.permute.xlu0 %2155
    %2157 = vrot.lane.b32.xlu0 %v2152, 64
    %v2158 = vpop.permute.xlu0 %2157
    %v2159 = vsel %vm249, %v2156, 0
    %v2161 = vsel %vm249, %v2158, 0
    %2163 = vmatprep.subr.mxu0 0.0
    %2164 = vmatpush1.msra.mxu0 %v1125
    %2165 = vmatprep.subr.mxu0 0.0
    %2166 = vmatpush1.msra.mxu0 %v1126
    %2167 = vmatprep.subr.mxu0 0.0
    %2168 = vmatpush1.msra.mxu0 %v1127
    %2169 = vmatprep.subr.mxu0 0.0
    %2170 = vmatpush1.msra.mxu0 %v1128
    %2171 = vmatprep.subr.mxu0 0.0
    %2172 = vmatpush1.msra.mxu0 %v1129
    %2173 = vmatprep.subr.mxu0 0.0
    %2174 = vmatpush1.msra.mxu0 %v1130
    %2175 = vmatprep.subr.mxu0 0.0
    %2176 = vmatpush1.msra.mxu0 %v1131
    %2177 = vmatprep.subr.mxu0 0.0
    %2178 = vmatpush1.msra.mxu0 %v1132
    %2179 = vmatprep.subr.mxu0 0.0
    %2180 = vmatpush1.msra.mxu0 0.0
    %2181 = vmatprep.subr.mxu0 0.0
    %2182 = vmatpush1.msra.mxu0 0.0
    %2183 = vmatprep.subr.mxu0 0.0
    %2184 = vmatpush1.msra.mxu0 0.0
    %2185 = vmatprep.subr.mxu0 0.0
    %2186 = vmatpush1.msra.mxu0 0.0
    %2187 = vmatprep.subr.mxu0 0.0
    %2188 = vmatpush1.msra.mxu0 0.0
    %2189 = vmatprep.subr.mxu0 0.0
    %2190 = vmatpush1.msra.mxu0 0.0
    %2191 = vmatprep.subr.mxu0 0.0
    %2192 = vmatpush1.msra.mxu0 0.0
    %2193 = vmatprep.subr.mxu0 0.0
    %2194 = vmatpush1.msra.mxu0 0.0
    %2195 = vmatprep.subr.mxu0 0.0
    %2196 = vmatpush1.msra.mxu0 0.0
    %2197 = vmatprep.subr.mxu0 0.0
    %2198 = vmatpush1.msra.mxu0 0.0
    %2199 = vmatprep.subr.mxu0 0.0
    %2200 = vmatpush1.msra.mxu0 0.0
    %2201 = vmatprep.subr.mxu0 0.0
    %2202 = vmatpush1.msra.mxu0 0.0
    %2203 = vmatprep.subr.mxu0 0.0
    %2204 = vmatpush1.msra.mxu0 0.0
    %2205 = vmatprep.subr.mxu0 0.0
    %2206 = vmatpush1.msra.mxu0 0.0
    %2207 = vmatprep.subr.mxu0 0.0
    %2208 = vmatpush1.msra.mxu0 0.0
    %2209 = vmatprep.subr.mxu0 0.0
    %2210 = vmatpush1.msra.mxu0 0.0
    %2211 = vmatprep.subr.mxu0 0.0
    %2212 = vmatpush1.msra.mxu0 0.0
    %2213 = vmatprep.subr.mxu0 0.0
    %2214 = vmatpush1.msra.mxu0 0.0
    %2215 = vmatprep.subr.mxu0 0.0
    %2216 = vmatpush1.msra.mxu0 0.0
    %2217 = vmatprep.subr.mxu0 0.0
    %2218 = vmatpush1.msra.mxu0 0.0
    %2219 = vmatprep.subr.mxu0 0.0
    %2220 = vmatpush1.msra.mxu0 0.0
    %2221 = vmatprep.subr.mxu0 0.0
    %2222 = vmatpush1.msra.mxu0 0.0
    %2223 = vmatprep.subr.mxu0 0.0
    %2224 = vmatpush1.msra.mxu0 0.0
    %2225 = vmatprep.subr.mxu0 0.0
    %2226 = vmatpush1.msra.mxu0 0.0
    %2227 = vmatprep.mubr.f32.mxu0 0.0
    %2228 = vmatmul.mubr.f32.gmra.mrb[0].mxu0 %v2159
    %v2229 = vpop.f32.mrb[0].mxu0
    %v2230 = vadd.f32 0.0, %v2229
    %v2231 = vpop.f32.mrb[0].mxu0
    %2232 = vmatprep.mubr.f32.mxu0 0.0
    %2233 = vmatmul.mubr.f32.gmra.mrb[0].mxu0 %v2161
    %v2234 = vpop.f32.mrb[0].mxu0
    %v2235 = vadd.f32 0.0, %v2234
    %v2236 = vpop.f32.mrb[0].mxu0
    %2237 = vdwg.mxu0
    %vm2238 = vcmp.ge.f32.partialorder %v2230, 0.0
    %vm2239 = vcmp.ge.f32.partialorder %v2235, 0.0
    %v2240 = vmul.f32 %v2230, 0.01
    %v2241 = vmul.f32 %v2235, 0.01
    %v2242 = vsel %vm2238, %v2230, %v2240
    %v2243 = vsel %vm2239, %v2235, %v2241
    %v2245 = vsel %vm113, %v2242, 0
    %v2248 = vsel %vm113, %v2243, 0
    %2250 = vmatprep.subr.mxu0 %v1225
    %2251 = vmatpush1.msra.mxu0 %v1224
    %2252 = vmatprep.subr.mxu0 %v1227
    %2253 = vmatpush1.msra.mxu0 %v1226
    %2254 = vmatprep.subr.mxu0 %v1229
    %2255 = vmatpush1.msra.mxu0 %v1228
    %2256 = vmatprep.subr.mxu0 %v1231
    %2257 = vmatpush1.msra.mxu0 %v1230
    %2258 = vmatprep.subr.mxu0 0.0
    %2259 = vmatpush1.msra.mxu0 0.0
    %2260 = vmatprep.subr.mxu0 0.0
    %2261 = vmatpush1.msra.mxu0 0.0
    %2262 = vmatprep.subr.mxu0 0.0
    %2263 = vmatpush1.msra.mxu0 0.0
    %2264 = vmatprep.subr.mxu0 0.0
    %2265 = vmatpush1.msra.mxu0 0.0
    %2266 = vmatprep.subr.mxu0 0.0
    %2267 = vmatpush1.msra.mxu0 0.0
    %2268 = vmatprep.subr.mxu0 0.0
    %2269 = vmatpush1.msra.mxu0 0.0
    %2270 = vmatprep.subr.mxu0 0.0
    %2271 = vmatpush1.msra.mxu0 0.0
    %2272 = vmatprep.subr.mxu0 0.0
    %2273 = vmatpush1.msra.mxu0 0.0
    %2274 = vmatprep.subr.mxu0 0.0
    %2275 = vmatpush1.msra.mxu0 0.0
    %2276 = vmatprep.subr.mxu0 0.0
    %2277 = vmatpush1.msra.mxu0 0.0
    %2278 = vmatprep.subr.mxu0 0.0
    %2279 = vmatpush1.msra.mxu0 0.0
    %2280 = vmatprep.subr.mxu0 0.0
    %2281 = vmatpush1.msra.mxu0 0.0
    %2282 = vmatprep.subr.mxu0 0.0
    %2283 = vmatpush1.msra.mxu0 0.0
    %2284 = vmatprep.subr.mxu0 0.0
    %2285 = vmatpush1.msra.mxu0 0.0
    %2286 = vmatprep.subr.mxu0 0.0
    %2287 = vmatpush1.msra.mxu0 0.0
    %2288 = vmatprep.subr.mxu0 0.0
    %2289 = vmatpush1.msra.mxu0 0.0
    %2290 = vmatprep.subr.mxu0 0.0
    %2291 = vmatpush1.msra.mxu0 0.0
    %2292 = vmatprep.subr.mxu0 0.0
    %2293 = vmatpush1.msra.mxu0 0.0
    %2294 = vmatprep.subr.mxu0 0.0
    %2295 = vmatpush1.msra.mxu0 0.0
    %2296 = vmatprep.subr.mxu0 0.0
    %2297 = vmatpush1.msra.mxu0 0.0
    %2298 = vmatprep.subr.mxu0 0.0
    %2299 = vmatpush1.msra.mxu0 0.0
    %2300 = vmatprep.subr.mxu0 0.0
    %2301 = vmatpush1.msra.mxu0 0.0
    %2302 = vmatprep.subr.mxu0 0.0
    %2303 = vmatpush1.msra.mxu0 0.0
    %2304 = vmatprep.subr.mxu0 0.0
    %2305 = vmatpush1.msra.mxu0 0.0
    %2306 = vmatprep.subr.mxu0 0.0
    %2307 = vmatpush1.msra.mxu0 0.0
    %2308 = vmatprep.subr.mxu0 0.0
    %2309 = vmatpush1.msra.mxu0 0.0
    %2310 = vmatprep.subr.mxu0 0.0
    %2311 = vmatpush1.msra.mxu0 0.0
    %2312 = vmatprep.subr.mxu0 0.0
    %2313 = vmatpush1.msra.mxu0 0.0
    %2314 = vmatprep.mubr.f32.mxu0 0.0
    %2315 = vmatmul.mubr.f32.gmra.mrb[0].mxu0 %v2245
    %v2316 = vpop.f32.mrb[0].mxu0
    %v2317 = vadd.f32 %v1236, %v2316
    %v2318 = vpop.f32.mrb[0].mxu0
    %v2319 = vadd.f32 %v1240, %v2318
    %2320 = vmatprep.mubr.f32.mxu0 0.0
    %2321 = vmatmul.mubr.f32.gmra.mrb[0].mxu0 %v2248
    %v2322 = vpop.f32.mrb[0].mxu0
    %v2323 = vadd.f32 %v1236, %v2322
    %v2324 = vpop.f32.mrb[0].mxu0
    %v2325 = vadd.f32 %v1240, %v2324
    %2326 = vdwg.mxu0
    %v2327 = vadd.f32 %v2319, %v199
    %v2328 = vadd.f32 %v2325, %v199
    %vm2329 = vcmp.gt.f32.partialorder %v2327, 20.0
    %vm2330 = vcmp.gt.f32.partialorder %v2328, 20.0
    %v2331 = vmin.f32 %v2327, 20.0
    %v2332 = vmin.f32 %v2328, 20.0
    %v2333 = vmul.f32 %v2331, 1.442695
    %v2334 = vpow.pop %v2333
    %v2335 = vmul.f32 %v2332, 1.442695
    %v2336 = vpow.pop %v2335
    %v2337 = vadd.f32 %v2334, 1.0
    %v2338 = vadd.f32 %v2336, 1.0
    %v2339 = vlog2.pop %v2337
    %v2340 = vmul.f32 %v2339, 0.6931472
    %v2341 = vlog2.pop %v2338
    %v2342 = vmul.f32 %v2341, 0.6931472
    %v2343 = vsel %vm2329, %v2327, %v2340
    %v2344 = vsel %vm2330, %v2328, %v2342
    %v2345 = vmul.f32 %v2343, %v221
    %v2346 = vmul.f32 %v2344, %v221
    %v2347 = vmul.f32 %v2317, %v231
    %v2348 = vmul.f32 %v2319, %v231
    %v2349 = vmul.f32 %v2323, %v231
    %v2350 = vmul.f32 %v2325, %v231
    %2355 = vrot.lane.b32.xlu0 %v2317, 64
    %v2356 = vpop.permute.xlu0 %2355
    %2357 = vrot.lane.b32.xlu0 %v2319, 64
    %v2358 = vpop.permute.xlu0 %2357
    %2359 = vrot.lane.b32.xlu0 %v2323, 64
    %v2360 = vpop.permute.xlu0 %2359
    %2361 = vrot.lane.b32.xlu0 %v2325, 64
    %v2362 = vpop.permute.xlu0 %2361
    %v2363 = vsel %vm249, %v2356, %v2358
    %v2364 = vsel %vm249, %v2360, %v2362
    %v2367 = vrot.slane %v2363, 7
    %v2368 = vrot.slane %v2364, 7
    %v2369 = vsel %vm258, %v2367, %v2368
    %v2370 = vsel %vm258, %v2368, %v2367
    %v2371 = vmul.f32 %v2370, %v264
    %v2372 = vmul.f32 %v2369, %v269
    %v2373 = vmul.f32 %v2371, %v276
    %v2374 = vmul.f32 %v2372, %v276
    %2377 = vrot.lane.b32.xlu0 %v2373, 64
    %v2378 = vpop.permute.xlu0 %2377
    %2379 = vrot.lane.b32.xlu0 %v2374, 64
    %v2380 = vpop.permute.xlu0 %2379
    %v2383 = vadd.f32 %v2347, %v2378
    %v2384 = vadd.f32 %v2348, %v2378
    %v2385 = vadd.f32 %v2349, %v2380
    %v2386 = vadd.f32 %v2350, %v2380
    %v2387 = vrot.slane %v2363, 6
    %v2388 = vrot.slane %v2364, 6
    %v2389 = vsel %vm293, %v2387, %v2388
    %v2390 = vsel %vm293, %v2388, %v2387
    %v2391 = vmul.f32 %v2390, %v298
    %v2392 = vmul.f32 %v2389, %v302
    %v2393 = vmul.f32 %v2391, %v309
    %v2394 = vmul.f32 %v2392, %v309
    %2397 = vrot.lane.b32.xlu0 %v2393, 64
    %v2398 = vpop.permute.xlu0 %2397
    %2399 = vrot.lane.b32.xlu0 %v2394, 64
    %v2400 = vpop.permute.xlu0 %2399
    %v2403 = vadd.f32 %v2383, %v2398
    %v2404 = vadd.f32 %v2384, %v2398
    %v2405 = vadd.f32 %v2385, %v2400
    %v2406 = vadd.f32 %v2386, %v2400
    %v2407 = vrot.slane %v2363, 5
    %v2408 = vrot.slane %v2364, 5
    %v2409 = vsel %vm326, %v2407, %v2408
    %v2410 = vsel %vm326, %v2408, %v2407
    %v2411 = vmul.f32 %v2410, %v331
    %v2412 = vmul.f32 %v2409, %v335
    %v2413 = vmul.f32 %v2411, %v342
    %v2414 = vmul.f32 %v2412, %v342
    %2417 = vrot.lane.b32.xlu0 %v2413, 64
    %v2418 = vpop.permute.xlu0 %2417
    %2419 = vrot.lane.b32.xlu0 %v2414, 64
    %v2420 = vpop.permute.xlu0 %2419
    %v2423 = vadd.f32 %v2403, %v2418
    %v2424 = vadd.f32 %v2404, %v2418
    %v2425 = vadd.f32 %v2405, %v2420
    %v2426 = vadd.f32 %v2406, %v2420
    %v2427 = vadd.f32 %v2423, %v359
    %v2428 = vadd.f32 %v2424, %v359
    %v2429 = vadd.f32 %v2425, %v359
    %v2430 = vadd.f32 %v2426, %v359
    %v2431 = vsub.f32 0.0, %v2427
    %v2432 = vsub.f32 0.0, %v2428
    %v2433 = vsub.f32 0.0, %v2429
    %v2434 = vsub.f32 0.0, %v2430
    %v2435 = vmul.f32 %v2431, 1.442695
    %v2436 = vpow.pop %v2435
    %v2437 = vmul.f32 %v2432, 1.442695
    %v2438 = vpow.pop %v2437
    %v2439 = vmul.f32 %v2433, 1.442695
    %v2440 = vpow.pop %v2439
    %v2441 = vmul.f32 %v2434, 1.442695
    %v2442 = vpow.pop %v2441
    %v2443 = vadd.f32 %v2436, 1.0
    %v2444 = vadd.f32 %v2438, 1.0
    %v2445 = vadd.f32 %v2440, 1.0
    %v2446 = vadd.f32 %v2442, 1.0
    %v2447 = vrcp.pop %v2443
    %v2448 = vrcp.pop %v2444
    %v2449 = vrcp.pop %v2445
    %v2450 = vrcp.pop %v2446
    %v2451 = vmul.f32 %v2427, %v2447
    %v2452 = vmul.f32 %v2428, %v2448
    %v2453 = vmul.f32 %v2429, %v2449
    %v2454 = vmul.f32 %v2430, %v2450
    %2457 = vrot.lane.b32.xlu0 %v2345, 96
    %v2458 = vpop.permute.xlu0 %2457
    %2459 = vrot.lane.b32.xlu0 %v2346, 96
    %v2460 = vpop.permute.xlu0 %2459
    %2463 = vmatprep.subr.mxu0 0.0
    %2464 = vmatpush1.msra.mxu0 %v2458
    %2465 = vmatprep.subr.mxu0 0.0
    %2466 = vmatpush1.msra.mxu0 %v2460
    %2467 = vmatprep.subr.mxu0 0.0
    %2468 = vmatpush1.msra.mxu0 0.0
    %2469 = vmatprep.subr.mxu0 0.0
    %2470 = vmatpush1.msra.mxu0 0.0
    %2471 = vmatprep.subr.mxu0 0.0
    %2472 = vmatpush1.msra.mxu0 0.0
    %2473 = vmatprep.subr.mxu0 0.0
    %2474 = vmatpush1.msra.mxu0 0.0
    %2475 = vmatprep.subr.mxu0 0.0
    %2476 = vmatpush1.msra.mxu0 0.0
    %2477 = vmatprep.subr.mxu0 0.0
    %2478 = vmatpush1.msra.mxu0 0.0
    %2479 = vmatprep.subr.mxu0 0.0
    %2480 = vmatpush1.msra.mxu0 0.0
    %2481 = vmatprep.subr.mxu0 0.0
    %2482 = vmatpush1.msra.mxu0 0.0
    %2483 = vmatprep.subr.mxu0 0.0
    %2484 = vmatpush1.msra.mxu0 0.0
    %2485 = vmatprep.subr.mxu0 0.0
    %2486 = vmatpush1.msra.mxu0 0.0
    %2487 = vmatprep.subr.mxu0 0.0
    %2488 = vmatpush1.msra.mxu0 0.0
    %2489 = vmatprep.subr.mxu0 0.0
    %2490 = vmatpush1.msra.mxu0 0.0
    %2491 = vmatprep.subr.mxu0 0.0
    %2492 = vmatpush1.msra.mxu0 0.0
    %2493 = vmatprep.subr.mxu0 0.0
    %2494 = vmatpush1.msra.mxu0 0.0
    %2495 = vmatprep.subr.mxu0 0.0
    %2496 = vmatpush1.msra.mxu0 0.0
    %2497 = vmatprep.subr.mxu0 0.0
    %2498 = vmatpush1.msra.mxu0 0.0
    %2499 = vmatprep.subr.mxu0 0.0
    %2500 = vmatpush1.msra.mxu0 0.0
    %2501 = vmatprep.subr.mxu0 0.0
    %2502 = vmatpush1.msra.mxu0 0.0
    %2503 = vmatprep.subr.mxu0 0.0
    %2504 = vmatpush1.msra.mxu0 0.0
    %2505 = vmatprep.subr.mxu0 0.0
    %2506 = vmatpush1.msra.mxu0 0.0
    %2507 = vmatprep.subr.mxu0 0.0
    %2508 = vmatpush1.msra.mxu0 0.0
    %2509 = vmatprep.subr.mxu0 0.0
    %2510 = vmatpush1.msra.mxu0 0.0
    %2511 = vmatprep.subr.mxu0 0.0
    %2512 = vmatpush1.msra.mxu0 0.0
    %2513 = vmatprep.subr.mxu0 0.0
    %2514 = vmatpush1.msra.mxu0 0.0
    %2515 = vmatprep.subr.mxu0 0.0
    %2516 = vmatpush1.msra.mxu0 0.0
    %2517 = vmatprep.subr.mxu0 0.0
    %2518 = vmatpush1.msra.mxu0 0.0
    %2519 = vmatprep.subr.mxu0 0.0
    %2520 = vmatpush1.msra.mxu0 0.0
    %2521 = vmatprep.subr.mxu0 0.0
    %2522 = vmatpush1.msra.mxu0 0.0
    %2523 = vmatprep.subr.mxu0 0.0
    %2524 = vmatpush1.msra.mxu0 0.0
    %2525 = vmatprep.subr.mxu0 0.0
    %2526 = vmatpush1.msra.mxu0 0.0
    %2527 = vmatprep.mubr.f32.mxu0 0.0
    %2528 = vmatmul.mubr.f32.gmra.mrb[0].mxu0 %v399
    %v2529 = vpop.f32.mrb[0].mxu0
    %v2530 = vadd.f32 0.0, %v2529
    %v2531 = vpop.f32.mrb[0].mxu0
    %2532 = vmatprep.mubr.f32.mxu0 0.0
    %2533 = vmatmul.mubr.f32.gmra.mrb[0].mxu0 %v402
    %v2534 = vpop.f32.mrb[0].mxu0
    %v2535 = vadd.f32 0.0, %v2534
    %v2536 = vpop.f32.mrb[0].mxu0
    %2537 = vdwg.mxu0
    %2538 = vxpose.xlu0.b32.start [1/16] %v2458, 128
    %2539 = vxpose.xlu0.b32.cont [2/16] %v2460, 128
    %2540 = vxpose.xlu0.b32.cont [3/16] 0.0, 128
    %2541 = vxpose.xlu0.b32.cont [4/16] 0.0, 128
    %2542 = vxpose.xlu0.b32.cont [5/16] 0.0, 128
    %2543 = vxpose.xlu0.b32.cont [6/16] 0.0, 128
    %2544 = vxpose.xlu0.b32.cont [7/16] 0.0, 128
    %2545 = vxpose.xlu0.b32.cont [8/16] 0.0, 128
    %2546 = vxpose.xlu0.b32.cont [9/16] 0.0, 128
    %2547 = vxpose.xlu0.b32.cont [10/16] 0.0, 128
    %2548 = vxpose.xlu0.b32.cont [11/16] 0.0, 128
    %2549 = vxpose.xlu0.b32.cont [12/16] 0.0, 128
    %2550 = vxpose.xlu0.b32.cont [13/16] 0.0, 128
    %2551 = vxpose.xlu0.b32.cont [14/16] 0.0, 128
    %2552 = vxpose.xlu0.b32.cont [15/16] 0.0, 128
    %2553 = vxpose.xlu0.b32.end [16/16] 0.0, 128
    %v2554 = vpop.trf.xlu0
    %v2555 = vpop.trf.xlu0
    %v2556 = vpop.trf.xlu0
    %v2557 = vpop.trf.xlu0
    %v2558 = vpop.trf.xlu0
    %v2559 = vpop.trf.xlu0
    %v2560 = vpop.trf.xlu0
    %v2561 = vpop.trf.xlu0
    %v2562 = vpop.trf.xlu0
    %v2563 = vpop.trf.xlu0
    %v2564 = vpop.trf.xlu0
    %v2565 = vpop.trf.xlu0
    %v2566 = vpop.trf.xlu0
    %v2567 = vpop.trf.xlu0
    %v2568 = vpop.trf.xlu0
    %v2569 = vpop.trf.xlu0
    %v2571 = vsel %vm397, %v2554, 0
    %2573 = vmatprep.subr.mxu0 0.0
    %2574 = vmatpush1.msra.mxu0 %v89
    %2575 = vmatprep.subr.mxu0 0.0
    %2576 = vmatpush1.msra.mxu0 %v90
    %2577 = vmatprep.subr.mxu0 0.0
    %2578 = vmatpush1.msra.mxu0 0.0
    %2579 = vmatprep.subr.mxu0 0.0
    %2580 = vmatpush1.msra.mxu0 0.0
    %2581 = vmatprep.subr.mxu0 0.0
    %2582 = vmatpush1.msra.mxu0 0.0
    %2583 = vmatprep.subr.mxu0 0.0
    %2584 = vmatpush1.msra.mxu0 0.0
    %2585 = vmatprep.subr.mxu0 0.0
    %2586 = vmatpush1.msra.mxu0 0.0
    %2587 = vmatprep.subr.mxu0 0.0
    %2588 = vmatpush1.msra.mxu0 0.0
    %2589 = vmatprep.subr.mxu0 0.0
    %2590 = vmatpush1.msra.mxu0 0.0
    %2591 = vmatprep.subr.mxu0 0.0
    %2592 = vmatpush1.msra.mxu0 0.0
    %2593 = vmatprep.subr.mxu0 0.0
    %2594 = vmatpush1.msra.mxu0 0.0
    %2595 = vmatprep.subr.mxu0 0.0
    %2596 = vmatpush1.msra.mxu0 0.0
    %2597 = vmatprep.subr.mxu0 0.0
    %2598 = vmatpush1.msra.mxu0 0.0
    %2599 = vmatprep.subr.mxu0 0.0
    %2600 = vmatpush1.msra.mxu0 0.0
    %2601 = vmatprep.subr.mxu0 0.0
    %2602 = vmatpush1.msra.mxu0 0.0
    %2603 = vmatprep.subr.mxu0 0.0
    %2604 = vmatpush1.msra.mxu0 0.0
    %2605 = vmatprep.subr.mxu0 0.0
    %2606 = vmatpush1.msra.mxu0 0.0
    %2607 = vmatprep.subr.mxu0 0.0
    %2608 = vmatpush1.msra.mxu0 0.0
    %2609 = vmatprep.subr.mxu0 0.0
    %2610 = vmatpush1.msra.mxu0 0.0
    %2611 = vmatprep.subr.mxu0 0.0
    %2612 = vmatpush1.msra.mxu0 0.0
    %2613 = vmatprep.subr.mxu0 0.0
    %2614 = vmatpush1.msra.mxu0 0.0
    %2615 = vmatprep.subr.mxu0 0.0
    %2616 = vmatpush1.msra.mxu0 0.0
    %2617 = vmatprep.subr.mxu0 0.0
    %2618 = vmatpush1.msra.mxu0 0.0
    %2619 = vmatprep.subr.mxu0 0.0
    %2620 = vmatpush1.msra.mxu0 0.0
    %2621 = vmatprep.subr.mxu0 0.0
    %2622 = vmatpush1.msra.mxu0 0.0
    %2623 = vmatprep.subr.mxu0 0.0
    %2624 = vmatpush1.msra.mxu0 0.0
    %2625 = vmatprep.subr.mxu0 0.0
    %2626 = vmatpush1.msra.mxu0 0.0
    %2627 = vmatprep.subr.mxu0 0.0
    %2628 = vmatpush1.msra.mxu0 0.0
    %2629 = vmatprep.subr.mxu0 0.0
    %2630 = vmatpush1.msra.mxu0 0.0
    %2631 = vmatprep.subr.mxu0 0.0
    %2632 = vmatpush1.msra.mxu0 0.0
    %2633 = vmatprep.subr.mxu0 0.0
    %2634 = vmatpush1.msra.mxu0 0.0
    %2635 = vmatprep.subr.mxu0 0.0
    %2636 = vmatpush1.msra.mxu0 0.0
    %2637 = vmatprep.mubr.f32.mxu0 0.0
    %2638 = vmatmul.mubr.f32.gmra.mrb[0].mxu0 %v2571
    %v2639 = vpop.f32.mrb[0].mxu0
    %v2640 = vadd.f32 0.0, %v2639
    %v2641 = vpop.f32.mrb[0].mxu0
    %2642 = vdwg.mxu0
    %2645 = vrot.lane.b32.xlu0 %v2452, 112
    %v2646 = vpop.permute.xlu0 %2645
    %2647 = vrot.lane.b32.xlu0 %v2454, 112
    %v2648 = vpop.permute.xlu0 %2647
    %v2649 = vsel %vm397, %v2646, 0
    %v2651 = vsel %vm397, %v2648, 0
    %v2653 = vsel %vm397, %v2452, 0
    %v2655 = vsel %vm397, %v2454, 0
    %2657 = vmatprep.subr.mxu0 0.0
    %2658 = vmatpush1.xpose.msra.mxu0 %v2653
    %2659 = vmatprep.subr.mxu0 0.0
    %2660 = vmatpush1.xpose.msra.mxu0 %v2655
    %2661 = vmatprep.subr.mxu0 0.0
    %2662 = vmatpush1.xpose.msra.mxu0 0.0
    %2663 = vmatprep.subr.mxu0 0.0
    %2664 = vmatpush1.xpose.msra.mxu0 0.0
    %2665 = vmatprep.subr.mxu0 0.0
    %2666 = vmatpush1.xpose.msra.mxu0 0.0
    %2667 = vmatprep.subr.mxu0 0.0
    %2668 = vmatpush1.xpose.msra.mxu0 0.0
    %2669 = vmatprep.subr.mxu0 0.0
    %2670 = vmatpush1.xpose.msra.mxu0 0.0
    %2671 = vmatprep.subr.mxu0 0.0
    %2672 = vmatpush1.xpose.msra.mxu0 0.0
    %2673 = vmatprep.subr.mxu0 0.0
    %2674 = vmatpush1.xpose.msra.mxu0 0.0
    %2675 = vmatprep.subr.mxu0 0.0
    %2676 = vmatpush1.xpose.msra.mxu0 0.0
    %2677 = vmatprep.subr.mxu0 0.0
    %2678 = vmatpush1.xpose.msra.mxu0 0.0
    %2679 = vmatprep.subr.mxu0 0.0
    %2680 = vmatpush1.xpose.msra.mxu0 0.0
    %2681 = vmatprep.subr.mxu0 0.0
    %2682 = vmatpush1.xpose.msra.mxu0 0.0
    %2683 = vmatprep.subr.mxu0 0.0
    %2684 = vmatpush1.xpose.msra.mxu0 0.0
    %2685 = vmatprep.subr.mxu0 0.0
    %2686 = vmatpush1.xpose.msra.mxu0 0.0
    %2687 = vmatprep.subr.mxu0 0.0
    %2688 = vmatpush1.xpose.msra.mxu0 0.0
    %2689 = vmatprep.subr.mxu0 0.0
    %2690 = vmatpush1.xpose.msra.mxu0 0.0
    %2691 = vmatprep.subr.mxu0 0.0
    %2692 = vmatpush1.xpose.msra.mxu0 0.0
    %2693 = vmatprep.subr.mxu0 0.0
    %2694 = vmatpush1.xpose.msra.mxu0 0.0
    %2695 = vmatprep.subr.mxu0 0.0
    %2696 = vmatpush1.xpose.msra.mxu0 0.0
    %2697 = vmatprep.subr.mxu0 0.0
    %2698 = vmatpush1.xpose.msra.mxu0 0.0
    %2699 = vmatprep.subr.mxu0 0.0
    %2700 = vmatpush1.xpose.msra.mxu0 0.0
    %2701 = vmatprep.subr.mxu0 0.0
    %2702 = vmatpush1.xpose.msra.mxu0 0.0
    %2703 = vmatprep.subr.mxu0 0.0
    %2704 = vmatpush1.xpose.msra.mxu0 0.0
    %2705 = vmatprep.subr.mxu0 0.0
    %2706 = vmatpush1.xpose.msra.mxu0 0.0
    %2707 = vmatprep.subr.mxu0 0.0
    %2708 = vmatpush1.xpose.msra.mxu0 0.0
    %2709 = vmatprep.subr.mxu0 0.0
    %2710 = vmatpush1.xpose.msra.mxu0 0.0
    %2711 = vmatprep.subr.mxu0 0.0
    %2712 = vmatpush1.xpose.msra.mxu0 0.0
    %2713 = vmatprep.subr.mxu0 0.0
    %2714 = vmatpush1.xpose.msra.mxu0 0.0
    %2715 = vmatprep.subr.mxu0 0.0
    %2716 = vmatpush1.xpose.msra.mxu0 0.0
    %2717 = vmatprep.subr.mxu0 0.0
    %2718 = vmatpush1.xpose.msra.mxu0 0.0
    %2719 = vmatprep.subr.mxu0 0.0
    %2720 = vmatpush1.xpose.msra.mxu0 0.0
    %2721 = vmatprep.mubr.f32.mxu0 0.0
    %2722 = vmatmul.mubr.f32.gmra.mrb[0].mxu0 %v2649
    %v2723 = vpop.f32.mrb[0].mxu0
    %v2724 = vadd.f32 0.0, %v2723
    %v2725 = vpop.f32.mrb[0].mxu0
    %2726 = vmatprep.mubr.f32.mxu0 0.0
    %2727 = vmatmul.mubr.f32.gmra.mrb[0].mxu0 %v2651
    %v2728 = vpop.f32.mrb[0].mxu0
    %v2729 = vadd.f32 0.0, %v2728
    %v2730 = vpop.f32.mrb[0].mxu0
    %2731 = vdwg.mxu0
    %v2732 = vmul.f32 %v2724, %v87
    %v2733 = vmul.f32 %v2729, %v88
    %2736 = vrot.lane.b32.xlu0 %v2343, 96
    %v2737 = vpop.permute.xlu0 %2736
    %2738 = vrot.lane.b32.xlu0 %v2344, 96
    %v2739 = vpop.permute.xlu0 %2738
    %v2740 = vsel %vm681, %v2737, 0
    %v2742 = vsel %vm681, %v2739, 0
    %2744 = vmatprep.subr.mxu0 0.0
    %2745 = vmatpush1.msra.mxu0 %v688
    %2746 = vmatprep.subr.mxu0 0.0
    %2747 = vmatpush1.msra.mxu0 0.0
    %2748 = vmatprep.subr.mxu0 0.0
    %2749 = vmatpush1.msra.mxu0 0.0
    %2750 = vmatprep.subr.mxu0 0.0
    %2751 = vmatpush1.msra.mxu0 0.0
    %2752 = vmatprep.subr.mxu0 0.0
    %2753 = vmatpush1.msra.mxu0 0.0
    %2754 = vmatprep.subr.mxu0 0.0
    %2755 = vmatpush1.msra.mxu0 0.0
    %2756 = vmatprep.subr.mxu0 0.0
    %2757 = vmatpush1.msra.mxu0 0.0
    %2758 = vmatprep.subr.mxu0 0.0
    %2759 = vmatpush1.msra.mxu0 0.0
    %2760 = vmatprep.subr.mxu0 0.0
    %2761 = vmatpush1.msra.mxu0 0.0
    %2762 = vmatprep.subr.mxu0 0.0
    %2763 = vmatpush1.msra.mxu0 0.0
    %2764 = vmatprep.subr.mxu0 0.0
    %2765 = vmatpush1.msra.mxu0 0.0
    %2766 = vmatprep.subr.mxu0 0.0
    %2767 = vmatpush1.msra.mxu0 0.0
    %2768 = vmatprep.subr.mxu0 0.0
    %2769 = vmatpush1.msra.mxu0 0.0
    %2770 = vmatprep.subr.mxu0 0.0
    %2771 = vmatpush1.msra.mxu0 0.0
    %2772 = vmatprep.subr.mxu0 0.0
    %2773 = vmatpush1.msra.mxu0 0.0
    %2774 = vmatprep.subr.mxu0 0.0
    %2775 = vmatpush1.msra.mxu0 0.0
    %2776 = vmatprep.subr.mxu0 0.0
    %2777 = vmatpush1.msra.mxu0 0.0
    %2778 = vmatprep.subr.mxu0 0.0
    %2779 = vmatpush1.msra.mxu0 0.0
    %2780 = vmatprep.subr.mxu0 0.0
    %2781 = vmatpush1.msra.mxu0 0.0
    %2782 = vmatprep.subr.mxu0 0.0
    %2783 = vmatpush1.msra.mxu0 0.0
    %2784 = vmatprep.subr.mxu0 0.0
    %2785 = vmatpush1.msra.mxu0 0.0
    %2786 = vmatprep.subr.mxu0 0.0
    %2787 = vmatpush1.msra.mxu0 0.0
    %2788 = vmatprep.subr.mxu0 0.0
    %2789 = vmatpush1.msra.mxu0 0.0
    %2790 = vmatprep.subr.mxu0 0.0
    %2791 = vmatpush1.msra.mxu0 0.0
    %2792 = vmatprep.subr.mxu0 0.0
    %2793 = vmatpush1.msra.mxu0 0.0
    %2794 = vmatprep.subr.mxu0 0.0
    %2795 = vmatpush1.msra.mxu0 0.0
    %2796 = vmatprep.subr.mxu0 0.0
    %2797 = vmatpush1.msra.mxu0 0.0
    %2798 = vmatprep.subr.mxu0 0.0
    %2799 = vmatpush1.msra.mxu0 0.0
    %2800 = vmatprep.subr.mxu0 0.0
    %2801 = vmatpush1.msra.mxu0 0.0
    %2802 = vmatprep.subr.mxu0 0.0
    %2803 = vmatpush1.msra.mxu0 0.0
    %2804 = vmatprep.subr.mxu0 0.0
    %2805 = vmatpush1.msra.mxu0 0.0
    %2806 = vmatprep.subr.mxu0 0.0
    %2807 = vmatpush1.msra.mxu0 0.0
    %2808 = vmatprep.mubr.f32.mxu0 0.0
    %2809 = vmatmul.mubr.f32.gmra.mrb[0].mxu0 %v2740
    %v2810 = vpop.f32.mrb[0].mxu0
    %v2811 = vadd.f32 0.0, %v2810
    %v2812 = vpop.f32.mrb[0].mxu0
    %2813 = vmatprep.mubr.f32.mxu0 0.0
    %2814 = vmatmul.mubr.f32.gmra.mrb[0].mxu0 %v2742
    %v2815 = vpop.f32.mrb[0].mxu0
    %v2816 = vadd.f32 0.0, %v2815
    %v2817 = vpop.f32.mrb[0].mxu0
    %2818 = vdwg.mxu0
    %2821 = vrot.lane.b32.xlu0 %v2811, 64
    %v2822 = vpop.permute.xlu0 %2821
    %2823 = vrot.lane.b32.xlu0 %v2816, 64
    %v2824 = vpop.permute.xlu0 %2823
    %v2827 = vmul.f32 %v2451, %v2822
    %v2828 = vmul.f32 %v2453, %v2824
    %2830 = vset.pattern.permute.xlu0 0
    %2831 = vperm.xlu0 %2830, %v2530
    %v2832 = vpop.permute.xlu0 %2831
    %2835 = vset.pattern.permute.xlu0 0
    %2836 = vperm.xlu0 %2835, %v2535
    %v2837 = vpop.permute.xlu0 %2836
    %v2839 = vlaneseq
    %v2840 = vshrl.u32 %v2839, 7
    %v2841 = vsub.s32 0, %v2840
    %v2842 = vrot.slane %v2640, %v2841
    %v2843 = vsub.f32 %v2832, %v2842
    %v2844 = vsub.f32 %v2837, %v2842
    %v2845 = vmin.f32 %v2843, 0.0
    %v2846 = vmin.f32 %v2844, 0.0
    %v2847 = vmul.f32 %v2845, 1.442695
    %v2848 = vpow.pop %v2847
    %v2849 = vmul.f32 %v2846, 1.442695
    %v2850 = vpow.pop %v2849
    %v2851 = vmul.f32 %v2732, %v2848
    %v2852 = vmul.f32 %v2733, %v2850
    %2853 = vset.pattern.permute.xlu0 1
    %2854 = vperm.xlu0 %2853, %v2530
    %v2855 = vpop.permute.xlu0 %2854
    %2857 = vset.pattern.permute.xlu0 1
    %2858 = vperm.xlu0 %2857, %v2535
    %v2859 = vpop.permute.xlu0 %2858
    %v2861 = vlaneseq
    %v2862 = vshrl.u32 %v2861, 7
    %v2863 = vsub.s32 1, %v2862
    %v2864 = vrot.slane %v2640, %v2863
    %v2865 = vsub.f32 %v2855, %v2864
    %v2866 = vsub.f32 %v2859, %v2864
    %v2867 = vmin.f32 %v2865, 0.0
    %v2868 = vmin.f32 %v2866, 0.0
    %v2869 = vmul.f32 %v2867, 1.442695
    %v2870 = vpow.pop %v2869
    %v2871 = vmul.f32 %v2868, 1.442695
    %v2872 = vpow.pop %v2871
    %v2873 = vmul.f32 %v2732, %v2870
    %v2874 = vmul.f32 %v2733, %v2872
    %2875 = vset.pattern.permute.xlu0 2
    %2876 = vperm.xlu0 %2875, %v2530
    %v2877 = vpop.permute.xlu0 %2876
    %2879 = vset.pattern.permute.xlu0 2
    %2880 = vperm.xlu0 %2879, %v2535
    %v2881 = vpop.permute.xlu0 %2880
    %v2883 = vlaneseq
    %v2884 = vshrl.u32 %v2883, 7
    %v2885 = vsub.s32 2, %v2884
    %v2886 = vrot.slane %v2640, %v2885
    %v2887 = vsub.f32 %v2877, %v2886
    %v2888 = vsub.f32 %v2881, %v2886
    %v2889 = vmin.f32 %v2887, 0.0
    %v2890 = vmin.f32 %v2888, 0.0
    %v2891 = vmul.f32 %v2889, 1.442695
    %v2892 = vpow.pop %v2891
    %v2893 = vmul.f32 %v2890, 1.442695
    %v2894 = vpow.pop %v2893
    %v2895 = vmul.f32 %v2732, %v2892
    %v2896 = vmul.f32 %v2733, %v2894
    %2897 = vset.pattern.permute.xlu0 3
    %2898 = vperm.xlu0 %2897, %v2530
    %v2899 = vpop.permute.xlu0 %2898
    %2901 = vset.pattern.permute.xlu0 3
    %2902 = vperm.xlu0 %2901, %v2535
    %v2903 = vpop.permute.xlu0 %2902
    %v2905 = vlaneseq
    %v2906 = vshrl.u32 %v2905, 7
    %v2907 = vsub.s32 3, %v2906
    %v2908 = vrot.slane %v2640, %v2907
    %v2909 = vsub.f32 %v2899, %v2908
    %v2910 = vsub.f32 %v2903, %v2908
    %v2911 = vmin.f32 %v2909, 0.0
    %v2912 = vmin.f32 %v2910, 0.0
    %v2913 = vmul.f32 %v2911, 1.442695
    %v2914 = vpow.pop %v2913
    %v2915 = vmul.f32 %v2912, 1.442695
    %v2916 = vpow.pop %v2915
    %v2917 = vmul.f32 %v2732, %v2914
    %v2918 = vmul.f32 %v2733, %v2916
    %2921 = vrot.lane.b32.xlu0 %v2827, 64
    %v2922 = vpop.permute.xlu0 %2921
    %2923 = vrot.lane.b32.xlu0 %v2828, 64
    %v2924 = vpop.permute.xlu0 %2923
    %v2928 = vsel %vm397, %v2851, 0
    %v2931 = vsel %vm397, %v2852, 0
    %v2934 = vsel %vm397, %v2873, 0
    %v2937 = vsel %vm397, %v2874, 0
    %v2940 = vsel %vm397, %v2895, 0
    %v2943 = vsel %vm397, %v2896, 0
    %v2946 = vsel %vm397, %v2917, 0
    %v2949 = vsel %vm397, %v2918, 0
    %2951 = vmatprep.subr.mxu0 0.0
    %2952 = vmatpush1.msra.mxu0 %v2922
    %2953 = vmatprep.subr.mxu0 0.0
    %2954 = vmatpush1.msra.mxu0 %v2924
    %2955 = vmatprep.subr.mxu0 0.0
    %2956 = vmatpush1.msra.mxu0 0.0
    %2957 = vmatprep.subr.mxu0 0.0
    %2958 = vmatpush1.msra.mxu0 0.0
    %2959 = vmatprep.subr.mxu0 0.0
    %2960 = vmatpush1.msra.mxu0 0.0
    %2961 = vmatprep.subr.mxu0 0.0
    %2962 = vmatpush1.msra.mxu0 0.0
    %2963 = vmatprep.subr.mxu0 0.0
    %2964 = vmatpush1.msra.mxu0 0.0
    %2965 = vmatprep.subr.mxu0 0.0
    %2966 = vmatpush1.msra.mxu0 0.0
    %2967 = vmatprep.subr.mxu0 0.0
    %2968 = vmatpush1.msra.mxu0 0.0
    %2969 = vmatprep.subr.mxu0 0.0
    %2970 = vmatpush1.msra.mxu0 0.0
    %2971 = vmatprep.subr.mxu0 0.0
    %2972 = vmatpush1.msra.mxu0 0.0
    %2973 = vmatprep.subr.mxu0 0.0
    %2974 = vmatpush1.msra.mxu0 0.0
    %2975 = vmatprep.subr.mxu0 0.0
    %2976 = vmatpush1.msra.mxu0 0.0
    %2977 = vmatprep.subr.mxu0 0.0
    %2978 = vmatpush1.msra.mxu0 0.0
    %2979 = vmatprep.subr.mxu0 0.0
    %2980 = vmatpush1.msra.mxu0 0.0
    %2981 = vmatprep.subr.mxu0 0.0
    %2982 = vmatpush1.msra.mxu0 0.0
    %2983 = vmatprep.subr.mxu0 0.0
    %2984 = vmatpush1.msra.mxu0 0.0
    %2985 = vmatprep.subr.mxu0 0.0
    %2986 = vmatpush1.msra.mxu0 0.0
    %2987 = vmatprep.subr.mxu0 0.0
    %2988 = vmatpush1.msra.mxu0 0.0
    %2989 = vmatprep.subr.mxu0 0.0
    %2990 = vmatpush1.msra.mxu0 0.0
    %2991 = vmatprep.subr.mxu0 0.0
    %2992 = vmatpush1.msra.mxu0 0.0
    %2993 = vmatprep.subr.mxu0 0.0
    %2994 = vmatpush1.msra.mxu0 0.0
    %2995 = vmatprep.subr.mxu0 0.0
    %2996 = vmatpush1.msra.mxu0 0.0
    %2997 = vmatprep.subr.mxu0 0.0
    %2998 = vmatpush1.msra.mxu0 0.0
    %2999 = vmatprep.subr.mxu0 0.0
    %3000 = vmatpush1.msra.mxu0 0.0
    %3001 = vmatprep.subr.mxu0 0.0
    %3002 = vmatpush1.msra.mxu0 0.0
    %3003 = vmatprep.subr.mxu0 0.0
    %3004 = vmatpush1.msra.mxu0 0.0
    %3005 = vmatprep.subr.mxu0 0.0
    %3006 = vmatpush1.msra.mxu0 0.0
    %3007 = vmatprep.subr.mxu0 0.0
    %3008 = vmatpush1.msra.mxu0 0.0
    %3009 = vmatprep.subr.mxu0 0.0
    %3010 = vmatpush1.msra.mxu0 0.0
    %3011 = vmatprep.subr.mxu0 0.0
    %3012 = vmatpush1.msra.mxu0 0.0
    %3013 = vmatprep.subr.mxu0 0.0
    %3014 = vmatpush1.msra.mxu0 0.0
    %3015 = vmatprep.mubr.f32.mxu0 0.0
    %3016 = vmatmul.mubr.f32.gmra.mrb[0].mxu0 %v2928
    %v3017 = vpop.f32.mrb[0].mxu0
    %v3018 = vadd.f32 0.0, %v3017
    %v3019 = vpop.f32.mrb[0].mxu0
    %3020 = vmatprep.mubr.f32.mxu0 0.0
    %3021 = vmatmul.mubr.f32.gmra.mrb[0].mxu0 %v2931
    %v3022 = vpop.f32.mrb[0].mxu0
    %v3023 = vadd.f32 0.0, %v3022
    %v3024 = vpop.f32.mrb[0].mxu0
    %3025 = vmatprep.mubr.f32.mxu0 0.0
    %3026 = vmatmul.mubr.f32.gmra.mrb[0].mxu0 %v2934
    %v3027 = vpop.f32.mrb[0].mxu0
    %v3028 = vadd.f32 0.0, %v3027
    %v3029 = vpop.f32.mrb[0].mxu0
    %3030 = vmatprep.mubr.f32.mxu0 0.0
    %3031 = vmatmul.mubr.f32.gmra.mrb[0].mxu0 %v2937
    %v3032 = vpop.f32.mrb[0].mxu0
    %v3033 = vadd.f32 0.0, %v3032
    %v3034 = vpop.f32.mrb[0].mxu0
    %3035 = vmatprep.mubr.f32.mxu0 0.0
    %3036 = vmatmul.mubr.f32.gmra.mrb[0].mxu0 %v2940
    %v3037 = vpop.f32.mrb[0].mxu0
    %v3038 = vadd.f32 0.0, %v3037
    %v3039 = vpop.f32.mrb[0].mxu0
    %3040 = vmatprep.mubr.f32.mxu0 0.0
    %3041 = vmatmul.mubr.f32.gmra.mrb[0].mxu0 %v2943
    %v3042 = vpop.f32.mrb[0].mxu0
    %v3043 = vadd.f32 0.0, %v3042
    %v3044 = vpop.f32.mrb[0].mxu0
    %3045 = vmatprep.mubr.f32.mxu0 0.0
    %3046 = vmatmul.mubr.f32.gmra.mrb[0].mxu0 %v2946
    %v3047 = vpop.f32.mrb[0].mxu0
    %v3048 = vadd.f32 0.0, %v3047
    %v3049 = vpop.f32.mrb[0].mxu0
    %3050 = vmatprep.mubr.f32.mxu0 0.0
    %3051 = vmatmul.mubr.f32.gmra.mrb[0].mxu0 %v2949
    %v3052 = vpop.f32.mrb[0].mxu0
    %v3053 = vadd.f32 0.0, %v3052
    %v3054 = vpop.f32.mrb[0].mxu0
    %3055 = vdwg.mxu0
    %v3056 = vmul.f32 %v2451, %v1004
    %v3057 = vmul.f32 %v2453, %v1004
    %v3058 = vmul.f32 %v3018, %v1011
    %v3059 = vmul.f32 %v3023, %v1011
    %3062 = vrot.lane.b32.xlu0 %v3058, 64
    %v3063 = vpop.permute.xlu0 %3062
    %3064 = vrot.lane.b32.xlu0 %v3059, 64
    %v3065 = vpop.permute.xlu0 %3064
    %v3068 = vadd.f32 %v3056, %v3063
    %v3069 = vadd.f32 %v3057, %v3065
    %v3070 = vmul.f32 %v3028, %v1027
    %v3071 = vmul.f32 %v3033, %v1027
    %3074 = vrot.lane.b32.xlu0 %v3070, 64
    %v3075 = vpop.permute.xlu0 %3074
    %3076 = vrot.lane.b32.xlu0 %v3071, 64
    %v3077 = vpop.permute.xlu0 %3076
    %v3080 = vadd.f32 %v3068, %v3075
    %v3081 = vadd.f32 %v3069, %v3077
    %v3082 = vmul.f32 %v3038, %v1043
    %v3083 = vmul.f32 %v3043, %v1043
    %3086 = vrot.lane.b32.xlu0 %v3082, 64
    %v3087 = vpop.permute.xlu0 %3086
    %3088 = vrot.lane.b32.xlu0 %v3083, 64
    %v3089 = vpop.permute.xlu0 %3088
    %v3092 = vadd.f32 %v3080, %v3087
    %v3093 = vadd.f32 %v3081, %v3089
    %v3094 = vmul.f32 %v3048, %v1059
    %v3095 = vmul.f32 %v3053, %v1059
    %3098 = vrot.lane.b32.xlu0 %v3094, 64
    %v3099 = vpop.permute.xlu0 %3098
    %3100 = vrot.lane.b32.xlu0 %v3095, 64
    %v3101 = vpop.permute.xlu0 %3100
    %v3104 = vadd.f32 %v3092, %v3099
    %v3105 = vadd.f32 %v3093, %v3101
    %v3106 = vsub.f32 0.0, %v2317
    %v3107 = vsub.f32 0.0, %v2323
    %v3108 = vmul.f32 %v3106, 1.442695
    %v3109 = vpow.pop %v3108
    %v3110 = vmul.f32 %v3107, 1.442695
    %v3111 = vpow.pop %v3110
    %v3112 = vadd.f32 %v3109, 1.0
    %v3113 = vadd.f32 %v3111, 1.0
    %v3114 = vrcp.pop %v3112
    %v3115 = vrcp.pop %v3113
    %v3116 = vmul.f32 %v2317, %v3114
    %v3117 = vmul.f32 %v2323, %v3115
    %3120 = vrot.lane.b32.xlu0 %v3116, 64
    %v3121 = vpop.permute.xlu0 %3120
    %3122 = vrot.lane.b32.xlu0 %v3117, 64
    %v3123 = vpop.permute.xlu0 %3122
    %v3126 = vmul.f32 %v3104, %v3121
    %v3127 = vmul.f32 %v3105, %v3123
    %v3128 = vmul.f32 %v3126, %v3126
    %v3129 = vmul.f32 %v3127, %v3127
    %3132 = vrot.lane.b32.xlu0 %v3128, 64
    %v3133 = vpop.permute.xlu0 %3132
    %3134 = vrot.lane.b32.xlu0 %v3129, 64
    %v3135 = vpop.permute.xlu0 %3134
    %v3138 = vsel %vm249, %v3133, 0.0
    %3139 = vadd.xlane.f32.xlu0 %v3138
    %v3140 = vpop.xlane.xlu0 %3139
    %v3141 = vsel %vm249, %v3135, 0.0
    %3142 = vadd.xlane.f32.xlu0 %v3141
    %v3143 = vpop.xlane.xlu0 %3142
    %v3144 = vmul.f32 %v3140, %v1110
    %v3145 = vmul.f32 %v3143, %v1110
    %v3146 = vadd.f32 %v3144, 1e-05
    %v3147 = vadd.f32 %v3145, 1e-05
    %v3148 = vrsqrt.pop %v3146
    %v3149 = vrsqrt.pop %v3147
    %v3150 = vmul.f32 %v3126, %v3148
    %v3151 = vmul.f32 %v3127, %v3149
    %v3152 = vmul.f32 %v3150, %v1121
    %v3153 = vmul.f32 %v3151, %v1121
    %v3154 = vld [vmem:[#allocation7 + $0x8] sm:$0xff]
    %v3155 = vld [vmem:[#allocation7 + $0x18] sm:$0xff]
    %v3156 = vld [vmem:[#allocation7 + $0x28] sm:$0xff]
    %v3157 = vld [vmem:[#allocation7 + $0x38] sm:$0xff]
    %v3158 = vld [vmem:[#allocation7 + $0x48] sm:$0xff]
    %v3159 = vld [vmem:[#allocation7 + $0x58] sm:$0xff]
    %v3160 = vld [vmem:[#allocation7 + $0x68] sm:$0xff]
    %v3161 = vld [vmem:[#allocation7 + $0x78] sm:$0xff]
    %3164 = vrot.lane.b32.xlu0 %v3152, 64
    %v3165 = vpop.permute.xlu0 %3164
    %3166 = vrot.lane.b32.xlu0 %v3153, 64
    %v3167 = vpop.permute.xlu0 %3166
    %v3168 = vsel %vm249, %v3165, 0
    %v3170 = vsel %vm249, %v3167, 0
    %3172 = vmatprep.subr.mxu0 0.0
    %3173 = vmatpush1.msra.mxu0 %v3154
    %3174 = vmatprep.subr.mxu0 0.0
    %3175 = vmatpush1.msra.mxu0 %v3155
    %3176 = vmatprep.subr.mxu0 0.0
    %3177 = vmatpush1.msra.mxu0 %v3156
    %3178 = vmatprep.subr.mxu0 0.0
    %3179 = vmatpush1.msra.mxu0 %v3157
    %3180 = vmatprep.subr.mxu0 0.0
    %3181 = vmatpush1.msra.mxu0 %v3158
    %3182 = vmatprep.subr.mxu0 0.0
    %3183 = vmatpush1.msra.mxu0 %v3159
    %3184 = vmatprep.subr.mxu0 0.0
    %3185 = vmatpush1.msra.mxu0 %v3160
    %3186 = vmatprep.subr.mxu0 0.0
    %3187 = vmatpush1.msra.mxu0 %v3161
    %3188 = vmatprep.subr.mxu0 0.0
    %3189 = vmatpush1.msra.mxu0 0.0
    %3190 = vmatprep.subr.mxu0 0.0
    %3191 = vmatpush1.msra.mxu0 0.0
    %3192 = vmatprep.subr.mxu0 0.0
    %3193 = vmatpush1.msra.mxu0 0.0
    %3194 = vmatprep.subr.mxu0 0.0
    %3195 = vmatpush1.msra.mxu0 0.0
    %3196 = vmatprep.subr.mxu0 0.0
    %3197 = vmatpush1.msra.mxu0 0.0
    %3198 = vmatprep.subr.mxu0 0.0
    %3199 = vmatpush1.msra.mxu0 0.0
    %3200 = vmatprep.subr.mxu0 0.0
    %3201 = vmatpush1.msra.mxu0 0.0
    %3202 = vmatprep.subr.mxu0 0.0
    %3203 = vmatpush1.msra.mxu0 0.0
    %3204 = vmatprep.subr.mxu0 0.0
    %3205 = vmatpush1.msra.mxu0 0.0
    %3206 = vmatprep.subr.mxu0 0.0
    %3207 = vmatpush1.msra.mxu0 0.0
    %3208 = vmatprep.subr.mxu0 0.0
    %3209 = vmatpush1.msra.mxu0 0.0
    %3210 = vmatprep.subr.mxu0 0.0
    %3211 = vmatpush1.msra.mxu0 0.0
    %3212 = vmatprep.subr.mxu0 0.0
    %3213 = vmatpush1.msra.mxu0 0.0
    %3214 = vmatprep.subr.mxu0 0.0
    %3215 = vmatpush1.msra.mxu0 0.0
    %3216 = vmatprep.subr.mxu0 0.0
    %3217 = vmatpush1.msra.mxu0 0.0
    %3218 = vmatprep.subr.mxu0 0.0
    %3219 = vmatpush1.msra.mxu0 0.0
    %3220 = vmatprep.subr.mxu0 0.0
    %3221 = vmatpush1.msra.mxu0 0.0
    %3222 = vmatprep.subr.mxu0 0.0
    %3223 = vmatpush1.msra.mxu0 0.0
    %3224 = vmatprep.subr.mxu0 0.0
    %3225 = vmatpush1.msra.mxu0 0.0
    %3226 = vmatprep.subr.mxu0 0.0
    %3227 = vmatpush1.msra.mxu0 0.0
    %3228 = vmatprep.subr.mxu0 0.0
    %3229 = vmatpush1.msra.mxu0 0.0
    %3230 = vmatprep.subr.mxu0 0.0
    %3231 = vmatpush1.msra.mxu0 0.0
    %3232 = vmatprep.subr.mxu0 0.0
    %3233 = vmatpush1.msra.mxu0 0.0
    %3234 = vmatprep.subr.mxu0 0.0
    %3235 = vmatpush1.msra.mxu0 0.0
    %3236 = vmatprep.mubr.f32.mxu0 0.0
    %3237 = vmatmul.mubr.f32.gmra.mrb[0].mxu0 %v3168
    %v3238 = vpop.f32.mrb[0].mxu0
    %v3239 = vadd.f32 %v102, %v3238
    %v3240 = vpop.f32.mrb[0].mxu0
    %3241 = vmatprep.mubr.f32.mxu0 0.0
    %3242 = vmatmul.mubr.f32.gmra.mrb[0].mxu0 %v3170
    %v3243 = vpop.f32.mrb[0].mxu0
    %v3244 = vadd.f32 %v102, %v3243
    %v3245 = vpop.f32.mrb[0].mxu0
    %3246 = vdwg.mxu0
    %3247 = vst.msk [vmem:[#allocation11] sm:$0xff] %vm113, %v3239
    %3248 = vst.msk [vmem:[#allocation11 + $0x8] sm:$0xff] %vm113, %v3244
    // Predicated region
    $region42: #{self_supervised_mamba2_forward.1} parent=1 // pred_check
      _
    $region43: #{self_supervised_mamba2_forward.1} parent=1 // pred_check_branch
      %3250 = sbr.rel (0) target = $region45
    $region44: #{self_supervised_mamba2_forward.1} parent=1 // pred_region
      %s3252 = ssub.s32 256, 256
      %3253 = vsyncadd [#allocation4], %s3252
      %s3254 = sshll.u32 [#allocation11], 4
      %s3255 = int_to_ptr.vmem [resolvable:$true] %s3254
      %3260 = dma.vmem_to_hbm [thread:$0]  %s3255, 256, %s5, [#allocation4], 128, 128, 8
    $region45: #{self_supervised_mamba2_forward.1} parent=1 // pred_fallthru
      _
    // Predicated region
    $region46: #{self_supervised_mamba2_forward.1} parent=1 // pred_check
      _
    $region47: #{self_supervised_mamba2_forward.1} parent=1 // pred_check_branch
      %3262 = sbr.rel (0) target = $region49
    $region48: #{self_supervised_mamba2_forward.1} parent=1 // pred_region
      %3263 = dma.done [#allocation4], 256
    $region49: #{self_supervised_mamba2_forward.1} parent=1 // pred_fallthru
      _
    %3264 = vsyncpa [#allocation3], 1
    %3265 = vsyncpa [#allocation6], 1
    %3266 = vsyncpa [#allocation9], 1
    %3267 = vsyncpa [#allocation4], 1

</llo_original>
